<compile_context>
chip_gen: v7x
topology: tpu7x:2x2x1
jax: 0.10.0
libtpu: 0.0.40
codegen_flags: <defaults>
</compile_context>

<pallas_src>
from functools import partial

import jax
import jax.numpy as jnp
from jax.experimental import pallas as pl
from jax.experimental.pallas import tpu as pltpu

_EPS = 1e-5
_LANE = 128


def _round_up(x, m):
    return ((x + m - 1) // m) * m


def _plan(H, W):
    """Pick padded spatial sizes and the row-chunk height."""
    W_pad = _round_up(W, 16)                       # bf16 sublane pack = 16
    block_h = _round_up(max(8, -(-256 // W_pad)), 8)   # aim for >=256 MXU rows
    block_h = min(block_h, _round_up(H, 8))
    H_pad = _round_up(H, block_h)
    return H_pad, W_pad, block_h


# ----------------------------------------------------------------------------
# Fused Bottleneck kernel (one batch image per grid step)
# ----------------------------------------------------------------------------
def _bottleneck_kernel(x_ref, w1_ref, b1_ref, w2_ref, b2_ref, w3_ref, b3_ref,
                       o_ref, h1_ref, *, block_h, H, W):
    """Fused conv1+BN1+ReLU -> conv2(3x3)+BN2+ReLU -> conv3+BN3+res+ReLU.

    x_ref : (1, H_pad, W_pad, Cin_p)  bf16  input (also the identity branch)
    w2_ref: (9*Cmid_p, Cmid_p)        bf16  BN-folded, tap-flattened 3x3 weight
    o_ref : (1, H_pad, W_pad, Cout_p) bf16  output
    h1_ref: (H_pad+2, W_pad, Cmid_p)  bf16  scratch: conv1 output + 1-row halo
    """
    _, H_pad, W_pad, Cin_p = x_ref.shape
    Cmid_p = w1_ref.shape[1]
    Cout_p = w3_ref.shape[1]
    n_chunks = H_pad // block_h
    f32 = jnp.float32
    need_mask = (H_pad > H) or (W_pad > W)

    # Hoisted weight / folded-bias loads (read from VMEM once per image).
    w1 = w1_ref[...]
    w2 = w2_ref[...]
    w3 = w3_ref[...]
    b1 = b1_ref[...]
    b2 = b2_ref[...]
    b3 = b3_ref[...]

    # Zero only the two never-written halo rows (top / bottom) of the scratch.
    # Done every grid step (2 rows, negligible) rather than once under
    # @pl.when(program_id == 0): with a "parallel" batch axis each TensorCore
    # owns its own scratch instance and would otherwise miss the init.
    zrow = jnp.zeros((W_pad, Cmid_p), h1_ref.dtype)
    h1_ref[0] = zrow
    h1_ref[H_pad + 1] = zrow

    # ---- pass 1: conv1 (1x1) + BN1 + ReLU -> row-haloed bf16 scratch -------
    def conv1_chunk(c, carry):
        r0 = pl.multiple_of(c * block_h, 8)
        xb = x_ref[0, pl.ds(r0, block_h)].reshape(block_h * W_pad, Cin_p)
        y1 = jnp.dot(xb, w1, preferred_element_type=f32) + b1
        y1 = jnp.maximum(y1, 0.0).reshape(block_h, W_pad, Cmid_p)
        if need_mask:
            # Padded rows/cols must read back as exact zeros: they are the 3x3
            # "same"-padding halo for the last real row / column.
            rows = jax.lax.broadcasted_iota(jnp.int32, (block_h, W_pad), 0) + r0
            cols = jax.lax.broadcasted_iota(jnp.int32, (block_h, W_pad), 1)
            y1 = jnp.where(((rows < H) & (cols < W))[:, :, None], y1, 0.0)
        h1_ref[pl.ds(r0 + 1, block_h)] = y1.astype(h1_ref.dtype)
        return carry

    jax.lax.fori_loop(0, n_chunks, conv1_chunk, 0)

    # ---- pass 2: conv2 (3x3) as ONE K=9*Cmid im2col matmul + BN2 + ReLU
    #              -> conv3 (1x1) + BN3 + residual + ReLU --------------------
    zcol = jnp.zeros((block_h, 1, Cmid_p), h1_ref.dtype)

    def conv23_chunk(c, carry):
        r0 = pl.multiple_of(c * block_h, 8)
        taps = []
        for dy in range(3):
            # Row-offset slice along the major H axis: always tile-aligned.
            slab = h1_ref[pl.ds(r0 + dy, block_h)]        # (bh, W_pad, Cmid_p)
            # dx = -1 / 0 / +1 column taps via explicit zero-column shifts.
            taps.append(jnp.concatenate([zcol, slab[:, :W_pad - 1, :]], axis=1))
            taps.append(slab)
            taps.append(jnp.concatenate([slab[:, 1:, :], zcol], axis=1))
        patch = jnp.concatenate(taps, axis=-1).reshape(
            block_h * W_pad, 9 * Cmid_p)                  # bf16 im2col operand

        h2 = jnp.dot(patch, w2, preferred_element_type=f32) + b2
        h2 = jnp.maximum(h2, 0.0).astype(jnp.bfloat16)

        y3 = jnp.dot(h2, w3, preferred_element_type=f32) + b3
        ident = x_ref[0, pl.ds(r0, block_h)].reshape(block_h * W_pad, Cin_p)
        y3 = jnp.maximum(y3 + ident.astype(f32), 0.0)
        o_ref[0, pl.ds(r0, block_h)] = (
            y3.reshape(block_h, W_pad, Cout_p).astype(o_ref.dtype))
        return carry

    jax.lax.fori_loop(0, n_chunks, conv23_chunk, 0)


# ----------------------------------------------------------------------------
# pallas_call wrapper
# ----------------------------------------------------------------------------
def _fused_bottleneck_call(x_p, prep, *, H, W, block_h):
    N, H_pad, W_pad, Cin_p = x_p.shape
    Cmid_p = prep["w1"].shape[1]
    Cout_p = prep["w3"].shape[1]

    # VMEM footprint: double-buffered x / out blocks, grid-invariant weights,
    # the h1 scratch, plus per-chunk temporaries (im2col patch + f32 tiles).
    weight_bytes = ((Cin_p * Cmid_p + 9 * Cmid_p * Cmid_p + Cmid_p * Cout_p) * 2
                    + (2 * Cmid_p + Cout_p) * 4)
    io_bytes = 2 * H_pad * W_pad * Cin_p * 2 + 2 * H_pad * W_pad * Cout_p * 2
    scratch_bytes = (H_pad + 2) * W_pad * Cmid_p * 2
    temp_bytes = block_h * W_pad * (2 * 9 * Cmid_p * 2 + 3 * Cmid_p * 4
                                    + 2 * Cout_p * 4)
    est = weight_bytes + io_bytes + scratch_bytes + temp_bytes

    try:
        phys_vmem = int(pltpu.get_tpu_info().vmem_capacity_bytes)
    except Exception:
        phys_vmem = 64 << 20
    cap = max(int(phys_vmem * 3 // 4), 32 << 20)     # leave headroom (v7x: 48M)
    vmem_limit = int(min(max(est + (8 << 20), 32 << 20), cap))

    return pl.pallas_call(
        partial(_bottleneck_kernel, block_h=block_h, H=H, W=W),
        grid=(N,),
        in_specs=[
            pl.BlockSpec((1, H_pad, W_pad, Cin_p), lambda n: (n, 0, 0, 0)),
            pl.BlockSpec((Cin_p, Cmid_p), lambda n: (0, 0)),
            pl.BlockSpec((1, Cmid_p), lambda n: (0, 0)),
            pl.BlockSpec((9 * Cmid_p, Cmid_p), lambda n: (0, 0)),
            pl.BlockSpec((1, Cmid_p), lambda n: (0, 0)),
            pl.BlockSpec((Cmid_p, Cout_p), lambda n: (0, 0)),
            pl.BlockSpec((1, Cout_p), lambda n: (0, 0)),
        ],
        out_specs=pl.BlockSpec((1, H_pad, W_pad, Cout_p), lambda n: (n, 0, 0, 0)),
        out_shape=jax.ShapeDtypeStruct((N, H_pad, W_pad, Cout_p), jnp.bfloat16),
        scratch_shapes=[pltpu.VMEM((H_pad + 2, W_pad, Cmid_p), jnp.bfloat16)],
        compiler_params=pltpu.CompilerParams(
            dimension_semantics=("parallel",),
            vmem_limit_bytes=vmem_limit),
    )(x_p, prep["w1"], prep["b1"], prep["w2"], prep["b2"],
      prep["w3"], prep["b3"])


def bottleneck_forward(x_nchw, prep, stride=1):
    """Public forward: NCHW in -> NCHW out (eval-mode Bottleneck)."""
    assert stride == 1, "stride>1 needs a downsample module (not implemented)"
    N, Cin, H, W = x_nchw.shape
    Cout = prep["cout"]
    assert Cin == prep["cin"] and Cin == Cout, "residual add needs Cin == Cout"

    Cin_p = prep["w1"].shape[0]
    H_pad, W_pad, block_h = _plan(H, W)

    # TODO(synk): keeping the whole network NHWC / pre-padded would remove
    # these wrapper-side transposes / pads / slices (separate HBM round trips).
    x = jnp.transpose(x_nchw, (0, 2, 3, 1)).astype(jnp.bfloat16)
    x = jnp.pad(x, ((0, 0), (0, H_pad - H), (0, W_pad - W), (0, Cin_p - Cin)))

    out_p = _fused_bottleneck_call(x, prep, H=H, W=W, block_h=block_h)
    out = out_p[:, :H, :W, :Cout].astype(x_nchw.dtype)
    return jnp.transpose(out, (0, 3, 1, 2))


# ----------------------------------------------------------------------------
# Parameter init (raw, matches Bottleneck.__init__ shapes) + one-time prep
# ----------------------------------------------------------------------------
def init_params(key, in_channels, out_channels, expansion=4):
    cmid = out_channels // expansion
    ks = jax.random.split(key, 9)

    def conv_w(k, cin, cout, kh=1, kw=1):
        fan_in = cin * kh * kw
        shape = (cin, cout) if kh == 1 and kw == 1 else (kh, kw, cin, cout)
        return jax.random.normal(k, shape, jnp.float32) / jnp.sqrt(fan_in)

    def bn_stats(k, c):
        k1, k2, k3, k4 = jax.random.split(k, 4)
        gamma = 1.0 + 0.1 * jax.random.uniform(k1, (c,), jnp.float32)
        beta = 0.05 * jax.random.normal(k2, (c,), jnp.float32)
        mean = 0.1 * jax.random.normal(k3, (c,), jnp.float32)
        var = 1.0 + 0.2 * jax.random.uniform(k4, (c,), jnp.float32)
        return gamma, beta, mean, var

    return dict(
        cin=in_channels, cout=out_channels, cmid=cmid,
        w1=conv_w(ks[0], in_channels, cmid),
        b1c=0.02 * jax.random.normal(ks[1], (cmid,), jnp.float32),
        w2=conv_w(ks[2], cmid, cmid, 3, 3),
        b2c=0.02 * jax.random.normal(ks[3], (cmid,), jnp.float32),
        w3=conv_w(ks[4], cmid, out_channels),
        b3c=0.02 * jax.random.normal(ks[5], (out_channels,), jnp.float32),
        bn1=bn_stats(ks[6], cmid),
        bn2=bn_stats(ks[7], cmid),
        bn3=bn_stats(ks[8], out_channels),
    )


def prepare_params(p):
    """One-time: fold BN (running stats) into conv weights/bias, pad channels
    to multiples of 128 (lane-dense), flatten the 3x3 weight to its im2col
    (9*Cmid_p, Cmid_p) layout, and cast weights to bf16.  Biases stay f32."""
    def fold(w, conv_b, bn):
        gamma, beta, mean, var = bn
        scale = gamma / jnp.sqrt(var + _EPS)
        return w * scale, beta + scale * (conv_b - mean)

    def padc(a, axis, target):
        pads = [(0, 0)] * a.ndim
        pads[axis] = (0, target - a.shape[axis])
        return jnp.pad(a, pads)

    cin, cmid, cout = p["cin"], p["cmid"], p["cout"]
    cin_p = _round_up(cin, _LANE)
    cmid_p = _round_up(cmid, _LANE)
    cout_p = _round_up(cout, _LANE)

    w1, b1 = fold(p["w1"], p["b1c"], p["bn1"])
    w2, b2 = fold(p["w2"], p["b2c"], p["bn2"])
    w3, b3 = fold(p["w3"], p["b3c"], p["bn3"])

    w1 = padc(padc(w1, 0, cin_p), 1, cmid_p).astype(jnp.bfloat16)
    # (3, 3, cmid_p, cmid_p) -> (9*cmid_p, cmid_p): rows ordered [dy][dx][cin],
    # matching the in-kernel tap-concat order.
    w2 = padc(padc(w2, 2, cmid_p), 3, cmid_p)
    w2 = w2.reshape(9 * cmid_p, cmid_p).astype(jnp.bfloat16)
    w3 = padc(padc(w3, 0, cmid_p), 1, cout_p).astype(jnp.bfloat16)
    b1 = padc(b1, 0, cmid_p).reshape(1, cmid_p).astype(jnp.float32)
    b2 = padc(b2, 0, cmid_p).reshape(1, cmid_p).astype(jnp.float32)
    b3 = padc(b3, 0, cout_p).reshape(1, cout_p).astype(jnp.float32)

    return dict(cin=cin, cmid=cmid, cout=cout,
                w1=w1, b1=b1, w2=w2, b2=b2, w3=w3, b3=b3)


# ----------------------------------------------------------------------------
# Pure-JAX reference (f32, unfolded BN) for correctness check
# ----------------------------------------------------------------------------
def bottleneck_reference(x_nchw, p, stride=1):
    x = jnp.transpose(x_nchw, (0, 2, 3, 1))
    identity = x

    def conv(x, w_hwio, b, stride, pad):
        y = jax.lax.conv_general_dilated(
            x, w_hwio, (stride, stride), pad,
            dimension_numbers=("NHWC", "HWIO", "NHWC"),
            precision=jax.lax.Precision.HIGHEST)
        return y + b

    def bn(x, stats):
        g, b, m, v = stats
        return g * (x - m) / jnp.sqrt(v + _EPS) + b

    cin, cmid, cout = p["cin"], p["cmid"], p["cout"]
    w1 = p["w1"].reshape(1, 1, cin, cmid)
    w3 = p["w3"].reshape(1, 1, cmid, cout)

    h = jax.nn.relu(bn(conv(x, w1, p["b1c"], stride, "VALID"), p["bn1"]))
    h = jax.nn.relu(bn(conv(h, p["w2"], p["b2c"], 1, "SAME"), p["bn2"]))
    h = bn(conv(h, w3, p["b3c"], 1, "VALID"), p["bn3"])
    h = jax.nn.relu(h + identity)
    return jnp.transpose(h, (0, 3, 1, 2))


# ----------------------------------------------------------------------------
if __name__ == "__main__":
    N, Cin, H, W = 2, 16, 16, 16
    Cout, expansion, stride = 16, 4, 1     # mid_channels = 4, downsample = None

    key = jax.random.PRNGKey(0)
    kx, kp = jax.random.split(key)
    x = jax.random.normal(kx, (N, Cin, H, W), jnp.float32)

    params = init_params(kp, Cin, Cout, expansion)
    prep = prepare_params(params)

    out = jax.block_until_ready(bottleneck_forward(x, prep, stride=stride))
    ref = bottleneck_reference(x, params, stride=stride)

    assert out.shape == (N, Cout, H, W), out.shape
    max_err = float(jnp.max(jnp.abs(out - ref)))
    assert jnp.allclose(out, ref, atol=7.5e-2, rtol=5e-2), f"max_err={max_err}"
    print("KERNEL_OK")
</pallas_src>

<mosaic_0001>
module attributes {stable_mosaic.version = 11 : i64} {
  func.func @_bottleneck_kernel(%arg0: i32, %arg1: memref<1x16x16x128xbf16, #tpu.memory_space<vmem>>, %arg2: memref<128x128xbf16, #tpu.memory_space<vmem>>, %arg3: memref<1x128xf32, #tpu.memory_space<vmem>>, %arg4: memref<1152x128xbf16, #tpu.memory_space<vmem>>, %arg5: memref<1x128xf32, #tpu.memory_space<vmem>>, %arg6: memref<128x128xbf16, #tpu.memory_space<vmem>>, %arg7: memref<1x128xf32, #tpu.memory_space<vmem>>, %arg8: memref<1x16x16x128xbf16, #tpu.memory_space<vmem>>, %arg9: memref<18x16x128xbf16, #tpu.memory_space<vmem>>) attributes {dimension_semantics = [#tpu.dimension_semantics<parallel>], iteration_bounds = array<i64: 2>, scalar_prefetch = 0 : i64, scratch_operands = 1 : i64, tpu.core_type = #tpu.core_type<tc>, window_params = [{transform_indices = @transform_0, window_bounds = array<i64: 1, 16, 16, 128>}, {pipeline_mode = #tpu.pipeline_mode<synchronous>, transform_indices = @transform_1, window_bounds = array<i64: 128, 128>}, {pipeline_mode = #tpu.pipeline_mode<synchronous>, transform_indices = @transform_2, window_bounds = array<i64: 1, 128>}, {pipeline_mode = #tpu.pipeline_mode<synchronous>, transform_indices = @transform_3, window_bounds = array<i64: 1152, 128>}, {pipeline_mode = #tpu.pipeline_mode<synchronous>, transform_indices = @transform_4, window_bounds = array<i64: 1, 128>}, {pipeline_mode = #tpu.pipeline_mode<synchronous>, transform_indices = @transform_5, window_bounds = array<i64: 128, 128>}, {pipeline_mode = #tpu.pipeline_mode<synchronous>, transform_indices = @transform_6, window_bounds = array<i64: 1, 128>}, {transform_indices = @transform_7, window_bounds = array<i64: 1, 16, 16, 128>}]} {
    %c0 = arith.constant 0 : index
    %c0_0 = arith.constant 0 : index
    %0 = vector.load %arg2[%c0, %c0_0] : memref<128x128xbf16, #tpu.memory_space<vmem>>, vector<128x128xbf16>
    %c0_1 = arith.constant 0 : index
    %c0_2 = arith.constant 0 : index
    %1 = vector.load %arg4[%c0_1, %c0_2] : memref<1152x128xbf16, #tpu.memory_space<vmem>>, vector<1152x128xbf16>
    %c0_3 = arith.constant 0 : index
    %c0_4 = arith.constant 0 : index
    %2 = vector.load %arg6[%c0_3, %c0_4] : memref<128x128xbf16, #tpu.memory_space<vmem>>, vector<128x128xbf16>
    %c0_5 = arith.constant 0 : index
    %c0_6 = arith.constant 0 : index
    %3 = vector.load %arg3[%c0_5, %c0_6] : memref<1x128xf32, #tpu.memory_space<vmem>>, vector<1x128xf32>
    %c0_7 = arith.constant 0 : index
    %c0_8 = arith.constant 0 : index
    %4 = vector.load %arg5[%c0_7, %c0_8] : memref<1x128xf32, #tpu.memory_space<vmem>>, vector<1x128xf32>
    %c0_9 = arith.constant 0 : index
    %c0_10 = arith.constant 0 : index
    %5 = vector.load %arg7[%c0_9, %c0_10] : memref<1x128xf32, #tpu.memory_space<vmem>>, vector<1x128xf32>
    %cst = arith.constant 0.000000e+00 : bf16
    %6 = vector.broadcast %cst : bf16 to vector<16x128xbf16>
    %c0_11 = arith.constant 0 : index
    %c0_12 = arith.constant 0 : index
    %c0_13 = arith.constant 0 : index
    %7 = vector.load %arg9[%c0_11, %c0_12, %c0_13] : memref<18x16x128xbf16, #tpu.memory_space<vmem>>, vector<1x16x128xbf16>
    %8 = vector.shape_cast %7 : vector<1x16x128xbf16> to vector<16x128xbf16>
    %9 = vector.shape_cast %6 : vector<16x128xbf16> to vector<1x16x128xbf16>
    tpu.vector_store %arg9[%c0_11, %c0_12, %c0_13], %9 {strides = array<i32>} : memref<18x16x128xbf16, #tpu.memory_space<vmem>>, vector<1x16x128xbf16>,
    %c17 = arith.constant 17 : index
    %c0_14 = arith.constant 0 : index
    %c0_15 = arith.constant 0 : index
    %10 = vector.load %arg9[%c17, %c0_14, %c0_15] : memref<18x16x128xbf16, #tpu.memory_space<vmem>>, vector<1x16x128xbf16>
    %11 = vector.shape_cast %10 : vector<1x16x128xbf16> to vector<16x128xbf16>
    %12 = vector.shape_cast %6 : vector<16x128xbf16> to vector<1x16x128xbf16>
    tpu.vector_store %arg9[%c17, %c0_14, %c0_15], %12 {strides = array<i32>} : memref<18x16x128xbf16, #tpu.memory_space<vmem>>, vector<1x16x128xbf16>,
    %c0_i32 = arith.constant 0 : i32
    %c16_i32 = arith.constant 16 : i32
    %13 = arith.muli %c0_i32, %c16_i32 : i32
    %14 = tpu.assume_multiple %13, 8 : i32
    %c0_16 = arith.constant 0 : index
    %15 = arith.index_cast %14 : i32 to index
    %c0_17 = arith.constant 0 : index
    %c0_18 = arith.constant 0 : index
    %16 = vector.load %arg1[%c0_16, %15, %c0_17, %c0_18] : memref<1x16x16x128xbf16, #tpu.memory_space<vmem>>, vector<1x16x16x128xbf16>
    %17 = vector.shape_cast %16 : vector<1x16x16x128xbf16> to vector<16x16x128xbf16>
    %18 = vector.shape_cast %17 : vector<16x16x128xbf16> to vector<256x128xbf16>
    %cst_19 = arith.constant dense<0.000000e+00> : vector<256x128xf32>
    %19 = tpu.matmul %18, %0, %cst_19 {dimension_numbers = #tpu.dot_dimension_numbers<[1], [0], [0], [1], [0, 0, 1, 1], [], []>} : vector<256x128xbf16>, vector<128x128xbf16>, vector<256x128xf32> -> vector<256x128xf32>
    %20 = vector.broadcast %3 : vector<1x128xf32> to vector<256x128xf32>
    %21 = arith.addf %19, %20 : vector<256x128xf32>
    %cst_20 = arith.constant 0.000000e+00 : f32
    %22 = vector.broadcast %cst_20 : f32 to vector<256x128xf32>
    %23 = arith.maximumf %21, %22 : vector<256x128xf32>
    %24 = vector.shape_cast %23 : vector<256x128xf32> to vector<16x16x128xf32>
    %25 = arith.truncf %24 : vector<16x16x128xf32> to vector<16x16x128xbf16>
    %c1_i32 = arith.constant 1 : i32
    %26 = arith.addi %14, %c1_i32 : i32
    %27 = arith.index_cast %26 : i32 to index
    %c0_21 = arith.constant 0 : index
    %c0_22 = arith.constant 0 : index
    %28 = vector.load %arg9[%27, %c0_21, %c0_22] : memref<18x16x128xbf16, #tpu.memory_space<vmem>>, vector<16x16x128xbf16>
    tpu.vector_store %arg9[%27, %c0_21, %c0_22], %25 {strides = array<i32>} : memref<18x16x128xbf16, #tpu.memory_space<vmem>>, vector<16x16x128xbf16>,
    %c1_i32_23 = arith.constant 1 : i32
    %cst_24 = arith.constant 0.000000e+00 : bf16
    %29 = vector.broadcast %cst_24 : bf16 to vector<16x1x128xbf16>
    %c0_i32_25 = arith.constant 0 : i32
    %c16_i32_26 = arith.constant 16 : i32
    %30 = arith.muli %c0_i32_25, %c16_i32_26 : i32
    %31 = tpu.assume_multiple %30, 8 : i32
    %c0_i32_27 = arith.constant 0 : i32
    %32 = arith.addi %31, %c0_i32_27 : i32
    %33 = arith.index_cast %32 : i32 to index
    %c0_28 = arith.constant 0 : index
    %c0_29 = arith.constant 0 : index
    %34 = vector.load %arg9[%33, %c0_28, %c0_29] : memref<18x16x128xbf16, #tpu.memory_space<vmem>>, vector<16x16x128xbf16>
    %35 = vector.extract_strided_slice %34 {offsets = [0, 0, 0], sizes = [16, 15, 128], strides = [1, 1, 1]} : vector<16x16x128xbf16> to vector<16x15x128xbf16>
    %36 = tpu.concatenate %29, %35 in 1 : vector<16x1x128xbf16>, vector<16x15x128xbf16> -> vector<16x16x128xbf16>
    %37 = vector.extract_strided_slice %34 {offsets = [0, 1, 0], sizes = [16, 15, 128], strides = [1, 1, 1]} : vector<16x16x128xbf16> to vector<16x15x128xbf16>
    %38 = tpu.concatenate %37, %29 in 1 : vector<16x15x128xbf16>, vector<16x1x128xbf16> -> vector<16x16x128xbf16>
    %c1_i32_30 = arith.constant 1 : i32
    %39 = arith.addi %31, %c1_i32_30 : i32
    %40 = arith.index_cast %39 : i32 to index
    %c0_31 = arith.constant 0 : index
    %c0_32 = arith.constant 0 : index
    %41 = vector.load %arg9[%40, %c0_31, %c0_32] : memref<18x16x128xbf16, #tpu.memory_space<vmem>>, vector<16x16x128xbf16>
    %42 = vector.extract_strided_slice %41 {offsets = [0, 0, 0], sizes = [16, 15, 128], strides = [1, 1, 1]} : vector<16x16x128xbf16> to vector<16x15x128xbf16>
    %43 = tpu.concatenate %29, %42 in 1 : vector<16x1x128xbf16>, vector<16x15x128xbf16> -> vector<16x16x128xbf16>
    %44 = vector.extract_strided_slice %41 {offsets = [0, 1, 0], sizes = [16, 15, 128], strides = [1, 1, 1]} : vector<16x16x128xbf16> to vector<16x15x128xbf16>
    %45 = tpu.concatenate %44, %29 in 1 : vector<16x15x128xbf16>, vector<16x1x128xbf16> -> vector<16x16x128xbf16>
    %c2_i32 = arith.constant 2 : i32
    %46 = arith.addi %31, %c2_i32 : i32
    %47 = arith.index_cast %46 : i32 to index
    %c0_33 = arith.constant 0 : index
    %c0_34 = arith.constant 0 : index
    %48 = vector.load %arg9[%47, %c0_33, %c0_34] : memref<18x16x128xbf16, #tpu.memory_space<vmem>>, vector<16x16x128xbf16>
    %49 = vector.extract_strided_slice %48 {offsets = [0, 0, 0], sizes = [16, 15, 128], strides = [1, 1, 1]} : vector<16x16x128xbf16> to vector<16x15x128xbf16>
    %50 = tpu.concatenate %29, %49 in 1 : vector<16x1x128xbf16>, vector<16x15x128xbf16> -> vector<16x16x128xbf16>
    %51 = vector.extract_strided_slice %48 {offsets = [0, 1, 0], sizes = [16, 15, 128], strides = [1, 1, 1]} : vector<16x16x128xbf16> to vector<16x15x128xbf16>
    %52 = tpu.concatenate %51, %29 in 1 : vector<16x15x128xbf16>, vector<16x1x128xbf16> -> vector<16x16x128xbf16>
    %53 = tpu.concatenate %36, %34, %38, %43, %41, %45, %50, %48, %52 in 2 : vector<16x16x128xbf16>, vector<16x16x128xbf16>, vector<16x16x128xbf16>, vector<16x16x128xbf16>, vector<16x16x128xbf16>, vector<16x16x128xbf16>, vector<16x16x128xbf16>, vector<16x16x128xbf16>, vector<16x16x128xbf16> -> vector<16x16x1152xbf16>
    %54 = vector.shape_cast %53 : vector<16x16x1152xbf16> to vector<256x1152xbf16>
    %cst_35 = arith.constant dense<0.000000e+00> : vector<256x128xf32>
    %55 = tpu.matmul %54, %1, %cst_35 {dimension_numbers = #tpu.dot_dimension_numbers<[1], [0], [0], [1], [0, 0, 1, 1], [], []>} : vector<256x1152xbf16>, vector<1152x128xbf16>, vector<256x128xf32> -> vector<256x128xf32>
    %56 = vector.broadcast %4 : vector<1x128xf32> to vector<256x128xf32>
    %57 = arith.addf %55, %56 : vector<256x128xf32>
    %cst_36 = arith.constant 0.000000e+00 : f32
    %58 = vector.broadcast %cst_36 : f32 to vector<256x128xf32>
    %59 = arith.maximumf %57, %58 : vector<256x128xf32>
    %60 = arith.truncf %59 : vector<256x128xf32> to vector<256x128xbf16>
    %cst_37 = arith.constant dense<0.000000e+00> : vector<256x128xf32>
    %61 = tpu.matmul %60, %2, %cst_37 {dimension_numbers = #tpu.dot_dimension_numbers<[1], [0], [0], [1], [0, 0, 1, 1], [], []>} : vector<256x128xbf16>, vector<128x128xbf16>, vector<256x128xf32> -> vector<256x128xf32>
    %62 = vector.broadcast %5 : vector<1x128xf32> to vector<256x128xf32>
    %63 = arith.addf %61, %62 : vector<256x128xf32>
    %c0_38 = arith.constant 0 : index
    %64 = arith.index_cast %31 : i32 to index
    %c0_39 = arith.constant 0 : index
    %c0_40 = arith.constant 0 : index
    %65 = vector.load %arg1[%c0_38, %64, %c0_39, %c0_40] : memref<1x16x16x128xbf16, #tpu.memory_space<vmem>>, vector<1x16x16x128xbf16>
    %66 = vector.shape_cast %65 : vector<1x16x16x128xbf16> to vector<16x16x128xbf16>
    %67 = vector.shape_cast %66 : vector<16x16x128xbf16> to vector<256x128xbf16>
    %68 = arith.extf %67 : vector<256x128xbf16> to vector<256x128xf32>
    %69 = arith.addf %63, %68 : vector<256x128xf32>
    %cst_41 = arith.constant 0.000000e+00 : f32
    %70 = vector.broadcast %cst_41 : f32 to vector<256x128xf32>
    %71 = arith.maximumf %69, %70 : vector<256x128xf32>
    %72 = vector.shape_cast %71 : vector<256x128xf32> to vector<16x16x128xf32>
    %73 = arith.truncf %72 : vector<16x16x128xf32> to vector<16x16x128xbf16>
    %c0_42 = arith.constant 0 : index
    %74 = arith.index_cast %31 : i32 to index
    %c0_43 = arith.constant 0 : index
    %c0_44 = arith.constant 0 : index
    %75 = vector.load %arg8[%c0_42, %74, %c0_43, %c0_44] : memref<1x16x16x128xbf16, #tpu.memory_space<vmem>>, vector<1x16x16x128xbf16>
    %76 = vector.shape_cast %75 : vector<1x16x16x128xbf16> to vector<16x16x128xbf16>
    %77 = vector.shape_cast %73 : vector<16x16x128xbf16> to vector<1x16x16x128xbf16>
    tpu.vector_store %arg8[%c0_42, %74, %c0_43, %c0_44], %77 {strides = array<i32>} : memref<1x16x16x128xbf16, #tpu.memory_space<vmem>>, vector<1x16x16x128xbf16>,
    %c1_i32_45 = arith.constant 1 : i32
    return
  }
  func.func @transform_0(%arg0: i32) -> (i32, i32, i32, i32) {
    %c0_i32 = arith.constant 0 : i32
    %c0_i32_0 = arith.constant 0 : i32
    %c0_i32_1 = arith.constant 0 : i32
    %c0_i32_2 = arith.constant 0 : i32
    return %arg0, %c0_i32, %c0_i32_0, %c0_i32_1 : i32, i32, i32, i32
  }
  func.func @transform_1(%arg0: i32) -> (i32, i32) {
    %c0_i32 = arith.constant 0 : i32
    %c0_i32_0 = arith.constant 0 : i32
    %c0_i32_1 = arith.constant 0 : i32
    return %c0_i32, %c0_i32_0 : i32, i32
  }
  func.func @transform_2(%arg0: i32) -> (i32, i32) {
    %c0_i32 = arith.constant 0 : i32
    %c0_i32_0 = arith.constant 0 : i32
    %c0_i32_1 = arith.constant 0 : i32
    return %c0_i32, %c0_i32_0 : i32, i32
  }
  func.func @transform_3(%arg0: i32) -> (i32, i32) {
    %c0_i32 = arith.constant 0 : i32
    %c0_i32_0 = arith.constant 0 : i32
    %c0_i32_1 = arith.constant 0 : i32
    return %c0_i32, %c0_i32_0 : i32, i32
  }
  func.func @transform_4(%arg0: i32) -> (i32, i32) {
    %c0_i32 = arith.constant 0 : i32
    %c0_i32_0 = arith.constant 0 : i32
    %c0_i32_1 = arith.constant 0 : i32
    return %c0_i32, %c0_i32_0 : i32, i32
  }
  func.func @transform_5(%arg0: i32) -> (i32, i32) {
    %c0_i32 = arith.constant 0 : i32
    %c0_i32_0 = arith.constant 0 : i32
    %c0_i32_1 = arith.constant 0 : i32
    return %c0_i32, %c0_i32_0 : i32, i32
  }
  func.func @transform_6(%arg0: i32) -> (i32, i32) {
    %c0_i32 = arith.constant 0 : i32
    %c0_i32_0 = arith.constant 0 : i32
    %c0_i32_1 = arith.constant 0 : i32
    return %c0_i32, %c0_i32_0 : i32, i32
  }
  func.func @transform_7(%arg0: i32) -> (i32, i32, i32, i32) {
    %c0_i32 = arith.constant 0 : i32
    %c0_i32_0 = arith.constant 0 : i32
    %c0_i32_1 = arith.constant 0 : i32
    %c0_i32_2 = arith.constant 0 : i32
    return %arg0, %c0_i32, %c0_i32_0, %c0_i32_1 : i32, i32, i32, i32
  }
}

</mosaic_0001>

<llo_original>
// kernel: tpu_custom_call.1
$region0: #{tpu_custom_call.1}
  #allocation0 [shape = 'u32[]', space=smem, size = 0x4, offset = 0x4, fixed_abs, tag = 'smem constant byte address 0x4 - core index']
  #allocation1 [shape = 'u32[144,128]{1,0:T(1,128)}', space=vmem, size = 0x12000, scoped, tag = 'internal scratch']
  #allocation2 [shape = 'bf16[18,16,128]{2,1,0:T(16,128)(2,1)}', space=vmem, size = 0x12000, scoped, tag = 'scratch operand']
  %s0 = inlined_call_operand.hbm [shape: bf16[2,16,16,128], index: 0, kind: input, shape index: {}]
  %s1 = inlined_call_operand.hbm [shape: bf16[128,128], index: 1, kind: input, shape index: {}]
  %s2 = inlined_call_operand.vmem [shape: f32[1,128], index: 2, kind: input, shape index: {}]
  %s3 = inlined_call_operand.hbm [shape: bf16[1152,128], index: 3, kind: input, shape index: {}]
  %s4 = inlined_call_operand.vmem [shape: f32[1,128], index: 4, kind: input, shape index: {}]
  %s5 = inlined_call_operand.hbm [shape: bf16[128,128], index: 5, kind: input, shape index: {}]
  %s6 = inlined_call_operand.vmem [shape: f32[1,128], index: 6, kind: input, shape index: {}]
  %s7 = inlined_call_operand.hbm [shape: bf16[2,16,16,128], index: 7, kind: output, shape index: {}]
  %s8 = sld [smem:[#allocation0]]
  $region77: #{tpu_custom_call.1} parent=0
    _
  %s10 = ssub.s32 1, %s8
  %s11 = scalar_select 0, %s10, %s8
  $region1: #{tpu_custom_call.1} parent=0
    #allocation3 [shape = 'u8[131072]{0}', space=vmem, size = 0x20000, scoped, tag = 'input window, operand 0']
    #allocation4 [shape = 's32[2]{0}', space=sflag, size = 0x8, scoped, tag = 'scoped memory for tpu_custom_call.1']
    #allocation5 [shape = 's32[2]{0}', space=sflag, size = 0x8, scoped, tag = 'scoped memory for tpu_custom_call.1']
    #allocation6 [shape = 'u8[32768]{0}', space=vmem, size = 0x8000, scoped, tag = 'input window, operand 1, single buffered']
    #allocation7 [shape = 's32[1]{0}', space=sflag, size = 0x4, scoped, tag = 'scoped memory for tpu_custom_call.1']
    #allocation8 [shape = 'u8[294912]{0}', space=vmem, size = 0x48000, scoped, tag = 'input window, operand 3, single buffered']
    #allocation9 [shape = 'u8[32768]{0}', space=vmem, size = 0x8000, scoped, tag = 'input window, operand 5, single buffered']
    #allocation10 [shape = 's32[1]{0}', space=sflag, size = 0x4, scoped, tag = 'scoped memory for tpu_custom_call.1']
    #allocation11 [shape = 'u8[131072]{0}', space=vmem, size = 0x20000, scoped, tag = 'output window, operand 0']
    %12 = vsyncpa [#allocation4], 0
    %s13 = scalar_lea.sflag [#allocation4], 1
    %14 = vsyncpa %s13, 0
    %15 = vsyncpa [#allocation7], 0
    %16 = vsyncpa [#allocation10], 0
    %17 = vsyncpa [#allocation5], 0
    %s18 = scalar_lea.sflag [#allocation5], 1
    %19 = vsyncpa %s18, 0
    loop: start=0, step=1, limit=4
    $region2: #{tpu_custom_call.1} parent=1 // loop_pre_header
      _
    $region3: #{tpu_custom_call.1} parent=1 // loop_header
      %s21 = sphi 0, %s25
      %p22 = scmp.ge.s32.totalorder %s21, 4
      %s31 = sphi 0, %s33
      %s34 = sphi 0, %s31
      %s35 = sphi 0, %s34
      %s51 = sphi 0, %s35
      %s55 = sphi 0, %s55
      %s57 = sphi 0, %s55
      %s58 = sphi 0, %s57
      %s72 = sphi 0, %s58
      %s76 = sphi 0, %s76
      %s78 = sphi 0, %s76
      %s79 = sphi 0, %s78
      %s93 = sphi 0, %s79
      %s97 = sphi 0, %s97
      %s99 = sphi 0, %s97
      %s100 = sphi 0, %s99
      %s114 = sphi 0, %s100
      %s118 = sphi 0, %s118
      %s120 = sphi 0, %s118
      %s121 = sphi 0, %s120
      %s135 = sphi 0, %s121
      %s139 = sphi 0, %s139
      %s141 = sphi 0, %s139
      %s142 = sphi 0, %s141
      %s156 = sphi 0, %s142
      %s160 = sphi 0, %s160
      %s162 = sphi 0, %s160
      %s163 = sphi 0, %s162
      %s177 = sphi 0, %s163
      %s183 = sphi 0, %s185
      %s186 = sphi 0, %s183
      %s187 = sphi 0, %s186
      %s203 = sphi 0, %s187
    $region4: #{tpu_custom_call.1} parent=1 // loop_header_branch
      %24 = sbr.rel (%p22) target = $region8
    $region5: #{tpu_custom_call.1} parent=1 // loop_body
      %s26 = ssub.s32 %s21, 1
      %s27 = ssub.s32 %s21, 2
      %s28 = sadd.s32 %s21, 1
      %s29 = ssub.s32 %s21, %s28
      %p30 = scmp.eq.s32.totalorder %s29, 0
      %s32 = sadd.s32 %s31, 1
      %s33 = scalar_select %p30, %s31, %s32
      %p36 = pneg %p30
      %p37 = scmp.eq.s32.totalorder %s21, 1
      %p38 = por %p36, %p37
      %p39 = scmp.ne.s32.totalorder %s31, %s34
      %p40 = scmp.eq.s32.totalorder %s21, 0
      %p41 = por %p39, %p40
      %p42 = scmp.ne.s32.totalorder %s31, %s34
      %p43 = scmp.eq.s32.totalorder %s26, 1
      %p44 = por %p42, %p43
      %p45 = scmp.ne.s32.totalorder %s34, %s35
      %p46 = scmp.eq.s32.totalorder %s26, 0
      %p47 = por %p45, %p46
      %p48 = scmp.ne.s32.totalorder %s34, %s35
      %p49 = scmp.eq.s32.totalorder %s27, 1
      %p50 = por %p48, %p49
      %p52 = scmp.ne.s32.totalorder %s35, %s51
      %p53 = scmp.eq.s32.totalorder %s27, 0
      %p54 = por %p52, %p53
      %s56 = sadd.s32 %s55, 1
      %p59 = scmp.eq.s32.totalorder %s21, 1
      %p60 = scmp.ne.s32.totalorder %s55, %s57
      %p61 = scmp.eq.s32.totalorder %s21, 0
      %p62 = por %p60, %p61
      %p63 = scmp.ne.s32.totalorder %s55, %s57
      %p64 = scmp.eq.s32.totalorder %s26, 1
      %p65 = por %p63, %p64
      %p66 = scmp.ne.s32.totalorder %s57, %s58
      %p67 = scmp.eq.s32.totalorder %s26, 0
      %p68 = por %p66, %p67
      %p69 = scmp.ne.s32.totalorder %s57, %s58
      %p70 = scmp.eq.s32.totalorder %s27, 1
      %p71 = por %p69, %p70
      %p73 = scmp.ne.s32.totalorder %s58, %s72
      %p74 = scmp.eq.s32.totalorder %s27, 0
      %p75 = por %p73, %p74
      %s77 = sadd.s32 %s76, 1
      %p80 = scmp.eq.s32.totalorder %s21, 1
      %p81 = scmp.ne.s32.totalorder %s76, %s78
      %p82 = scmp.eq.s32.totalorder %s21, 0
      %p83 = por %p81, %p82
      %p84 = scmp.ne.s32.totalorder %s76, %s78
      %p85 = scmp.eq.s32.totalorder %s26, 1
      %p86 = por %p84, %p85
      %p87 = scmp.ne.s32.totalorder %s78, %s79
      %p88 = scmp.eq.s32.totalorder %s26, 0
      %p89 = por %p87, %p88
      %p90 = scmp.ne.s32.totalorder %s78, %s79
      %p91 = scmp.eq.s32.totalorder %s27, 1
      %p92 = por %p90, %p91
      %p94 = scmp.ne.s32.totalorder %s79, %s93
      %p95 = scmp.eq.s32.totalorder %s27, 0
      %p96 = por %p94, %p95
      %s98 = sadd.s32 %s97, 1
      %p101 = scmp.eq.s32.totalorder %s21, 1
      %p102 = scmp.ne.s32.totalorder %s97, %s99
      %p103 = scmp.eq.s32.totalorder %s21, 0
      %p104 = por %p102, %p103
      %p105 = scmp.ne.s32.totalorder %s97, %s99
      %p106 = scmp.eq.s32.totalorder %s26, 1
      %p107 = por %p105, %p106
      %p108 = scmp.ne.s32.totalorder %s99, %s100
      %p109 = scmp.eq.s32.totalorder %s26, 0
      %p110 = por %p108, %p109
      %p111 = scmp.ne.s32.totalorder %s99, %s100
      %p112 = scmp.eq.s32.totalorder %s27, 1
      %p113 = por %p111, %p112
      %p115 = scmp.ne.s32.totalorder %s100, %s114
      %p116 = scmp.eq.s32.totalorder %s27, 0
      %p117 = por %p115, %p116
      %s119 = sadd.s32 %s118, 1
      %p122 = scmp.eq.s32.totalorder %s21, 1
      %p123 = scmp.ne.s32.totalorder %s118, %s120
      %p124 = scmp.eq.s32.totalorder %s21, 0
      %p125 = por %p123, %p124
      %p126 = scmp.ne.s32.totalorder %s118, %s120
      %p127 = scmp.eq.s32.totalorder %s26, 1
      %p128 = por %p126, %p127
      %p129 = scmp.ne.s32.totalorder %s120, %s121
      %p130 = scmp.eq.s32.totalorder %s26, 0
      %p131 = por %p129, %p130
      %p132 = scmp.ne.s32.totalorder %s120, %s121
      %p133 = scmp.eq.s32.totalorder %s27, 1
      %p134 = por %p132, %p133
      %p136 = scmp.ne.s32.totalorder %s121, %s135
      %p137 = scmp.eq.s32.totalorder %s27, 0
      %p138 = por %p136, %p137
      %s140 = sadd.s32 %s139, 1
      %p143 = scmp.eq.s32.totalorder %s21, 1
      %p144 = scmp.ne.s32.totalorder %s139, %s141
      %p145 = scmp.eq.s32.totalorder %s21, 0
      %p146 = por %p144, %p145
      %p147 = scmp.ne.s32.totalorder %s139, %s141
      %p148 = scmp.eq.s32.totalorder %s26, 1
      %p149 = por %p147, %p148
      %p150 = scmp.ne.s32.totalorder %s141, %s142
      %p151 = scmp.eq.s32.totalorder %s26, 0
      %p152 = por %p150, %p151
      %p153 = scmp.ne.s32.totalorder %s141, %s142
      %p154 = scmp.eq.s32.totalorder %s27, 1
      %p155 = por %p153, %p154
      %p157 = scmp.ne.s32.totalorder %s142, %s156
      %p158 = scmp.eq.s32.totalorder %s27, 0
      %p159 = por %p157, %p158
      %s161 = sadd.s32 %s160, 1
      %p164 = scmp.eq.s32.totalorder %s21, 1
      %p165 = scmp.ne.s32.totalorder %s160, %s162
      %p166 = scmp.eq.s32.totalorder %s21, 0
      %p167 = por %p165, %p166
      %p168 = scmp.ne.s32.totalorder %s160, %s162
      %p169 = scmp.eq.s32.totalorder %s26, 1
      %p170 = por %p168, %p169
      %p171 = scmp.ne.s32.totalorder %s162, %s163
      %p172 = scmp.eq.s32.totalorder %s26, 0
      %p173 = por %p171, %p172
      %p174 = scmp.ne.s32.totalorder %s162, %s163
      %p175 = scmp.eq.s32.totalorder %s27, 1
      %p176 = por %p174, %p175
      %p178 = scmp.ne.s32.totalorder %s163, %s177
      %p179 = scmp.eq.s32.totalorder %s27, 0
      %p180 = por %p178, %p179
      %s181 = ssub.s32 %s21, %s28
      %p182 = scmp.eq.s32.totalorder %s181, 0
      %s184 = sadd.s32 %s183, 1
      %s185 = scalar_select %p182, %s183, %s184
      %p188 = pneg %p182
      %p189 = scmp.eq.s32.totalorder %s21, 1
      %p190 = por %p188, %p189
      %p191 = scmp.ne.s32.totalorder %s183, %s186
      %p192 = scmp.eq.s32.totalorder %s21, 0
      %p193 = por %p191, %p192
      %p194 = scmp.ne.s32.totalorder %s183, %s186
      %p195 = scmp.eq.s32.totalorder %s26, 1
      %p196 = por %p194, %p195
      %p197 = scmp.ne.s32.totalorder %s186, %s187
      %p198 = scmp.eq.s32.totalorder %s26, 0
      %p199 = por %p197, %p198
      %p200 = scmp.ne.s32.totalorder %s186, %s187
      %p201 = scmp.eq.s32.totalorder %s27, 1
      %p202 = por %p200, %p201
      %p204 = scmp.ne.s32.totalorder %s187, %s203
      %p205 = scmp.eq.s32.totalorder %s27, 0
      %p206 = por %p204, %p205
      %p207 = scmp.le.s32.totalorder 1, %s21
      %p208 = scmp.lt.s32.totalorder %s21, 3
      %p209 = pnand %p207, %p208
      %p210 = pneg %p209
      // Predicated region
      $region9: #{tpu_custom_call.1} parent=5 // pred_check
        _
      $region10: #{tpu_custom_call.1} parent=5 // pred_check_branch
        %212 = sbr.rel (%p209) target = $region12
      $region11: #{tpu_custom_call.1} parent=5 // pred_region
        %s213 = ssub.s32 %s21, 1
        // Predicated region
        $region13: #{tpu_custom_call.1} parent=11 // pred_check
          %p214 = pneg %p68
        $region14: #{tpu_custom_call.1} parent=11 // pred_check_branch
          %216 = sbr.rel (%p214) target = $region16
        $region15: #{tpu_custom_call.1} parent=11 // pred_region
          %s218 = ssub.s32 1024, 1024
          %219 = vsyncadd [#allocation7], %s218
          %s220 = sshll.u32 [#allocation6], 4
          %s221 = int_to_ptr.vmem [resolvable:$true] %s220
          %226 = dma.hbm_to_vmem [thread:$0]  %s1, 1024, %s221, [#allocation7], 64, 64, 4
        $region16: #{tpu_custom_call.1} parent=11 // pred_fallthru
          _
        // Predicated region
        $region17: #{tpu_custom_call.1} parent=11 // pred_check
          %p227 = pneg %p89
        $region18: #{tpu_custom_call.1} parent=11 // pred_check_branch
          %229 = sbr.rel (%p227) target = $region20
        $region19: #{tpu_custom_call.1} parent=11 // pred_region
          _
        $region20: #{tpu_custom_call.1} parent=11 // pred_fallthru
          _
        // Predicated region
        $region21: #{tpu_custom_call.1} parent=11 // pred_check
          %p230 = pneg %p110
        $region22: #{tpu_custom_call.1} parent=11 // pred_check_branch
          %232 = sbr.rel (%p230) target = $region24
        $region23: #{tpu_custom_call.1} parent=11 // pred_region
          %s234 = ssub.s32 9216, 9216
          %235 = vsyncadd [#allocation7], %s234
          %s236 = sshll.u32 [#allocation8], 4
          %s237 = int_to_ptr.vmem [resolvable:$true] %s236
          %242 = dma.hbm_to_vmem [thread:$0]  %s3, 9216, %s237, [#allocation7], 64, 64, 4
        $region24: #{tpu_custom_call.1} parent=11 // pred_fallthru
          _
        // Predicated region
        $region25: #{tpu_custom_call.1} parent=11 // pred_check
          %p243 = pneg %p131
        $region26: #{tpu_custom_call.1} parent=11 // pred_check_branch
          %245 = sbr.rel (%p243) target = $region28
        $region27: #{tpu_custom_call.1} parent=11 // pred_region
          _
        $region28: #{tpu_custom_call.1} parent=11 // pred_fallthru
          _
        // Predicated region
        $region29: #{tpu_custom_call.1} parent=11 // pred_check
          %p246 = pneg %p152
        $region30: #{tpu_custom_call.1} parent=11 // pred_check_branch
          %248 = sbr.rel (%p246) target = $region32
        $region31: #{tpu_custom_call.1} parent=11 // pred_region
          %s250 = ssub.s32 1024, 1024
          %251 = vsyncadd [#allocation10], %s250
          %s252 = sshll.u32 [#allocation9], 4
          %s253 = int_to_ptr.vmem [resolvable:$true] %s252
          %258 = dma.hbm_to_vmem [thread:$0]  %s5, 1024, %s253, [#allocation10], 64, 64, 4
        $region32: #{tpu_custom_call.1} parent=11 // pred_fallthru
          _
        // Predicated region
        $region33: #{tpu_custom_call.1} parent=11 // pred_check
          %p259 = pneg %p173
        $region34: #{tpu_custom_call.1} parent=11 // pred_check_branch
          %261 = sbr.rel (%p259) target = $region36
        $region35: #{tpu_custom_call.1} parent=11 // pred_region
          _
        $region36: #{tpu_custom_call.1} parent=11 // pred_fallthru
          _
      $region12: #{tpu_custom_call.1} parent=5 // pred_fallthru
        _
      %p262 = scmp.lt.s32.totalorder %s21, 2
      // Predicated region
      $region37: #{tpu_custom_call.1} parent=5 // pred_check
        %p263 = pneg %p262
      $region38: #{tpu_custom_call.1} parent=5 // pred_check_branch
        %265 = sbr.rel (%p263) target = $region40
      $region39: #{tpu_custom_call.1} parent=5 // pred_region
        // Predicated region
        $region41: #{tpu_custom_call.1} parent=39 // pred_check
          %p266 = pneg %p41
        $region42: #{tpu_custom_call.1} parent=39 // pred_check_branch
          %268 = sbr.rel (%p266) target = $region44
        $region43: #{tpu_custom_call.1} parent=39 // pred_region
          %s269 = sand.u32 %s31, 1
          %s270 = scalar_lea.sflag [#allocation4], %s269
          %s271 = sand.u32 %s31, 1
          %s272 = smul.addr %s271, 128
          %s273 = scalar_lea.vmem [#allocation3], %s272
          %s275 = ssub.s32 2048, 2048
          %276 = vsyncadd %s270, %s275
          %s277 = smul.addr %s21, 32
          %s278 = smul.addr %s277, 64
          %s279 = scalar_lea.hbm %s0, %s278
          %s280 = sshll.u32 %s273, 4
          %s281 = int_to_ptr.vmem [resolvable:$true] %s280
          %286 = dma.hbm_to_vmem [thread:$0]  %s279, 2048, %s281, %s270, 64, 64, 4
        $region44: #{tpu_custom_call.1} parent=39 // pred_fallthru
          _
      $region40: #{tpu_custom_call.1} parent=5 // pred_fallthru
        _
      %p287 = scmp.le.s32.totalorder 1, %s21
      %p288 = scmp.lt.s32.totalorder %s21, 3
      %p289 = pnand %p287, %p288
      %p290 = pneg %p289
      // Predicated region
      $region45: #{tpu_custom_call.1} parent=5 // pred_check
        _
      $region46: #{tpu_custom_call.1} parent=5 // pred_check_branch
        %292 = sbr.rel (%p289) target = $region48
      $region47: #{tpu_custom_call.1} parent=5 // pred_region
        %s293 = ssub.s32 %s21, 1
        %s294 = sand.u32 %s34, 1
        %s295 = scalar_lea.sflag [#allocation4], %s294
        %s296 = sand.u32 %s34, 1
        %s297 = smul.addr %s296, 128
        %s298 = scalar_lea.vmem [#allocation3], %s297
        // Predicated region
        $region49: #{tpu_custom_call.1} parent=47 // pred_check
          %p299 = pneg %p47
        $region50: #{tpu_custom_call.1} parent=47 // pred_check_branch
          %301 = sbr.rel (%p299) target = $region52
        $region51: #{tpu_custom_call.1} parent=47 // pred_region
          %302 = dma.done %s295, 2048
        $region52: #{tpu_custom_call.1} parent=47 // pred_fallthru
          _
        // Predicated region
        $region53: #{tpu_custom_call.1} parent=47 // pred_check
          %p303 = pneg %p68
        $region54: #{tpu_custom_call.1} parent=47 // pred_check_branch
          %305 = sbr.rel (%p303) target = $region56
        $region55: #{tpu_custom_call.1} parent=47 // pred_region
          %306 = dma.done [#allocation7], 1024
        $region56: #{tpu_custom_call.1} parent=47 // pred_fallthru
          _
        // Predicated region
        $region57: #{tpu_custom_call.1} parent=47 // pred_check
          %p307 = pneg %p110
        $region58: #{tpu_custom_call.1} parent=47 // pred_check_branch
          %309 = sbr.rel (%p307) target = $region60
        $region59: #{tpu_custom_call.1} parent=47 // pred_region
          %310 = dma.done [#allocation7], 9216
        $region60: #{tpu_custom_call.1} parent=47 // pred_fallthru
          _
        // Predicated region
        $region61: #{tpu_custom_call.1} parent=47 // pred_check
          %p311 = pneg %p152
        $region62: #{tpu_custom_call.1} parent=47 // pred_check_branch
          %313 = sbr.rel (%p311) target = $region64
        $region63: #{tpu_custom_call.1} parent=47 // pred_region
          %314 = dma.done [#allocation10], 1024
        $region64: #{tpu_custom_call.1} parent=47 // pred_fallthru
          _
        %s315 = sand.u32 %s34, 1
        %s316 = scalar_lea.sflag [#allocation4], %s315
        %s317 = sand.u32 %s34, 1
        %s318 = smul.addr %s317, 128
        %s319 = scalar_lea.vmem [#allocation3], %s318
        %p320 = pneg %p47
        %p321 = pneg %p44
        %p322 = pneg %p68
        %p323 = pneg %p65
        %p324 = pneg %p89
        %p325 = pneg %p86
        %p326 = pneg %p110
        %p327 = pneg %p107
        %p328 = pneg %p131
        %p329 = pneg %p128
        %p330 = pneg %p152
        %p331 = pneg %p149
        %p332 = pneg %p173
        %p333 = pneg %p170
        %p334 = pneg %p199
        %p335 = pneg %p196
        %s336 = sand.u32 %s186, 1
        %s337 = scalar_lea.sflag [#allocation5], %s336
        %s338 = sand.u32 %s186, 1
        %s339 = smul.addr %s338, 128
        %s340 = scalar_lea.vmem [#allocation11], %s339
        %v342 = vld [vmem:[#allocation6] sm:$0xf]
        %v343 = vld [vmem:[#allocation6 + $0x4] sm:$0xf]
        %v344 = vld [vmem:[#allocation6 + $0x8] sm:$0xf]
        %v345 = vld [vmem:[#allocation6 + $0xc] sm:$0xf]
        %v346 = vld [vmem:[#allocation6 + $0x10] sm:$0xf]
        %v347 = vld [vmem:[#allocation6 + $0x14] sm:$0xf]
        %v348 = vld [vmem:[#allocation6 + $0x18] sm:$0xf]
        %v349 = vld [vmem:[#allocation6 + $0x1c] sm:$0xf]
        %v350 = vld [vmem:[#allocation6 + $0x20] sm:$0xf]
        %v351 = vld [vmem:[#allocation6 + $0x24] sm:$0xf]
        %v352 = vld [vmem:[#allocation6 + $0x28] sm:$0xf]
        %v353 = vld [vmem:[#allocation6 + $0x2c] sm:$0xf]
        %v354 = vld [vmem:[#allocation6 + $0x30] sm:$0xf]
        %v355 = vld [vmem:[#allocation6 + $0x34] sm:$0xf]
        %v356 = vld [vmem:[#allocation6 + $0x38] sm:$0xf]
        %v357 = vld [vmem:[#allocation6 + $0x3c] sm:$0xf]
        %v358 = vld [vmem:[#allocation8] sm:$0xf]
        %v359 = vld [vmem:[#allocation8 + $0x4] sm:$0xf]
        %v360 = vld [vmem:[#allocation8 + $0x8] sm:$0xf]
        %v361 = vld [vmem:[#allocation8 + $0xc] sm:$0xf]
        %v362 = vld [vmem:[#allocation8 + $0x10] sm:$0xf]
        %v363 = vld [vmem:[#allocation8 + $0x14] sm:$0xf]
        %v364 = vld [vmem:[#allocation8 + $0x18] sm:$0xf]
        %v365 = vld [vmem:[#allocation8 + $0x1c] sm:$0xf]
        %v366 = vld [vmem:[#allocation8 + $0x20] sm:$0xf]
        %v367 = vld [vmem:[#allocation8 + $0x24] sm:$0xf]
        %v368 = vld [vmem:[#allocation8 + $0x28] sm:$0xf]
        %v369 = vld [vmem:[#allocation8 + $0x2c] sm:$0xf]
        %v370 = vld [vmem:[#allocation8 + $0x30] sm:$0xf]
        %v371 = vld [vmem:[#allocation8 + $0x34] sm:$0xf]
        %v372 = vld [vmem:[#allocation8 + $0x38] sm:$0xf]
        %v373 = vld [vmem:[#allocation8 + $0x3c] sm:$0xf]
        %v374 = vld [vmem:[#allocation8 + $0x40] sm:$0xf]
        %v375 = vld [vmem:[#allocation8 + $0x44] sm:$0xf]
        %v376 = vld [vmem:[#allocation8 + $0x48] sm:$0xf]
        %v377 = vld [vmem:[#allocation8 + $0x4c] sm:$0xf]
        %v378 = vld [vmem:[#allocation8 + $0x50] sm:$0xf]
        %v379 = vld [vmem:[#allocation8 + $0x54] sm:$0xf]
        %v380 = vld [vmem:[#allocation8 + $0x58] sm:$0xf]
        %v381 = vld [vmem:[#allocation8 + $0x5c] sm:$0xf]
        %v382 = vld [vmem:[#allocation8 + $0x60] sm:$0xf]
        %v383 = vld [vmem:[#allocation8 + $0x64] sm:$0xf]
        %v384 = vld [vmem:[#allocation8 + $0x68] sm:$0xf]
        %v385 = vld [vmem:[#allocation8 + $0x6c] sm:$0xf]
        %v386 = vld [vmem:[#allocation8 + $0x70] sm:$0xf]
        %v387 = vld [vmem:[#allocation8 + $0x74] sm:$0xf]
        %v388 = vld [vmem:[#allocation8 + $0x78] sm:$0xf]
        %v389 = vld [vmem:[#allocation8 + $0x7c] sm:$0xf]
        %v390 = vld [vmem:[#allocation8 + $0x80] sm:$0xf]
        %v391 = vld [vmem:[#allocation8 + $0x84] sm:$0xf]
        %v392 = vld [vmem:[#allocation8 + $0x88] sm:$0xf]
        %v393 = vld [vmem:[#allocation8 + $0x8c] sm:$0xf]
        %v394 = vld [vmem:[#allocation8 + $0x90] sm:$0xf]
        %v395 = vld [vmem:[#allocation8 + $0x94] sm:$0xf]
        %v396 = vld [vmem:[#allocation8 + $0x98] sm:$0xf]
        %v397 = vld [vmem:[#allocation8 + $0x9c] sm:$0xf]
        %v398 = vld [vmem:[#allocation8 + $0xa0] sm:$0xf]
        %v399 = vld [vmem:[#allocation8 + $0xa4] sm:$0xf]
        %v400 = vld [vmem:[#allocation8 + $0xa8] sm:$0xf]
        %v401 = vld [vmem:[#allocation8 + $0xac] sm:$0xf]
        %v402 = vld [vmem:[#allocation8 + $0xb0] sm:$0xf]
        %v403 = vld [vmem:[#allocation8 + $0xb4] sm:$0xf]
        %v404 = vld [vmem:[#allocation8 + $0xb8] sm:$0xf]
        %v405 = vld [vmem:[#allocation8 + $0xbc] sm:$0xf]
        %v406 = vld [vmem:[#allocation8 + $0xc0] sm:$0xf]
        %v407 = vld [vmem:[#allocation8 + $0xc4] sm:$0xf]
        %v408 = vld [vmem:[#allocation8 + $0xc8] sm:$0xf]
        %v409 = vld [vmem:[#allocation8 + $0xcc] sm:$0xf]
        %v410 = vld [vmem:[#allocation8 + $0xd0] sm:$0xf]
        %v411 = vld [vmem:[#allocation8 + $0xd4] sm:$0xf]
        %v412 = vld [vmem:[#allocation8 + $0xd8] sm:$0xf]
        %v413 = vld [vmem:[#allocation8 + $0xdc] sm:$0xf]
        %v414 = vld [vmem:[#allocation8 + $0xe0] sm:$0xf]
        %v415 = vld [vmem:[#allocation8 + $0xe4] sm:$0xf]
        %v416 = vld [vmem:[#allocation8 + $0xe8] sm:$0xf]
        %v417 = vld [vmem:[#allocation8 + $0xec] sm:$0xf]
        %v418 = vld [vmem:[#allocation8 + $0xf0] sm:$0xf]
        %v419 = vld [vmem:[#allocation8 + $0xf4] sm:$0xf]
        %v420 = vld [vmem:[#allocation8 + $0xf8] sm:$0xf]
        %v421 = vld [vmem:[#allocation8 + $0xfc] sm:$0xf]
        %v422 = vld [vmem:[#allocation8 + $0x100] sm:$0xf]
        %v423 = vld [vmem:[#allocation8 + $0x104] sm:$0xf]
        %v424 = vld [vmem:[#allocation8 + $0x108] sm:$0xf]
        %v425 = vld [vmem:[#allocation8 + $0x10c] sm:$0xf]
        %v426 = vld [vmem:[#allocation8 + $0x110] sm:$0xf]
        %v427 = vld [vmem:[#allocation8 + $0x114] sm:$0xf]
        %v428 = vld [vmem:[#allocation8 + $0x118] sm:$0xf]
        %v429 = vld [vmem:[#allocation8 + $0x11c] sm:$0xf]
        %v430 = vld [vmem:[#allocation8 + $0x120] sm:$0xf]
        %v431 = vld [vmem:[#allocation8 + $0x124] sm:$0xf]
        %v432 = vld [vmem:[#allocation8 + $0x128] sm:$0xf]
        %v433 = vld [vmem:[#allocation8 + $0x12c] sm:$0xf]
        %v434 = vld [vmem:[#allocation8 + $0x130] sm:$0xf]
        %v435 = vld [vmem:[#allocation8 + $0x134] sm:$0xf]
        %v436 = vld [vmem:[#allocation8 + $0x138] sm:$0xf]
        %v437 = vld [vmem:[#allocation8 + $0x13c] sm:$0xf]
        %v438 = vld [vmem:[#allocation8 + $0x140] sm:$0xf]
        %v439 = vld [vmem:[#allocation8 + $0x144] sm:$0xf]
        %v440 = vld [vmem:[#allocation8 + $0x148] sm:$0xf]
        %v441 = vld [vmem:[#allocation8 + $0x14c] sm:$0xf]
        %v442 = vld [vmem:[#allocation8 + $0x150] sm:$0xf]
        %v443 = vld [vmem:[#allocation8 + $0x154] sm:$0xf]
        %v444 = vld [vmem:[#allocation8 + $0x158] sm:$0xf]
        %v445 = vld [vmem:[#allocation8 + $0x15c] sm:$0xf]
        %v446 = vld [vmem:[#allocation8 + $0x160] sm:$0xf]
        %v447 = vld [vmem:[#allocation8 + $0x164] sm:$0xf]
        %v448 = vld [vmem:[#allocation8 + $0x168] sm:$0xf]
        %v449 = vld [vmem:[#allocation8 + $0x16c] sm:$0xf]
        %v450 = vld [vmem:[#allocation8 + $0x170] sm:$0xf]
        %v451 = vld [vmem:[#allocation8 + $0x174] sm:$0xf]
        %v452 = vld [vmem:[#allocation8 + $0x178] sm:$0xf]
        %v453 = vld [vmem:[#allocation8 + $0x17c] sm:$0xf]
        %v454 = vld [vmem:[#allocation8 + $0x180] sm:$0xf]
        %v455 = vld [vmem:[#allocation8 + $0x184] sm:$0xf]
        %v456 = vld [vmem:[#allocation8 + $0x188] sm:$0xf]
        %v457 = vld [vmem:[#allocation8 + $0x18c] sm:$0xf]
        %v458 = vld [vmem:[#allocation8 + $0x190] sm:$0xf]
        %v459 = vld [vmem:[#allocation8 + $0x194] sm:$0xf]
        %v460 = vld [vmem:[#allocation8 + $0x198] sm:$0xf]
        %v461 = vld [vmem:[#allocation8 + $0x19c] sm:$0xf]
        %v462 = vld [vmem:[#allocation8 + $0x1a0] sm:$0xf]
        %v463 = vld [vmem:[#allocation8 + $0x1a4] sm:$0xf]
        %v464 = vld [vmem:[#allocation8 + $0x1a8] sm:$0xf]
        %v465 = vld [vmem:[#allocation8 + $0x1ac] sm:$0xf]
        %v466 = vld [vmem:[#allocation8 + $0x1b0] sm:$0xf]
        %v467 = vld [vmem:[#allocation8 + $0x1b4] sm:$0xf]
        %v468 = vld [vmem:[#allocation8 + $0x1b8] sm:$0xf]
        %v469 = vld [vmem:[#allocation8 + $0x1bc] sm:$0xf]
        %v470 = vld [vmem:[#allocation8 + $0x1c0] sm:$0xf]
        %v471 = vld [vmem:[#allocation8 + $0x1c4] sm:$0xf]
        %v472 = vld [vmem:[#allocation8 + $0x1c8] sm:$0xf]
        %v473 = vld [vmem:[#allocation8 + $0x1cc] sm:$0xf]
        %v474 = vld [vmem:[#allocation8 + $0x1d0] sm:$0xf]
        %v475 = vld [vmem:[#allocation8 + $0x1d4] sm:$0xf]
        %v476 = vld [vmem:[#allocation8 + $0x1d8] sm:$0xf]
        %v477 = vld [vmem:[#allocation8 + $0x1dc] sm:$0xf]
        %v478 = vld [vmem:[#allocation8 + $0x1e0] sm:$0xf]
        %v479 = vld [vmem:[#allocation8 + $0x1e4] sm:$0xf]
        %v480 = vld [vmem:[#allocation8 + $0x1e8] sm:$0xf]
        %v481 = vld [vmem:[#allocation8 + $0x1ec] sm:$0xf]
        %v482 = vld [vmem:[#allocation8 + $0x1f0] sm:$0xf]
        %v483 = vld [vmem:[#allocation8 + $0x1f4] sm:$0xf]
        %v484 = vld [vmem:[#allocation8 + $0x1f8] sm:$0xf]
        %v485 = vld [vmem:[#allocation8 + $0x1fc] sm:$0xf]
        %v486 = vld [vmem:[#allocation8 + $0x200] sm:$0xf]
        %v487 = vld [vmem:[#allocation8 + $0x204] sm:$0xf]
        %v488 = vld [vmem:[#allocation8 + $0x208] sm:$0xf]
        %v489 = vld [vmem:[#allocation8 + $0x20c] sm:$0xf]
        %v490 = vld [vmem:[#allocation8 + $0x210] sm:$0xf]
        %v491 = vld [vmem:[#allocation8 + $0x214] sm:$0xf]
        %v492 = vld [vmem:[#allocation8 + $0x218] sm:$0xf]
        %v493 = vld [vmem:[#allocation8 + $0x21c] sm:$0xf]
        %v494 = vld [vmem:[#allocation8 + $0x220] sm:$0xf]
        %v495 = vld [vmem:[#allocation8 + $0x224] sm:$0xf]
        %v496 = vld [vmem:[#allocation8 + $0x228] sm:$0xf]
        %v497 = vld [vmem:[#allocation8 + $0x22c] sm:$0xf]
        %v498 = vld [vmem:[#allocation8 + $0x230] sm:$0xf]
        %v499 = vld [vmem:[#allocation8 + $0x234] sm:$0xf]
        %v500 = vld [vmem:[#allocation8 + $0x238] sm:$0xf]
        %v501 = vld [vmem:[#allocation8 + $0x23c] sm:$0xf]
        %v502 = vld [vmem:[#allocation9] sm:$0xf]
        %v503 = vld [vmem:[#allocation9 + $0x4] sm:$0xf]
        %v504 = vld [vmem:[#allocation9 + $0x8] sm:$0xf]
        %v505 = vld [vmem:[#allocation9 + $0xc] sm:$0xf]
        %v506 = vld [vmem:[#allocation9 + $0x10] sm:$0xf]
        %v507 = vld [vmem:[#allocation9 + $0x14] sm:$0xf]
        %v508 = vld [vmem:[#allocation9 + $0x18] sm:$0xf]
        %v509 = vld [vmem:[#allocation9 + $0x1c] sm:$0xf]
        %v510 = vld [vmem:[#allocation9 + $0x20] sm:$0xf]
        %v511 = vld [vmem:[#allocation9 + $0x24] sm:$0xf]
        %v512 = vld [vmem:[#allocation9 + $0x28] sm:$0xf]
        %v513 = vld [vmem:[#allocation9 + $0x2c] sm:$0xf]
        %v514 = vld [vmem:[#allocation9 + $0x30] sm:$0xf]
        %v515 = vld [vmem:[#allocation9 + $0x34] sm:$0xf]
        %v516 = vld [vmem:[#allocation9 + $0x38] sm:$0xf]
        %v517 = vld [vmem:[#allocation9 + $0x3c] sm:$0xf]
        %v518 = vld [vmem:[%s2] sm:$0x1]
        %v519 = vld [vmem:[%s4] sm:$0x1]
        %v520 = vld [vmem:[%s6] sm:$0x1]
        %521 = vst [vmem:[#allocation2] sm:$0xff] 0
        %s522 = scalar_lea.vmem [#allocation2], 136
        %523 = vst [vmem:[%s522] sm:$0xff] 0
        %s524 = smul.u32 0, 2
        %s525 = smul.addr %s524, 4
        %s526 = scalar_lea.vmem %s298, %s525 [#allocation3]
        %v527 = vld [vmem:[%s526] sm:$0xf]
        %v528 = vld [vmem:[%s526 + $0x4] sm:$0xf]
        %v529 = vld [vmem:[%s526 + $0x8] sm:$0xf]
        %v530 = vld [vmem:[%s526 + $0xc] sm:$0xf]
        %v531 = vld [vmem:[%s526 + $0x10] sm:$0xf]
        %v532 = vld [vmem:[%s526 + $0x14] sm:$0xf]
        %v533 = vld [vmem:[%s526 + $0x18] sm:$0xf]
        %v534 = vld [vmem:[%s526 + $0x1c] sm:$0xf]
        %v535 = vld [vmem:[%s526 + $0x20] sm:$0xf]
        %v536 = vld [vmem:[%s526 + $0x24] sm:$0xf]
        %v537 = vld [vmem:[%s526 + $0x28] sm:$0xf]
        %v538 = vld [vmem:[%s526 + $0x2c] sm:$0xf]
        %v539 = vld [vmem:[%s526 + $0x30] sm:$0xf]
        %v540 = vld [vmem:[%s526 + $0x34] sm:$0xf]
        %v541 = vld [vmem:[%s526 + $0x38] sm:$0xf]
        %v542 = vld [vmem:[%s526 + $0x3c] sm:$0xf]
        %v543 = vld [vmem:[%s526 + $0x40] sm:$0xf]
        %v544 = vld [vmem:[%s526 + $0x44] sm:$0xf]
        %v545 = vld [vmem:[%s526 + $0x48] sm:$0xf]
        %v546 = vld [vmem:[%s526 + $0x4c] sm:$0xf]
        %v547 = vld [vmem:[%s526 + $0x50] sm:$0xf]
        %v548 = vld [vmem:[%s526 + $0x54] sm:$0xf]
        %v549 = vld [vmem:[%s526 + $0x58] sm:$0xf]
        %v550 = vld [vmem:[%s526 + $0x5c] sm:$0xf]
        %v551 = vld [vmem:[%s526 + $0x60] sm:$0xf]
        %v552 = vld [vmem:[%s526 + $0x64] sm:$0xf]
        %v553 = vld [vmem:[%s526 + $0x68] sm:$0xf]
        %v554 = vld [vmem:[%s526 + $0x6c] sm:$0xf]
        %v555 = vld [vmem:[%s526 + $0x70] sm:$0xf]
        %v556 = vld [vmem:[%s526 + $0x74] sm:$0xf]
        %v557 = vld [vmem:[%s526 + $0x78] sm:$0xf]
        %v558 = vld [vmem:[%s526 + $0x7c] sm:$0xf]
        %v560 = vlaneseq
        %v561 = vshrl.u32 %v560, 7
        %v562 = vsub.s32 0, %v561
        %v563 = vrot.slane %v518, %v562
        %v597 = vunpack.c.l.b16 %v527
        %v598 = vunpack.c.l.b16 %v528
        %v599 = vunpack.c.l.b16 %v529
        %v600 = vunpack.c.l.b16 %v530
        %v601 = vunpack.c.l.b16 %v531
        %v602 = vunpack.c.l.b16 %v532
        %v603 = vunpack.c.l.b16 %v533
        %v604 = vunpack.c.l.b16 %v534
        %v605 = vunpack.c.l.b16 %v535
        %v606 = vunpack.c.l.b16 %v536
        %v607 = vunpack.c.l.b16 %v537
        %v608 = vunpack.c.l.b16 %v538
        %v609 = vunpack.c.l.b16 %v539
        %v610 = vunpack.c.l.b16 %v540
        %v611 = vunpack.c.l.b16 %v541
        %v612 = vunpack.c.l.b16 %v542
        %v613 = vunpack.c.l.b16 %v543
        %v614 = vunpack.c.l.b16 %v544
        %v615 = vunpack.c.l.b16 %v545
        %v616 = vunpack.c.l.b16 %v546
        %v617 = vunpack.c.l.b16 %v547
        %v618 = vunpack.c.l.b16 %v548
        %v619 = vunpack.c.l.b16 %v549
        %v620 = vunpack.c.l.b16 %v550
        %v621 = vunpack.c.l.b16 %v551
        %v622 = vunpack.c.l.b16 %v552
        %v623 = vunpack.c.l.b16 %v553
        %v624 = vunpack.c.l.b16 %v554
        %v625 = vunpack.c.l.b16 %v555
        %v626 = vunpack.c.l.b16 %v556
        %v627 = vunpack.c.l.b16 %v557
        %v628 = vunpack.c.l.b16 %v558
        %v629 = vpack.c.b16 %v598, %v597
        %v630 = vpack.c.b16 %v600, %v599
        %v631 = vpack.c.b16 %v602, %v601
        %v632 = vpack.c.b16 %v604, %v603
        %v633 = vpack.c.b16 %v606, %v605
        %v634 = vpack.c.b16 %v608, %v607
        %v635 = vpack.c.b16 %v610, %v609
        %v636 = vpack.c.b16 %v612, %v611
        %v637 = vpack.c.b16 %v614, %v613
        %v638 = vpack.c.b16 %v616, %v615
        %v639 = vpack.c.b16 %v618, %v617
        %v640 = vpack.c.b16 %v620, %v619
        %v641 = vpack.c.b16 %v622, %v621
        %v642 = vpack.c.b16 %v624, %v623
        %v643 = vpack.c.b16 %v626, %v625
        %v644 = vpack.c.b16 %v628, %v627
        %v677 = vunpack.c.l.b16 %v342
        %v678 = vunpack.c.l.b16 %v343
        %v679 = vunpack.c.l.b16 %v344
        %v680 = vunpack.c.l.b16 %v345
        %v681 = vunpack.c.l.b16 %v346
        %v682 = vunpack.c.l.b16 %v347
        %v683 = vunpack.c.l.b16 %v348
        %v684 = vunpack.c.l.b16 %v349
        %v685 = vunpack.c.l.b16 %v350
        %v686 = vunpack.c.l.b16 %v351
        %v687 = vunpack.c.l.b16 %v352
        %v688 = vunpack.c.l.b16 %v353
        %v689 = vunpack.c.l.b16 %v354
        %v690 = vunpack.c.l.b16 %v355
        %v691 = vunpack.c.l.b16 %v356
        %v692 = vunpack.c.l.b16 %v357
        %v693 = vpack.c.b16 %v678, %v677
        %v694 = vpack.c.b16 %v680, %v679
        %v695 = vpack.c.b16 %v682, %v681
        %v696 = vpack.c.b16 %v684, %v683
        %v697 = vpack.c.b16 %v686, %v685
        %v698 = vpack.c.b16 %v688, %v687
        %v699 = vpack.c.b16 %v690, %v689
        %v700 = vpack.c.b16 %v692, %v691
        %709 = vmatprep.subr.bf16.mxu0 0
        %710 = vmatpush1.bf16.msra.mxu0 %v693
        %711 = vmatprep.subr.bf16.mxu0 0
        %712 = vmatpush1.bf16.msra.mxu0 %v694
        %713 = vmatprep.subr.bf16.mxu0 0
        %714 = vmatpush1.bf16.msra.mxu0 %v695
        %715 = vmatprep.subr.bf16.mxu0 0
        %716 = vmatpush1.bf16.msra.mxu0 %v696
        %717 = vmatprep.subr.bf16.mxu0 0
        %718 = vmatpush1.bf16.msra.mxu0 %v697
        %719 = vmatprep.subr.bf16.mxu0 0
        %720 = vmatpush1.bf16.msra.mxu0 %v698
        %721 = vmatprep.subr.bf16.mxu0 0
        %722 = vmatpush1.bf16.msra.mxu0 %v699
        %723 = vmatprep.subr.bf16.mxu0 0
        %724 = vmatpush1.bf16.msra.mxu0 %v700
        %725 = vmatprep.subr.bf16.mxu0 0
        %726 = vmatpush1.bf16.msra.mxu0 0
        %727 = vmatprep.subr.bf16.mxu0 0
        %728 = vmatpush1.bf16.msra.mxu0 0
        %729 = vmatprep.subr.bf16.mxu0 0
        %730 = vmatpush1.bf16.msra.mxu0 0
        %731 = vmatprep.subr.bf16.mxu0 0
        %732 = vmatpush1.bf16.msra.mxu0 0
        %733 = vmatprep.subr.bf16.mxu0 0
        %734 = vmatpush1.bf16.msra.mxu0 0
        %735 = vmatprep.subr.bf16.mxu0 0
        %736 = vmatpush1.bf16.msra.mxu0 0
        %737 = vmatprep.subr.bf16.mxu0 0
        %738 = vmatpush1.bf16.msra.mxu0 0
        %739 = vmatprep.subr.bf16.mxu0 0
        %740 = vmatpush1.bf16.msra.mxu0 0
        %741 = vmatprep.mubr.bf16.mxu0 0
        %742 = vmatmul.mubr.bf16.gmra.mrb[0].mxu0 %v629
        %v743 = vpop.f32.mrb[0].mxu0
        %v744 = vadd.f32 %v563, %v743
        %v745 = vpop.f32.mrb[0].mxu0
        %v746 = vpop.f32.mrb[0].mxu0
        %v747 = vadd.f32 %v563, %v746
        %v748 = vpop.f32.mrb[0].mxu0
        %749 = vmatprep.mubr.bf16.mxu0 0
        %750 = vmatmul.mubr.bf16.gmra.mrb[0].mxu0 %v630
        %v751 = vpop.f32.mrb[0].mxu0
        %v752 = vadd.f32 %v563, %v751
        %v753 = vpop.f32.mrb[0].mxu0
        %v754 = vpop.f32.mrb[0].mxu0
        %v755 = vadd.f32 %v563, %v754
        %v756 = vpop.f32.mrb[0].mxu0
        %757 = vmatprep.mubr.bf16.mxu0 0
        %758 = vmatmul.mubr.bf16.gmra.mrb[0].mxu0 %v631
        %v759 = vpop.f32.mrb[0].mxu0
        %v760 = vadd.f32 %v563, %v759
        %v761 = vpop.f32.mrb[0].mxu0
        %v762 = vpop.f32.mrb[0].mxu0
        %v763 = vadd.f32 %v563, %v762
        %v764 = vpop.f32.mrb[0].mxu0
        %765 = vmatprep.mubr.bf16.mxu0 0
        %766 = vmatmul.mubr.bf16.gmra.mrb[0].mxu0 %v632
        %v767 = vpop.f32.mrb[0].mxu0
        %v768 = vadd.f32 %v563, %v767
        %v769 = vpop.f32.mrb[0].mxu0
        %v770 = vpop.f32.mrb[0].mxu0
        %v771 = vadd.f32 %v563, %v770
        %v772 = vpop.f32.mrb[0].mxu0
        %773 = vmatprep.mubr.bf16.mxu0 0
        %774 = vmatmul.mubr.bf16.gmra.mrb[0].mxu0 %v633
        %v775 = vpop.f32.mrb[0].mxu0
        %v776 = vadd.f32 %v563, %v775
        %v777 = vpop.f32.mrb[0].mxu0
        %v778 = vpop.f32.mrb[0].mxu0
        %v779 = vadd.f32 %v563, %v778
        %v780 = vpop.f32.mrb[0].mxu0
        %781 = vmatprep.mubr.bf16.mxu0 0
        %782 = vmatmul.mubr.bf16.gmra.mrb[0].mxu0 %v634
        %v783 = vpop.f32.mrb[0].mxu0
        %v784 = vadd.f32 %v563, %v783
        %v785 = vpop.f32.mrb[0].mxu0
        %v786 = vpop.f32.mrb[0].mxu0
        %v787 = vadd.f32 %v563, %v786
        %v788 = vpop.f32.mrb[0].mxu0
        %789 = vmatprep.mubr.bf16.mxu0 0
        %790 = vmatmul.mubr.bf16.gmra.mrb[0].mxu0 %v635
        %v791 = vpop.f32.mrb[0].mxu0
        %v792 = vadd.f32 %v563, %v791
        %v793 = vpop.f32.mrb[0].mxu0
        %v794 = vpop.f32.mrb[0].mxu0
        %v795 = vadd.f32 %v563, %v794
        %v796 = vpop.f32.mrb[0].mxu0
        %797 = vmatprep.mubr.bf16.mxu0 0
        %798 = vmatmul.mubr.bf16.gmra.mrb[0].mxu0 %v636
        %v799 = vpop.f32.mrb[0].mxu0
        %v800 = vadd.f32 %v563, %v799
        %v801 = vpop.f32.mrb[0].mxu0
        %v802 = vpop.f32.mrb[0].mxu0
        %v803 = vadd.f32 %v563, %v802
        %v804 = vpop.f32.mrb[0].mxu0
        %805 = vmatprep.mubr.bf16.mxu0 0
        %806 = vmatmul.mubr.bf16.gmra.mrb[0].mxu0 %v637
        %v807 = vpop.f32.mrb[0].mxu0
        %v808 = vadd.f32 %v563, %v807
        %v809 = vpop.f32.mrb[0].mxu0
        %v810 = vpop.f32.mrb[0].mxu0
        %v811 = vadd.f32 %v563, %v810
        %v812 = vpop.f32.mrb[0].mxu0
        %813 = vmatprep.mubr.bf16.mxu0 0
        %814 = vmatmul.mubr.bf16.gmra.mrb[0].mxu0 %v638
        %v815 = vpop.f32.mrb[0].mxu0
        %v816 = vadd.f32 %v563, %v815
        %v817 = vpop.f32.mrb[0].mxu0
        %v818 = vpop.f32.mrb[0].mxu0
        %v819 = vadd.f32 %v563, %v818
        %v820 = vpop.f32.mrb[0].mxu0
        %821 = vmatprep.mubr.bf16.mxu0 0
        %822 = vmatmul.mubr.bf16.gmra.mrb[0].mxu0 %v639
        %v823 = vpop.f32.mrb[0].mxu0
        %v824 = vadd.f32 %v563, %v823
        %v825 = vpop.f32.mrb[0].mxu0
        %v826 = vpop.f32.mrb[0].mxu0
        %v827 = vadd.f32 %v563, %v826
        %v828 = vpop.f32.mrb[0].mxu0
        %829 = vmatprep.mubr.bf16.mxu0 0
        %830 = vmatmul.mubr.bf16.gmra.mrb[0].mxu0 %v640
        %v831 = vpop.f32.mrb[0].mxu0
        %v832 = vadd.f32 %v563, %v831
        %v833 = vpop.f32.mrb[0].mxu0
        %v834 = vpop.f32.mrb[0].mxu0
        %v835 = vadd.f32 %v563, %v834
        %v836 = vpop.f32.mrb[0].mxu0
        %837 = vmatprep.mubr.bf16.mxu0 0
        %838 = vmatmul.mubr.bf16.gmra.mrb[0].mxu0 %v641
        %v839 = vpop.f32.mrb[0].mxu0
        %v840 = vadd.f32 %v563, %v839
        %v841 = vpop.f32.mrb[0].mxu0
        %v842 = vpop.f32.mrb[0].mxu0
        %v843 = vadd.f32 %v563, %v842
        %v844 = vpop.f32.mrb[0].mxu0
        %845 = vmatprep.mubr.bf16.mxu0 0
        %846 = vmatmul.mubr.bf16.gmra.mrb[0].mxu0 %v642
        %v847 = vpop.f32.mrb[0].mxu0
        %v848 = vadd.f32 %v563, %v847
        %v849 = vpop.f32.mrb[0].mxu0
        %v850 = vpop.f32.mrb[0].mxu0
        %v851 = vadd.f32 %v563, %v850
        %v852 = vpop.f32.mrb[0].mxu0
        %853 = vmatprep.mubr.bf16.mxu0 0
        %854 = vmatmul.mubr.bf16.gmra.mrb[0].mxu0 %v643
        %v855 = vpop.f32.mrb[0].mxu0
        %v856 = vadd.f32 %v563, %v855
        %v857 = vpop.f32.mrb[0].mxu0
        %v858 = vpop.f32.mrb[0].mxu0
        %v859 = vadd.f32 %v563, %v858
        %v860 = vpop.f32.mrb[0].mxu0
        %861 = vmatprep.mubr.bf16.mxu0 0
        %862 = vmatmul.mubr.bf16.gmra.mrb[0].mxu0 %v644
        %v863 = vpop.f32.mrb[0].mxu0
        %v864 = vadd.f32 %v563, %v863
        %v865 = vpop.f32.mrb[0].mxu0
        %v866 = vpop.f32.mrb[0].mxu0
        %v867 = vadd.f32 %v563, %v866
        %v868 = vpop.f32.mrb[0].mxu0
        %869 = vdwg.mxu0
        %v870 = vmax.f32 %v744, 0.0
        %v871 = vmax.f32 %v747, 0.0
        %v872 = vmax.f32 %v752, 0.0
        %v873 = vmax.f32 %v755, 0.0
        %v874 = vmax.f32 %v760, 0.0
        %v875 = vmax.f32 %v763, 0.0
        %v876 = vmax.f32 %v768, 0.0
        %v877 = vmax.f32 %v771, 0.0
        %v878 = vmax.f32 %v776, 0.0
        %v879 = vmax.f32 %v779, 0.0
        %v880 = vmax.f32 %v784, 0.0
        %v881 = vmax.f32 %v787, 0.0
        %v882 = vmax.f32 %v792, 0.0
        %v883 = vmax.f32 %v795, 0.0
        %v884 = vmax.f32 %v800, 0.0
        %v885 = vmax.f32 %v803, 0.0
        %v886 = vmax.f32 %v808, 0.0
        %v887 = vmax.f32 %v811, 0.0
        %v888 = vmax.f32 %v816, 0.0
        %v889 = vmax.f32 %v819, 0.0
        %v890 = vmax.f32 %v824, 0.0
        %v891 = vmax.f32 %v827, 0.0
        %v892 = vmax.f32 %v832, 0.0
        %v893 = vmax.f32 %v835, 0.0
        %v894 = vmax.f32 %v840, 0.0
        %v895 = vmax.f32 %v843, 0.0
        %v896 = vmax.f32 %v848, 0.0
        %v897 = vmax.f32 %v851, 0.0
        %v898 = vmax.f32 %v856, 0.0
        %v899 = vmax.f32 %v859, 0.0
        %v900 = vmax.f32 %v864, 0.0
        %v901 = vmax.f32 %v867, 0.0
        %v902 = vpack.c.bf16 %v871, %v870
        %v903 = vpack.c.bf16 %v873, %v872
        %v904 = vpack.c.bf16 %v875, %v874
        %v905 = vpack.c.bf16 %v877, %v876
        %v906 = vpack.c.bf16 %v879, %v878
        %v907 = vpack.c.bf16 %v881, %v880
        %v908 = vpack.c.bf16 %v883, %v882
        %v909 = vpack.c.bf16 %v885, %v884
        %v910 = vpack.c.bf16 %v887, %v886
        %v911 = vpack.c.bf16 %v889, %v888
        %v912 = vpack.c.bf16 %v891, %v890
        %v913 = vpack.c.bf16 %v893, %v892
        %v914 = vpack.c.bf16 %v895, %v894
        %v915 = vpack.c.bf16 %v897, %v896
        %v916 = vpack.c.bf16 %v899, %v898
        %v917 = vpack.c.bf16 %v901, %v900
        %s918 = sadd.s32 0, 1
        %s919 = smul.addr %s918, 8
        %s920 = scalar_lea.vmem [#allocation2], %s919
        %921 = vst [vmem:[%s920] sm:$0xff] %v902
        %922 = vst [vmem:[%s920 + $0x8] sm:$0xff] %v903
        %923 = vst [vmem:[%s920 + $0x10] sm:$0xff] %v904
        %924 = vst [vmem:[%s920 + $0x18] sm:$0xff] %v905
        %925 = vst [vmem:[%s920 + $0x20] sm:$0xff] %v906
        %926 = vst [vmem:[%s920 + $0x28] sm:$0xff] %v907
        %927 = vst [vmem:[%s920 + $0x30] sm:$0xff] %v908
        %928 = vst [vmem:[%s920 + $0x38] sm:$0xff] %v909
        %929 = vst [vmem:[%s920 + $0x40] sm:$0xff] %v910
        %930 = vst [vmem:[%s920 + $0x48] sm:$0xff] %v911
        %931 = vst [vmem:[%s920 + $0x50] sm:$0xff] %v912
        %932 = vst [vmem:[%s920 + $0x58] sm:$0xff] %v913
        %933 = vst [vmem:[%s920 + $0x60] sm:$0xff] %v914
        %934 = vst [vmem:[%s920 + $0x68] sm:$0xff] %v915
        %935 = vst [vmem:[%s920 + $0x70] sm:$0xff] %v916
        %936 = vst [vmem:[%s920 + $0x78] sm:$0xff] %v917
        %v937 = vld [vmem:[#allocation2] sm:$0xff]
        %v938 = vld [vmem:[#allocation2 + $0x8] sm:$0xff]
        %v939 = vld [vmem:[#allocation2 + $0x10] sm:$0xff]
        %v940 = vld [vmem:[#allocation2 + $0x18] sm:$0xff]
        %v941 = vld [vmem:[#allocation2 + $0x20] sm:$0xff]
        %v942 = vld [vmem:[#allocation2 + $0x28] sm:$0xff]
        %v943 = vld [vmem:[#allocation2 + $0x30] sm:$0xff]
        %v944 = vld [vmem:[#allocation2 + $0x38] sm:$0xff]
        %v945 = vld [vmem:[#allocation2 + $0x40] sm:$0xff]
        %v946 = vld [vmem:[#allocation2 + $0x48] sm:$0xff]
        %v947 = vld [vmem:[#allocation2 + $0x50] sm:$0xff]
        %v948 = vld [vmem:[#allocation2 + $0x58] sm:$0xff]
        %v949 = vld [vmem:[#allocation2 + $0x60] sm:$0xff]
        %v950 = vld [vmem:[#allocation2 + $0x68] sm:$0xff]
        %v951 = vld [vmem:[#allocation2 + $0x70] sm:$0xff]
        %v952 = vld [vmem:[#allocation2 + $0x78] sm:$0xff]
        %v954 = vshrl.u32 %v937, 16
        %v956 = vrot.slane %v954, 7
        %v957 = vshll.u32 %v937, 16
        %v959 = vor.u32 %v956, %v957
        %v961 = vshrl.u32 %v938, 16
        %v963 = vrot.slane %v961, 7
        %v964 = vshll.u32 %v938, 16
        %v966 = vor.u32 %v963, %v964
        %v968 = vshrl.u32 %v939, 16
        %v970 = vrot.slane %v968, 7
        %v971 = vshll.u32 %v939, 16
        %v973 = vor.u32 %v970, %v971
        %v975 = vshrl.u32 %v940, 16
        %v977 = vrot.slane %v975, 7
        %v978 = vshll.u32 %v940, 16
        %v980 = vor.u32 %v977, %v978
        %v982 = vshrl.u32 %v941, 16
        %v984 = vrot.slane %v982, 7
        %v985 = vshll.u32 %v941, 16
        %v987 = vor.u32 %v984, %v985
        %v989 = vshrl.u32 %v942, 16
        %v991 = vrot.slane %v989, 7
        %v992 = vshll.u32 %v942, 16
        %v994 = vor.u32 %v991, %v992
        %v996 = vshrl.u32 %v943, 16
        %v998 = vrot.slane %v996, 7
        %v999 = vshll.u32 %v943, 16
        %v1001 = vor.u32 %v998, %v999
        %v1003 = vshrl.u32 %v944, 16
        %v1005 = vrot.slane %v1003, 7
        %v1006 = vshll.u32 %v944, 16
        %v1008 = vor.u32 %v1005, %v1006
        %v1010 = vshrl.u32 %v945, 16
        %v1012 = vrot.slane %v1010, 7
        %v1013 = vshll.u32 %v945, 16
        %v1015 = vor.u32 %v1012, %v1013
        %v1017 = vshrl.u32 %v946, 16
        %v1019 = vrot.slane %v1017, 7
        %v1020 = vshll.u32 %v946, 16
        %v1022 = vor.u32 %v1019, %v1020
        %v1024 = vshrl.u32 %v947, 16
        %v1026 = vrot.slane %v1024, 7
        %v1027 = vshll.u32 %v947, 16
        %v1029 = vor.u32 %v1026, %v1027
        %v1031 = vshrl.u32 %v948, 16
        %v1033 = vrot.slane %v1031, 7
        %v1034 = vshll.u32 %v948, 16
        %v1036 = vor.u32 %v1033, %v1034
        %v1038 = vshrl.u32 %v949, 16
        %v1040 = vrot.slane %v1038, 7
        %v1041 = vshll.u32 %v949, 16
        %v1043 = vor.u32 %v1040, %v1041
        %v1045 = vshrl.u32 %v950, 16
        %v1047 = vrot.slane %v1045, 7
        %v1048 = vshll.u32 %v950, 16
        %v1050 = vor.u32 %v1047, %v1048
        %v1052 = vshrl.u32 %v951, 16
        %v1054 = vrot.slane %v1052, 7
        %v1055 = vshll.u32 %v951, 16
        %v1057 = vor.u32 %v1054, %v1055
        %v1059 = vshrl.u32 %v952, 16
        %v1061 = vrot.slane %v1059, 7
        %v1062 = vshll.u32 %v952, 16
        %v1064 = vor.u32 %v1061, %v1062
        %vm1081 = vcmask 1040384
        %vm1082 = vsmask.f32 256
        %vm1083 = vmand %vm1081, %vm1082
        %v1084 = vsel %vm1083, 0, %v959
        %v1085 = vsel %vm1083, 0, %v966
        %v1086 = vsel %vm1083, 0, %v973
        %v1087 = vsel %vm1083, 0, %v980
        %v1088 = vsel %vm1083, 0, %v987
        %v1089 = vsel %vm1083, 0, %v994
        %v1090 = vsel %vm1083, 0, %v1001
        %v1091 = vsel %vm1083, 0, %v1008
        %v1092 = vsel %vm1083, 0, %v1015
        %v1093 = vsel %vm1083, 0, %v1022
        %v1094 = vsel %vm1083, 0, %v1029
        %v1095 = vsel %vm1083, 0, %v1036
        %v1096 = vsel %vm1083, 0, %v1043
        %v1097 = vsel %vm1083, 0, %v1050
        %v1098 = vsel %vm1083, 0, %v1057
        %v1099 = vsel %vm1083, 0, %v1064
        %v1100 = vrot.slane %v957, 1
        %v1101 = vor.u32 %v954, %v1100
        %v1102 = vrot.slane %v964, 1
        %v1103 = vor.u32 %v961, %v1102
        %v1104 = vrot.slane %v971, 1
        %v1105 = vor.u32 %v968, %v1104
        %v1106 = vrot.slane %v978, 1
        %v1107 = vor.u32 %v975, %v1106
        %v1108 = vrot.slane %v985, 1
        %v1109 = vor.u32 %v982, %v1108
        %v1110 = vrot.slane %v992, 1
        %v1111 = vor.u32 %v989, %v1110
        %v1112 = vrot.slane %v999, 1
        %v1113 = vor.u32 %v996, %v1112
        %v1114 = vrot.slane %v1006, 1
        %v1115 = vor.u32 %v1003, %v1114
        %v1116 = vrot.slane %v1013, 1
        %v1117 = vor.u32 %v1010, %v1116
        %v1118 = vrot.slane %v1020, 1
        %v1119 = vor.u32 %v1017, %v1118
        %v1120 = vrot.slane %v1027, 1
        %v1121 = vor.u32 %v1024, %v1120
        %v1122 = vrot.slane %v1034, 1
        %v1123 = vor.u32 %v1031, %v1122
        %v1124 = vrot.slane %v1041, 1
        %v1125 = vor.u32 %v1038, %v1124
        %v1126 = vrot.slane %v1048, 1
        %v1127 = vor.u32 %v1045, %v1126
        %v1128 = vrot.slane %v1055, 1
        %v1129 = vor.u32 %v1052, %v1128
        %v1130 = vrot.slane %v1062, 1
        %v1131 = vor.u32 %v1059, %v1130
        %vm1148 = vcmask 1047552
        %vm1149 = vsmask.f32 7424
        %vm1150 = vmand %vm1148, %vm1149
        %v1151 = vsel %vm1150, %v1101, 0
        %v1152 = vsel %vm1150, %v1103, 0
        %v1153 = vsel %vm1150, %v1105, 0
        %v1154 = vsel %vm1150, %v1107, 0
        %v1155 = vsel %vm1150, %v1109, 0
        %v1156 = vsel %vm1150, %v1111, 0
        %v1157 = vsel %vm1150, %v1113, 0
        %v1158 = vsel %vm1150, %v1115, 0
        %v1159 = vsel %vm1150, %v1117, 0
        %v1160 = vsel %vm1150, %v1119, 0
        %v1161 = vsel %vm1150, %v1121, 0
        %v1162 = vsel %vm1150, %v1123, 0
        %v1163 = vsel %vm1150, %v1125, 0
        %v1164 = vsel %vm1150, %v1127, 0
        %v1165 = vsel %vm1150, %v1129, 0
        %v1166 = vsel %vm1150, %v1131, 0
        %v1167 = vld [vmem:[%s920] sm:$0xff]
        %v1168 = vld [vmem:[%s920 + $0x8] sm:$0xff]
        %v1169 = vld [vmem:[%s920 + $0x10] sm:$0xff]
        %v1170 = vld [vmem:[%s920 + $0x18] sm:$0xff]
        %v1171 = vld [vmem:[%s920 + $0x20] sm:$0xff]
        %v1172 = vld [vmem:[%s920 + $0x28] sm:$0xff]
        %v1173 = vld [vmem:[%s920 + $0x30] sm:$0xff]
        %v1174 = vld [vmem:[%s920 + $0x38] sm:$0xff]
        %v1175 = vld [vmem:[%s920 + $0x40] sm:$0xff]
        %v1176 = vld [vmem:[%s920 + $0x48] sm:$0xff]
        %v1177 = vld [vmem:[%s920 + $0x50] sm:$0xff]
        %v1178 = vld [vmem:[%s920 + $0x58] sm:$0xff]
        %v1179 = vld [vmem:[%s920 + $0x60] sm:$0xff]
        %v1180 = vld [vmem:[%s920 + $0x68] sm:$0xff]
        %v1181 = vld [vmem:[%s920 + $0x70] sm:$0xff]
        %v1182 = vld [vmem:[%s920 + $0x78] sm:$0xff]
        %v1184 = vshrl.u32 %v1167, 16
        %v1186 = vrot.slane %v1184, 7
        %v1187 = vshll.u32 %v1167, 16
        %v1189 = vor.u32 %v1186, %v1187
        %v1191 = vshrl.u32 %v1168, 16
        %v1193 = vrot.slane %v1191, 7
        %v1194 = vshll.u32 %v1168, 16
        %v1196 = vor.u32 %v1193, %v1194
        %v1198 = vshrl.u32 %v1169, 16
        %v1200 = vrot.slane %v1198, 7
        %v1201 = vshll.u32 %v1169, 16
        %v1203 = vor.u32 %v1200, %v1201
        %v1205 = vshrl.u32 %v1170, 16
        %v1207 = vrot.slane %v1205, 7
        %v1208 = vshll.u32 %v1170, 16
        %v1210 = vor.u32 %v1207, %v1208
        %v1212 = vshrl.u32 %v1171, 16
        %v1214 = vrot.slane %v1212, 7
        %v1215 = vshll.u32 %v1171, 16
        %v1217 = vor.u32 %v1214, %v1215
        %v1219 = vshrl.u32 %v1172, 16
        %v1221 = vrot.slane %v1219, 7
        %v1222 = vshll.u32 %v1172, 16
        %v1224 = vor.u32 %v1221, %v1222
        %v1226 = vshrl.u32 %v1173, 16
        %v1228 = vrot.slane %v1226, 7
        %v1229 = vshll.u32 %v1173, 16
        %v1231 = vor.u32 %v1228, %v1229
        %v1233 = vshrl.u32 %v1174, 16
        %v1235 = vrot.slane %v1233, 7
        %v1236 = vshll.u32 %v1174, 16
        %v1238 = vor.u32 %v1235, %v1236
        %v1240 = vshrl.u32 %v1175, 16
        %v1242 = vrot.slane %v1240, 7
        %v1243 = vshll.u32 %v1175, 16
        %v1245 = vor.u32 %v1242, %v1243
        %v1247 = vshrl.u32 %v1176, 16
        %v1249 = vrot.slane %v1247, 7
        %v1250 = vshll.u32 %v1176, 16
        %v1252 = vor.u32 %v1249, %v1250
        %v1254 = vshrl.u32 %v1177, 16
        %v1256 = vrot.slane %v1254, 7
        %v1257 = vshll.u32 %v1177, 16
        %v1259 = vor.u32 %v1256, %v1257
        %v1261 = vshrl.u32 %v1178, 16
        %v1263 = vrot.slane %v1261, 7
        %v1264 = vshll.u32 %v1178, 16
        %v1266 = vor.u32 %v1263, %v1264
        %v1268 = vshrl.u32 %v1179, 16
        %v1270 = vrot.slane %v1268, 7
        %v1271 = vshll.u32 %v1179, 16
        %v1273 = vor.u32 %v1270, %v1271
        %v1275 = vshrl.u32 %v1180, 16
        %v1277 = vrot.slane %v1275, 7
        %v1278 = vshll.u32 %v1180, 16
        %v1280 = vor.u32 %v1277, %v1278
        %v1282 = vshrl.u32 %v1181, 16
        %v1284 = vrot.slane %v1282, 7
        %v1285 = vshll.u32 %v1181, 16
        %v1287 = vor.u32 %v1284, %v1285
        %v1289 = vshrl.u32 %v1182, 16
        %v1291 = vrot.slane %v1289, 7
        %v1292 = vshll.u32 %v1182, 16
        %v1294 = vor.u32 %v1291, %v1292
        %v1311 = vsel %vm1083, 0, %v1189
        %v1312 = vsel %vm1083, 0, %v1196
        %v1313 = vsel %vm1083, 0, %v1203
        %v1314 = vsel %vm1083, 0, %v1210
        %v1315 = vsel %vm1083, 0, %v1217
        %v1316 = vsel %vm1083, 0, %v1224
        %v1317 = vsel %vm1083, 0, %v1231
        %v1318 = vsel %vm1083, 0, %v1238
        %v1319 = vsel %vm1083, 0, %v1245
        %v1320 = vsel %vm1083, 0, %v1252
        %v1321 = vsel %vm1083, 0, %v1259
        %v1322 = vsel %vm1083, 0, %v1266
        %v1323 = vsel %vm1083, 0, %v1273
        %v1324 = vsel %vm1083, 0, %v1280
        %v1325 = vsel %vm1083, 0, %v1287
        %v1326 = vsel %vm1083, 0, %v1294
        %v1327 = vrot.slane %v1187, 1
        %v1328 = vor.u32 %v1184, %v1327
        %v1329 = vrot.slane %v1194, 1
        %v1330 = vor.u32 %v1191, %v1329
        %v1331 = vrot.slane %v1201, 1
        %v1332 = vor.u32 %v1198, %v1331
        %v1333 = vrot.slane %v1208, 1
        %v1334 = vor.u32 %v1205, %v1333
        %v1335 = vrot.slane %v1215, 1
        %v1336 = vor.u32 %v1212, %v1335
        %v1337 = vrot.slane %v1222, 1
        %v1338 = vor.u32 %v1219, %v1337
        %v1339 = vrot.slane %v1229, 1
        %v1340 = vor.u32 %v1226, %v1339
        %v1341 = vrot.slane %v1236, 1
        %v1342 = vor.u32 %v1233, %v1341
        %v1343 = vrot.slane %v1243, 1
        %v1344 = vor.u32 %v1240, %v1343
        %v1345 = vrot.slane %v1250, 1
        %v1346 = vor.u32 %v1247, %v1345
        %v1347 = vrot.slane %v1257, 1
        %v1348 = vor.u32 %v1254, %v1347
        %v1349 = vrot.slane %v1264, 1
        %v1350 = vor.u32 %v1261, %v1349
        %v1351 = vrot.slane %v1271, 1
        %v1352 = vor.u32 %v1268, %v1351
        %v1353 = vrot.slane %v1278, 1
        %v1354 = vor.u32 %v1275, %v1353
        %v1355 = vrot.slane %v1285, 1
        %v1356 = vor.u32 %v1282, %v1355
        %v1357 = vrot.slane %v1292, 1
        %v1358 = vor.u32 %v1289, %v1357
        %v1375 = vsel %vm1150, %v1328, 0
        %v1376 = vsel %vm1150, %v1330, 0
        %v1377 = vsel %vm1150, %v1332, 0
        %v1378 = vsel %vm1150, %v1334, 0
        %v1379 = vsel %vm1150, %v1336, 0
        %v1380 = vsel %vm1150, %v1338, 0
        %v1381 = vsel %vm1150, %v1340, 0
        %v1382 = vsel %vm1150, %v1342, 0
        %v1383 = vsel %vm1150, %v1344, 0
        %v1384 = vsel %vm1150, %v1346, 0
        %v1385 = vsel %vm1150, %v1348, 0
        %v1386 = vsel %vm1150, %v1350, 0
        %v1387 = vsel %vm1150, %v1352, 0
        %v1388 = vsel %vm1150, %v1354, 0
        %v1389 = vsel %vm1150, %v1356, 0
        %v1390 = vsel %vm1150, %v1358, 0
        %s1391 = sadd.s32 0, 2
        %s1392 = smul.addr %s1391, 8
        %s1393 = scalar_lea.vmem [#allocation2], %s1392
        %v1394 = vld [vmem:[%s1393] sm:$0xff]
        %v1395 = vld [vmem:[%s1393 + $0x8] sm:$0xff]
        %v1396 = vld [vmem:[%s1393 + $0x10] sm:$0xff]
        %v1397 = vld [vmem:[%s1393 + $0x18] sm:$0xff]
        %v1398 = vld [vmem:[%s1393 + $0x20] sm:$0xff]
        %v1399 = vld [vmem:[%s1393 + $0x28] sm:$0xff]
        %v1400 = vld [vmem:[%s1393 + $0x30] sm:$0xff]
        %v1401 = vld [vmem:[%s1393 + $0x38] sm:$0xff]
        %v1402 = vld [vmem:[%s1393 + $0x40] sm:$0xff]
        %v1403 = vld [vmem:[%s1393 + $0x48] sm:$0xff]
        %v1404 = vld [vmem:[%s1393 + $0x50] sm:$0xff]
        %v1405 = vld [vmem:[%s1393 + $0x58] sm:$0xff]
        %v1406 = vld [vmem:[%s1393 + $0x60] sm:$0xff]
        %v1407 = vld [vmem:[%s1393 + $0x68] sm:$0xff]
        %v1408 = vld [vmem:[%s1393 + $0x70] sm:$0xff]
        %v1409 = vld [vmem:[%s1393 + $0x78] sm:$0xff]
        %v1411 = vshrl.u32 %v1394, 16
        %v1413 = vrot.slane %v1411, 7
        %v1414 = vshll.u32 %v1394, 16
        %v1416 = vor.u32 %v1413, %v1414
        %v1418 = vshrl.u32 %v1395, 16
        %v1420 = vrot.slane %v1418, 7
        %v1421 = vshll.u32 %v1395, 16
        %v1423 = vor.u32 %v1420, %v1421
        %v1425 = vshrl.u32 %v1396, 16
        %v1427 = vrot.slane %v1425, 7
        %v1428 = vshll.u32 %v1396, 16
        %v1430 = vor.u32 %v1427, %v1428
        %v1432 = vshrl.u32 %v1397, 16
        %v1434 = vrot.slane %v1432, 7
        %v1435 = vshll.u32 %v1397, 16
        %v1437 = vor.u32 %v1434, %v1435
        %v1439 = vshrl.u32 %v1398, 16
        %v1441 = vrot.slane %v1439, 7
        %v1442 = vshll.u32 %v1398, 16
        %v1444 = vor.u32 %v1441, %v1442
        %v1446 = vshrl.u32 %v1399, 16
        %v1448 = vrot.slane %v1446, 7
        %v1449 = vshll.u32 %v1399, 16
        %v1451 = vor.u32 %v1448, %v1449
        %v1453 = vshrl.u32 %v1400, 16
        %v1455 = vrot.slane %v1453, 7
        %v1456 = vshll.u32 %v1400, 16
        %v1458 = vor.u32 %v1455, %v1456
        %v1460 = vshrl.u32 %v1401, 16
        %v1462 = vrot.slane %v1460, 7
        %v1463 = vshll.u32 %v1401, 16
        %v1465 = vor.u32 %v1462, %v1463
        %v1467 = vshrl.u32 %v1402, 16
        %v1469 = vrot.slane %v1467, 7
        %v1470 = vshll.u32 %v1402, 16
        %v1472 = vor.u32 %v1469, %v1470
        %v1474 = vshrl.u32 %v1403, 16
        %v1476 = vrot.slane %v1474, 7
        %v1477 = vshll.u32 %v1403, 16
        %v1479 = vor.u32 %v1476, %v1477
        %v1481 = vshrl.u32 %v1404, 16
        %v1483 = vrot.slane %v1481, 7
        %v1484 = vshll.u32 %v1404, 16
        %v1486 = vor.u32 %v1483, %v1484
        %v1488 = vshrl.u32 %v1405, 16
        %v1490 = vrot.slane %v1488, 7
        %v1491 = vshll.u32 %v1405, 16
        %v1493 = vor.u32 %v1490, %v1491
        %v1495 = vshrl.u32 %v1406, 16
        %v1497 = vrot.slane %v1495, 7
        %v1498 = vshll.u32 %v1406, 16
        %v1500 = vor.u32 %v1497, %v1498
        %v1502 = vshrl.u32 %v1407, 16
        %v1504 = vrot.slane %v1502, 7
        %v1505 = vshll.u32 %v1407, 16
        %v1507 = vor.u32 %v1504, %v1505
        %v1509 = vshrl.u32 %v1408, 16
        %v1511 = vrot.slane %v1509, 7
        %v1512 = vshll.u32 %v1408, 16
        %v1514 = vor.u32 %v1511, %v1512
        %v1516 = vshrl.u32 %v1409, 16
        %v1518 = vrot.slane %v1516, 7
        %v1519 = vshll.u32 %v1409, 16
        %v1521 = vor.u32 %v1518, %v1519
        %v1538 = vsel %vm1083, 0, %v1416
        %v1539 = vsel %vm1083, 0, %v1423
        %v1540 = vsel %vm1083, 0, %v1430
        %v1541 = vsel %vm1083, 0, %v1437
        %v1542 = vsel %vm1083, 0, %v1444
        %v1543 = vsel %vm1083, 0, %v1451
        %v1544 = vsel %vm1083, 0, %v1458
        %v1545 = vsel %vm1083, 0, %v1465
        %v1546 = vsel %vm1083, 0, %v1472
        %v1547 = vsel %vm1083, 0, %v1479
        %v1548 = vsel %vm1083, 0, %v1486
        %v1549 = vsel %vm1083, 0, %v1493
        %v1550 = vsel %vm1083, 0, %v1500
        %v1551 = vsel %vm1083, 0, %v1507
        %v1552 = vsel %vm1083, 0, %v1514
        %v1553 = vsel %vm1083, 0, %v1521
        %v1554 = vrot.slane %v1414, 1
        %v1555 = vor.u32 %v1411, %v1554
        %v1556 = vrot.slane %v1421, 1
        %v1557 = vor.u32 %v1418, %v1556
        %v1558 = vrot.slane %v1428, 1
        %v1559 = vor.u32 %v1425, %v1558
        %v1560 = vrot.slane %v1435, 1
        %v1561 = vor.u32 %v1432, %v1560
        %v1562 = vrot.slane %v1442, 1
        %v1563 = vor.u32 %v1439, %v1562
        %v1564 = vrot.slane %v1449, 1
        %v1565 = vor.u32 %v1446, %v1564
        %v1566 = vrot.slane %v1456, 1
        %v1567 = vor.u32 %v1453, %v1566
        %v1568 = vrot.slane %v1463, 1
        %v1569 = vor.u32 %v1460, %v1568
        %v1570 = vrot.slane %v1470, 1
        %v1571 = vor.u32 %v1467, %v1570
        %v1572 = vrot.slane %v1477, 1
        %v1573 = vor.u32 %v1474, %v1572
        %v1574 = vrot.slane %v1484, 1
        %v1575 = vor.u32 %v1481, %v1574
        %v1576 = vrot.slane %v1491, 1
        %v1577 = vor.u32 %v1488, %v1576
        %v1578 = vrot.slane %v1498, 1
        %v1579 = vor.u32 %v1495, %v1578
        %v1580 = vrot.slane %v1505, 1
        %v1581 = vor.u32 %v1502, %v1580
        %v1582 = vrot.slane %v1512, 1
        %v1583 = vor.u32 %v1509, %v1582
        %v1584 = vrot.slane %v1519, 1
        %v1585 = vor.u32 %v1516, %v1584
        %v1602 = vsel %vm1150, %v1555, 0
        %v1603 = vsel %vm1150, %v1557, 0
        %v1604 = vsel %vm1150, %v1559, 0
        %v1605 = vsel %vm1150, %v1561, 0
        %v1606 = vsel %vm1150, %v1563, 0
        %v1607 = vsel %vm1150, %v1565, 0
        %v1608 = vsel %vm1150, %v1567, 0
        %v1609 = vsel %vm1150, %v1569, 0
        %v1610 = vsel %vm1150, %v1571, 0
        %v1611 = vsel %vm1150, %v1573, 0
        %v1612 = vsel %vm1150, %v1575, 0
        %v1613 = vsel %vm1150, %v1577, 0
        %v1614 = vsel %vm1150, %v1579, 0
        %v1615 = vsel %vm1150, %v1581, 0
        %v1616 = vsel %vm1150, %v1583, 0
        %v1617 = vsel %vm1150, %v1585, 0
        %v1619 = vlaneseq
        %v1620 = vshrl.u32 %v1619, 7
        %v1621 = vsub.s32 0, %v1620
        %v1622 = vrot.slane %v519, %v1621
        %v1768 = vunpack.c.l.b16 %v358
        %v1769 = vunpack.c.l.b16 %v359
        %v1770 = vunpack.c.l.b16 %v360
        %v1771 = vunpack.c.l.b16 %v361
        %v1772 = vunpack.c.l.b16 %v362
        %v1773 = vunpack.c.l.b16 %v363
        %v1774 = vunpack.c.l.b16 %v364
        %v1775 = vunpack.c.l.b16 %v365
        %v1776 = vunpack.c.l.b16 %v366
        %v1777 = vunpack.c.l.b16 %v367
        %v1778 = vunpack.c.l.b16 %v368
        %v1779 = vunpack.c.l.b16 %v369
        %v1780 = vunpack.c.l.b16 %v370
        %v1781 = vunpack.c.l.b16 %v371
        %v1782 = vunpack.c.l.b16 %v372
        %v1783 = vunpack.c.l.b16 %v373
        %v1784 = vunpack.c.l.b16 %v374
        %v1785 = vunpack.c.l.b16 %v375
        %v1786 = vunpack.c.l.b16 %v376
        %v1787 = vunpack.c.l.b16 %v377
        %v1788 = vunpack.c.l.b16 %v378
        %v1789 = vunpack.c.l.b16 %v379
        %v1790 = vunpack.c.l.b16 %v380
        %v1791 = vunpack.c.l.b16 %v381
        %v1792 = vunpack.c.l.b16 %v382
        %v1793 = vunpack.c.l.b16 %v383
        %v1794 = vunpack.c.l.b16 %v384
        %v1795 = vunpack.c.l.b16 %v385
        %v1796 = vunpack.c.l.b16 %v386
        %v1797 = vunpack.c.l.b16 %v387
        %v1798 = vunpack.c.l.b16 %v388
        %v1799 = vunpack.c.l.b16 %v389
        %v1800 = vunpack.c.l.b16 %v390
        %v1801 = vunpack.c.l.b16 %v391
        %v1802 = vunpack.c.l.b16 %v392
        %v1803 = vunpack.c.l.b16 %v393
        %v1804 = vunpack.c.l.b16 %v394
        %v1805 = vunpack.c.l.b16 %v395
        %v1806 = vunpack.c.l.b16 %v396
        %v1807 = vunpack.c.l.b16 %v397
        %v1808 = vunpack.c.l.b16 %v398
        %v1809 = vunpack.c.l.b16 %v399
        %v1810 = vunpack.c.l.b16 %v400
        %v1811 = vunpack.c.l.b16 %v401
        %v1812 = vunpack.c.l.b16 %v402
        %v1813 = vunpack.c.l.b16 %v403
        %v1814 = vunpack.c.l.b16 %v404
        %v1815 = vunpack.c.l.b16 %v405
        %v1816 = vunpack.c.l.b16 %v406
        %v1817 = vunpack.c.l.b16 %v407
        %v1818 = vunpack.c.l.b16 %v408
        %v1819 = vunpack.c.l.b16 %v409
        %v1820 = vunpack.c.l.b16 %v410
        %v1821 = vunpack.c.l.b16 %v411
        %v1822 = vunpack.c.l.b16 %v412
        %v1823 = vunpack.c.l.b16 %v413
        %v1824 = vunpack.c.l.b16 %v414
        %v1825 = vunpack.c.l.b16 %v415
        %v1826 = vunpack.c.l.b16 %v416
        %v1827 = vunpack.c.l.b16 %v417
        %v1828 = vunpack.c.l.b16 %v418
        %v1829 = vunpack.c.l.b16 %v419
        %v1830 = vunpack.c.l.b16 %v420
        %v1831 = vunpack.c.l.b16 %v421
        %v1832 = vunpack.c.l.b16 %v422
        %v1833 = vunpack.c.l.b16 %v423
        %v1834 = vunpack.c.l.b16 %v424
        %v1835 = vunpack.c.l.b16 %v425
        %v1836 = vunpack.c.l.b16 %v426
        %v1837 = vunpack.c.l.b16 %v427
        %v1838 = vunpack.c.l.b16 %v428
        %v1839 = vunpack.c.l.b16 %v429
        %v1840 = vunpack.c.l.b16 %v430
        %v1841 = vunpack.c.l.b16 %v431
        %v1842 = vunpack.c.l.b16 %v432
        %v1843 = vunpack.c.l.b16 %v433
        %v1844 = vunpack.c.l.b16 %v434
        %v1845 = vunpack.c.l.b16 %v435
        %v1846 = vunpack.c.l.b16 %v436
        %v1847 = vunpack.c.l.b16 %v437
        %v1848 = vunpack.c.l.b16 %v438
        %v1849 = vunpack.c.l.b16 %v439
        %v1850 = vunpack.c.l.b16 %v440
        %v1851 = vunpack.c.l.b16 %v441
        %v1852 = vunpack.c.l.b16 %v442
        %v1853 = vunpack.c.l.b16 %v443
        %v1854 = vunpack.c.l.b16 %v444
        %v1855 = vunpack.c.l.b16 %v445
        %v1856 = vunpack.c.l.b16 %v446
        %v1857 = vunpack.c.l.b16 %v447
        %v1858 = vunpack.c.l.b16 %v448
        %v1859 = vunpack.c.l.b16 %v449
        %v1860 = vunpack.c.l.b16 %v450
        %v1861 = vunpack.c.l.b16 %v451
        %v1862 = vunpack.c.l.b16 %v452
        %v1863 = vunpack.c.l.b16 %v453
        %v1864 = vunpack.c.l.b16 %v454
        %v1865 = vunpack.c.l.b16 %v455
        %v1866 = vunpack.c.l.b16 %v456
        %v1867 = vunpack.c.l.b16 %v457
        %v1868 = vunpack.c.l.b16 %v458
        %v1869 = vunpack.c.l.b16 %v459
        %v1870 = vunpack.c.l.b16 %v460
        %v1871 = vunpack.c.l.b16 %v461
        %v1872 = vunpack.c.l.b16 %v462
        %v1873 = vunpack.c.l.b16 %v463
        %v1874 = vunpack.c.l.b16 %v464
        %v1875 = vunpack.c.l.b16 %v465
        %v1876 = vunpack.c.l.b16 %v466
        %v1877 = vunpack.c.l.b16 %v467
        %v1878 = vunpack.c.l.b16 %v468
        %v1879 = vunpack.c.l.b16 %v469
        %v1880 = vunpack.c.l.b16 %v470
        %v1881 = vunpack.c.l.b16 %v471
        %v1882 = vunpack.c.l.b16 %v472
        %v1883 = vunpack.c.l.b16 %v473
        %v1884 = vunpack.c.l.b16 %v474
        %v1885 = vunpack.c.l.b16 %v475
        %v1886 = vunpack.c.l.b16 %v476
        %v1887 = vunpack.c.l.b16 %v477
        %v1888 = vunpack.c.l.b16 %v478
        %v1889 = vunpack.c.l.b16 %v479
        %v1890 = vunpack.c.l.b16 %v480
        %v1891 = vunpack.c.l.b16 %v481
        %v1892 = vunpack.c.l.b16 %v482
        %v1893 = vunpack.c.l.b16 %v483
        %v1894 = vunpack.c.l.b16 %v484
        %v1895 = vunpack.c.l.b16 %v485
        %v1896 = vunpack.c.l.b16 %v486
        %v1897 = vunpack.c.l.b16 %v487
        %v1898 = vunpack.c.l.b16 %v488
        %v1899 = vunpack.c.l.b16 %v489
        %v1900 = vunpack.c.l.b16 %v490
        %v1901 = vunpack.c.l.b16 %v491
        %v1902 = vunpack.c.l.b16 %v492
        %v1903 = vunpack.c.l.b16 %v493
        %v1904 = vunpack.c.l.b16 %v494
        %v1905 = vunpack.c.l.b16 %v495
        %v1906 = vunpack.c.l.b16 %v496
        %v1907 = vunpack.c.l.b16 %v497
        %v1908 = vunpack.c.l.b16 %v498
        %v1909 = vunpack.c.l.b16 %v499
        %v1910 = vunpack.c.l.b16 %v500
        %v1911 = vunpack.c.l.b16 %v501
        %v1912 = vpack.c.b16 %v1769, %v1768
        %v1913 = vpack.c.b16 %v1771, %v1770
        %v1914 = vpack.c.b16 %v1773, %v1772
        %v1915 = vpack.c.b16 %v1775, %v1774
        %v1916 = vpack.c.b16 %v1777, %v1776
        %v1917 = vpack.c.b16 %v1779, %v1778
        %v1918 = vpack.c.b16 %v1781, %v1780
        %v1919 = vpack.c.b16 %v1783, %v1782
        %v1920 = vpack.c.b16 %v1785, %v1784
        %v1921 = vpack.c.b16 %v1787, %v1786
        %v1922 = vpack.c.b16 %v1789, %v1788
        %v1923 = vpack.c.b16 %v1791, %v1790
        %v1924 = vpack.c.b16 %v1793, %v1792
        %v1925 = vpack.c.b16 %v1795, %v1794
        %v1926 = vpack.c.b16 %v1797, %v1796
        %v1927 = vpack.c.b16 %v1799, %v1798
        %v1928 = vpack.c.b16 %v1801, %v1800
        %v1929 = vpack.c.b16 %v1803, %v1802
        %v1930 = vpack.c.b16 %v1805, %v1804
        %v1931 = vpack.c.b16 %v1807, %v1806
        %v1932 = vpack.c.b16 %v1809, %v1808
        %v1933 = vpack.c.b16 %v1811, %v1810
        %v1934 = vpack.c.b16 %v1813, %v1812
        %v1935 = vpack.c.b16 %v1815, %v1814
        %v1936 = vpack.c.b16 %v1817, %v1816
        %v1937 = vpack.c.b16 %v1819, %v1818
        %v1938 = vpack.c.b16 %v1821, %v1820
        %v1939 = vpack.c.b16 %v1823, %v1822
        %v1940 = vpack.c.b16 %v1825, %v1824
        %v1941 = vpack.c.b16 %v1827, %v1826
        %v1942 = vpack.c.b16 %v1829, %v1828
        %v1943 = vpack.c.b16 %v1831, %v1830
        %v1944 = vpack.c.b16 %v1833, %v1832
        %v1945 = vpack.c.b16 %v1835, %v1834
        %v1946 = vpack.c.b16 %v1837, %v1836
        %v1947 = vpack.c.b16 %v1839, %v1838
        %v1948 = vpack.c.b16 %v1841, %v1840
        %v1949 = vpack.c.b16 %v1843, %v1842
        %v1950 = vpack.c.b16 %v1845, %v1844
        %v1951 = vpack.c.b16 %v1847, %v1846
        %v1952 = vpack.c.b16 %v1849, %v1848
        %v1953 = vpack.c.b16 %v1851, %v1850
        %v1954 = vpack.c.b16 %v1853, %v1852
        %v1955 = vpack.c.b16 %v1855, %v1854
        %v1956 = vpack.c.b16 %v1857, %v1856
        %v1957 = vpack.c.b16 %v1859, %v1858
        %v1958 = vpack.c.b16 %v1861, %v1860
        %v1959 = vpack.c.b16 %v1863, %v1862
        %v1960 = vpack.c.b16 %v1865, %v1864
        %v1961 = vpack.c.b16 %v1867, %v1866
        %v1962 = vpack.c.b16 %v1869, %v1868
        %v1963 = vpack.c.b16 %v1871, %v1870
        %v1964 = vpack.c.b16 %v1873, %v1872
        %v1965 = vpack.c.b16 %v1875, %v1874
        %v1966 = vpack.c.b16 %v1877, %v1876
        %v1967 = vpack.c.b16 %v1879, %v1878
        %v1968 = vpack.c.b16 %v1881, %v1880
        %v1969 = vpack.c.b16 %v1883, %v1882
        %v1970 = vpack.c.b16 %v1885, %v1884
        %v1971 = vpack.c.b16 %v1887, %v1886
        %v1972 = vpack.c.b16 %v1889, %v1888
        %v1973 = vpack.c.b16 %v1891, %v1890
        %v1974 = vpack.c.b16 %v1893, %v1892
        %v1975 = vpack.c.b16 %v1895, %v1894
        %v1976 = vpack.c.b16 %v1897, %v1896
        %v1977 = vpack.c.b16 %v1899, %v1898
        %v1978 = vpack.c.b16 %v1901, %v1900
        %v1979 = vpack.c.b16 %v1903, %v1902
        %v1980 = vpack.c.b16 %v1905, %v1904
        %v1981 = vpack.c.b16 %v1907, %v1906
        %v1982 = vpack.c.b16 %v1909, %v1908
        %v1983 = vpack.c.b16 %v1911, %v1910
        %2056 = vmatprep.subr.bf16.mxu0 0
        %2057 = vmatpush1.bf16.msra.mxu0 %v1912
        %2058 = vmatprep.subr.bf16.mxu0 0
        %2059 = vmatpush1.bf16.msra.mxu0 %v1913
        %2060 = vmatprep.subr.bf16.mxu0 0
        %2061 = vmatpush1.bf16.msra.mxu0 %v1914
        %2062 = vmatprep.subr.bf16.mxu0 0
        %2063 = vmatpush1.bf16.msra.mxu0 %v1915
        %2064 = vmatprep.subr.bf16.mxu0 0
        %2065 = vmatpush1.bf16.msra.mxu0 %v1916
        %2066 = vmatprep.subr.bf16.mxu0 0
        %2067 = vmatpush1.bf16.msra.mxu0 %v1917
        %2068 = vmatprep.subr.bf16.mxu0 0
        %2069 = vmatpush1.bf16.msra.mxu0 %v1918
        %2070 = vmatprep.subr.bf16.mxu0 0
        %2071 = vmatpush1.bf16.msra.mxu0 %v1919
        %2072 = vmatprep.subr.bf16.mxu0 0
        %2073 = vmatpush1.bf16.msra.mxu0 %v1920
        %2074 = vmatprep.subr.bf16.mxu0 0
        %2075 = vmatpush1.bf16.msra.mxu0 %v1921
        %2076 = vmatprep.subr.bf16.mxu0 0
        %2077 = vmatpush1.bf16.msra.mxu0 %v1922
        %2078 = vmatprep.subr.bf16.mxu0 0
        %2079 = vmatpush1.bf16.msra.mxu0 %v1923
        %2080 = vmatprep.subr.bf16.mxu0 0
        %2081 = vmatpush1.bf16.msra.mxu0 %v1924
        %2082 = vmatprep.subr.bf16.mxu0 0
        %2083 = vmatpush1.bf16.msra.mxu0 %v1925
        %2084 = vmatprep.subr.bf16.mxu0 0
        %2085 = vmatpush1.bf16.msra.mxu0 %v1926
        %2086 = vmatprep.subr.bf16.mxu0 0
        %2087 = vmatpush1.bf16.msra.mxu0 %v1927
        %2088 = vmatprep.mubr.bf16.mxu0 %v937
        %2089 = vmatmul.mubr.bf16.gmra.mrb[0].mxu0 %v1084
        %v2090 = vpop.f32.mrb[0].mxu0
        %v2091 = vadd.f32 %v1622, %v2090
        %v2092 = vpop.f32.mrb[0].mxu0
        %v2093 = vpop.f32.mrb[0].mxu0
        %v2094 = vadd.f32 %v1622, %v2093
        %v2095 = vpop.f32.mrb[0].mxu0
        %2096 = vmatprep.mubr.bf16.mxu0 %v938
        %2097 = vmatmul.mubr.bf16.gmra.mrb[0].mxu0 %v1085
        %v2098 = vpop.f32.mrb[0].mxu0
        %v2099 = vadd.f32 %v1622, %v2098
        %v2100 = vpop.f32.mrb[0].mxu0
        %v2101 = vpop.f32.mrb[0].mxu0
        %v2102 = vadd.f32 %v1622, %v2101
        %v2103 = vpop.f32.mrb[0].mxu0
        %2104 = vmatprep.mubr.bf16.mxu0 %v939
        %2105 = vmatmul.mubr.bf16.gmra.mrb[0].mxu0 %v1086
        %v2106 = vpop.f32.mrb[0].mxu0
        %v2107 = vadd.f32 %v1622, %v2106
        %v2108 = vpop.f32.mrb[0].mxu0
        %v2109 = vpop.f32.mrb[0].mxu0
        %v2110 = vadd.f32 %v1622, %v2109
        %v2111 = vpop.f32.mrb[0].mxu0
        %2112 = vmatprep.mubr.bf16.mxu0 %v940
        %2113 = vmatmul.mubr.bf16.gmra.mrb[0].mxu0 %v1087
        %v2114 = vpop.f32.mrb[0].mxu0
        %v2115 = vadd.f32 %v1622, %v2114
        %v2116 = vpop.f32.mrb[0].mxu0
        %v2117 = vpop.f32.mrb[0].mxu0
        %v2118 = vadd.f32 %v1622, %v2117
        %v2119 = vpop.f32.mrb[0].mxu0
        %2120 = vmatprep.mubr.bf16.mxu0 %v941
        %2121 = vmatmul.mubr.bf16.gmra.mrb[0].mxu0 %v1088
        %v2122 = vpop.f32.mrb[0].mxu0
        %v2123 = vadd.f32 %v1622, %v2122
        %v2124 = vpop.f32.mrb[0].mxu0
        %v2125 = vpop.f32.mrb[0].mxu0
        %v2126 = vadd.f32 %v1622, %v2125
        %v2127 = vpop.f32.mrb[0].mxu0
        %2128 = vmatprep.mubr.bf16.mxu0 %v942
        %2129 = vmatmul.mubr.bf16.gmra.mrb[0].mxu0 %v1089
        %v2130 = vpop.f32.mrb[0].mxu0
        %v2131 = vadd.f32 %v1622, %v2130
        %v2132 = vpop.f32.mrb[0].mxu0
        %v2133 = vpop.f32.mrb[0].mxu0
        %v2134 = vadd.f32 %v1622, %v2133
        %v2135 = vpop.f32.mrb[0].mxu0
        %2136 = vmatprep.mubr.bf16.mxu0 %v943
        %2137 = vmatmul.mubr.bf16.gmra.mrb[0].mxu0 %v1090
        %v2138 = vpop.f32.mrb[0].mxu0
        %v2139 = vadd.f32 %v1622, %v2138
        %v2140 = vpop.f32.mrb[0].mxu0
        %v2141 = vpop.f32.mrb[0].mxu0
        %v2142 = vadd.f32 %v1622, %v2141
        %v2143 = vpop.f32.mrb[0].mxu0
        %2144 = vmatprep.mubr.bf16.mxu0 %v944
        %2145 = vmatmul.mubr.bf16.gmra.mrb[0].mxu0 %v1091
        %v2146 = vpop.f32.mrb[0].mxu0
        %v2147 = vadd.f32 %v1622, %v2146
        %v2148 = vpop.f32.mrb[0].mxu0
        %v2149 = vpop.f32.mrb[0].mxu0
        %v2150 = vadd.f32 %v1622, %v2149
        %v2151 = vpop.f32.mrb[0].mxu0
        %2152 = vmatprep.mubr.bf16.mxu0 %v945
        %2153 = vmatmul.mubr.bf16.gmra.mrb[0].mxu0 %v1092
        %v2154 = vpop.f32.mrb[0].mxu0
        %v2155 = vadd.f32 %v1622, %v2154
        %v2156 = vpop.f32.mrb[0].mxu0
        %v2157 = vpop.f32.mrb[0].mxu0
        %v2158 = vadd.f32 %v1622, %v2157
        %v2159 = vpop.f32.mrb[0].mxu0
        %2160 = vmatprep.mubr.bf16.mxu0 %v946
        %2161 = vmatmul.mubr.bf16.gmra.mrb[0].mxu0 %v1093
        %v2162 = vpop.f32.mrb[0].mxu0
        %v2163 = vadd.f32 %v1622, %v2162
        %v2164 = vpop.f32.mrb[0].mxu0
        %v2165 = vpop.f32.mrb[0].mxu0
        %v2166 = vadd.f32 %v1622, %v2165
        %v2167 = vpop.f32.mrb[0].mxu0
        %2168 = vmatprep.mubr.bf16.mxu0 %v947
        %2169 = vmatmul.mubr.bf16.gmra.mrb[0].mxu0 %v1094
        %v2170 = vpop.f32.mrb[0].mxu0
        %v2171 = vadd.f32 %v1622, %v2170
        %v2172 = vpop.f32.mrb[0].mxu0
        %v2173 = vpop.f32.mrb[0].mxu0
        %v2174 = vadd.f32 %v1622, %v2173
        %v2175 = vpop.f32.mrb[0].mxu0
        %2176 = vmatprep.mubr.bf16.mxu0 %v948
        %2177 = vmatmul.mubr.bf16.gmra.mrb[0].mxu0 %v1095
        %v2178 = vpop.f32.mrb[0].mxu0
        %v2179 = vadd.f32 %v1622, %v2178
        %v2180 = vpop.f32.mrb[0].mxu0
        %v2181 = vpop.f32.mrb[0].mxu0
        %v2182 = vadd.f32 %v1622, %v2181
        %v2183 = vpop.f32.mrb[0].mxu0
        %2184 = vmatprep.mubr.bf16.mxu0 %v949
        %2185 = vmatmul.mubr.bf16.gmra.mrb[0].mxu0 %v1096
        %v2186 = vpop.f32.mrb[0].mxu0
        %v2187 = vadd.f32 %v1622, %v2186
        %v2188 = vpop.f32.mrb[0].mxu0
        %v2189 = vpop.f32.mrb[0].mxu0
        %v2190 = vadd.f32 %v1622, %v2189
        %v2191 = vpop.f32.mrb[0].mxu0
        %2192 = vmatprep.mubr.bf16.mxu0 %v950
        %2193 = vmatmul.mubr.bf16.gmra.mrb[0].mxu0 %v1097
        %v2194 = vpop.f32.mrb[0].mxu0
        %v2195 = vadd.f32 %v1622, %v2194
        %v2196 = vpop.f32.mrb[0].mxu0
        %v2197 = vpop.f32.mrb[0].mxu0
        %v2198 = vadd.f32 %v1622, %v2197
        %v2199 = vpop.f32.mrb[0].mxu0
        %2200 = vmatprep.mubr.bf16.mxu0 %v951
        %2201 = vmatmul.mubr.bf16.gmra.mrb[0].mxu0 %v1098
        %v2202 = vpop.f32.mrb[0].mxu0
        %v2203 = vadd.f32 %v1622, %v2202
        %v2204 = vpop.f32.mrb[0].mxu0
        %v2205 = vpop.f32.mrb[0].mxu0
        %v2206 = vadd.f32 %v1622, %v2205
        %v2207 = vpop.f32.mrb[0].mxu0
        %2208 = vmatprep.mubr.bf16.mxu0 %v952
        %2209 = vmatmul.mubr.bf16.gmra.mrb[0].mxu0 %v1099
        %v2210 = vpop.f32.mrb[0].mxu0
        %v2211 = vadd.f32 %v1622, %v2210
        %v2212 = vpop.f32.mrb[0].mxu0
        %v2213 = vpop.f32.mrb[0].mxu0
        %v2214 = vadd.f32 %v1622, %v2213
        %v2215 = vpop.f32.mrb[0].mxu0
        %2216 = vdwg.mxu0
        %2217 = vmatprep.subr.bf16.mxu0 0
        %2218 = vmatpush1.bf16.msra.mxu0 %v1928
        %2219 = vmatprep.subr.bf16.mxu0 0
        %2220 = vmatpush1.bf16.msra.mxu0 %v1929
        %2221 = vmatprep.subr.bf16.mxu0 0
        %2222 = vmatpush1.bf16.msra.mxu0 %v1930
        %2223 = vmatprep.subr.bf16.mxu0 0
        %2224 = vmatpush1.bf16.msra.mxu0 %v1931
        %2225 = vmatprep.subr.bf16.mxu0 0
        %2226 = vmatpush1.bf16.msra.mxu0 %v1932
        %2227 = vmatprep.subr.bf16.mxu0 0
        %2228 = vmatpush1.bf16.msra.mxu0 %v1933
        %2229 = vmatprep.subr.bf16.mxu0 0
        %2230 = vmatpush1.bf16.msra.mxu0 %v1934
        %2231 = vmatprep.subr.bf16.mxu0 0
        %2232 = vmatpush1.bf16.msra.mxu0 %v1935
        %2233 = vmatprep.subr.bf16.mxu0 0
        %2234 = vmatpush1.bf16.msra.mxu0 %v1936
        %2235 = vmatprep.subr.bf16.mxu0 0
        %2236 = vmatpush1.bf16.msra.mxu0 %v1937
        %2237 = vmatprep.subr.bf16.mxu0 0
        %2238 = vmatpush1.bf16.msra.mxu0 %v1938
        %2239 = vmatprep.subr.bf16.mxu0 0
        %2240 = vmatpush1.bf16.msra.mxu0 %v1939
        %2241 = vmatprep.subr.bf16.mxu0 0
        %2242 = vmatpush1.bf16.msra.mxu0 %v1940
        %2243 = vmatprep.subr.bf16.mxu0 0
        %2244 = vmatpush1.bf16.msra.mxu0 %v1941
        %2245 = vmatprep.subr.bf16.mxu0 0
        %2246 = vmatpush1.bf16.msra.mxu0 %v1942
        %2247 = vmatprep.subr.bf16.mxu0 0
        %2248 = vmatpush1.bf16.msra.mxu0 %v1943
        %2249 = vmatprep.mubr.bf16.mxu0 %v1311
        %2250 = vmatmul.mubr.bf16.gmra.mrb[0].mxu0 %v1151
        %v2251 = vpop.f32.mrb[0].mxu0
        %v2252 = vadd.f32 %v2091, %v2251
        %v2253 = vpop.f32.mrb[0].mxu0
        %v2254 = vpop.f32.mrb[0].mxu0
        %v2255 = vadd.f32 %v2094, %v2254
        %v2256 = vpop.f32.mrb[0].mxu0
        %2257 = vmatprep.mubr.bf16.mxu0 %v1312
        %2258 = vmatmul.mubr.bf16.gmra.mrb[0].mxu0 %v1152
        %v2259 = vpop.f32.mrb[0].mxu0
        %v2260 = vadd.f32 %v2099, %v2259
        %v2261 = vpop.f32.mrb[0].mxu0
        %v2262 = vpop.f32.mrb[0].mxu0
        %v2263 = vadd.f32 %v2102, %v2262
        %v2264 = vpop.f32.mrb[0].mxu0
        %2265 = vmatprep.mubr.bf16.mxu0 %v1313
        %2266 = vmatmul.mubr.bf16.gmra.mrb[0].mxu0 %v1153
        %v2267 = vpop.f32.mrb[0].mxu0
        %v2268 = vadd.f32 %v2107, %v2267
        %v2269 = vpop.f32.mrb[0].mxu0
        %v2270 = vpop.f32.mrb[0].mxu0
        %v2271 = vadd.f32 %v2110, %v2270
        %v2272 = vpop.f32.mrb[0].mxu0
        %2273 = vmatprep.mubr.bf16.mxu0 %v1314
        %2274 = vmatmul.mubr.bf16.gmra.mrb[0].mxu0 %v1154
        %v2275 = vpop.f32.mrb[0].mxu0
        %v2276 = vadd.f32 %v2115, %v2275
        %v2277 = vpop.f32.mrb[0].mxu0
        %v2278 = vpop.f32.mrb[0].mxu0
        %v2279 = vadd.f32 %v2118, %v2278
        %v2280 = vpop.f32.mrb[0].mxu0
        %2281 = vmatprep.mubr.bf16.mxu0 %v1315
        %2282 = vmatmul.mubr.bf16.gmra.mrb[0].mxu0 %v1155
        %v2283 = vpop.f32.mrb[0].mxu0
        %v2284 = vadd.f32 %v2123, %v2283
        %v2285 = vpop.f32.mrb[0].mxu0
        %v2286 = vpop.f32.mrb[0].mxu0
        %v2287 = vadd.f32 %v2126, %v2286
        %v2288 = vpop.f32.mrb[0].mxu0
        %2289 = vmatprep.mubr.bf16.mxu0 %v1316
        %2290 = vmatmul.mubr.bf16.gmra.mrb[0].mxu0 %v1156
        %v2291 = vpop.f32.mrb[0].mxu0
        %v2292 = vadd.f32 %v2131, %v2291
        %v2293 = vpop.f32.mrb[0].mxu0
        %v2294 = vpop.f32.mrb[0].mxu0
        %v2295 = vadd.f32 %v2134, %v2294
        %v2296 = vpop.f32.mrb[0].mxu0
        %2297 = vmatprep.mubr.bf16.mxu0 %v1317
        %2298 = vmatmul.mubr.bf16.gmra.mrb[0].mxu0 %v1157
        %v2299 = vpop.f32.mrb[0].mxu0
        %v2300 = vadd.f32 %v2139, %v2299
        %v2301 = vpop.f32.mrb[0].mxu0
        %v2302 = vpop.f32.mrb[0].mxu0
        %v2303 = vadd.f32 %v2142, %v2302
        %v2304 = vpop.f32.mrb[0].mxu0
        %2305 = vmatprep.mubr.bf16.mxu0 %v1318
        %2306 = vmatmul.mubr.bf16.gmra.mrb[0].mxu0 %v1158
        %v2307 = vpop.f32.mrb[0].mxu0
        %v2308 = vadd.f32 %v2147, %v2307
        %v2309 = vpop.f32.mrb[0].mxu0
        %v2310 = vpop.f32.mrb[0].mxu0
        %v2311 = vadd.f32 %v2150, %v2310
        %v2312 = vpop.f32.mrb[0].mxu0
        %2313 = vmatprep.mubr.bf16.mxu0 %v1319
        %2314 = vmatmul.mubr.bf16.gmra.mrb[0].mxu0 %v1159
        %v2315 = vpop.f32.mrb[0].mxu0
        %v2316 = vadd.f32 %v2155, %v2315
        %v2317 = vpop.f32.mrb[0].mxu0
        %v2318 = vpop.f32.mrb[0].mxu0
        %v2319 = vadd.f32 %v2158, %v2318
        %v2320 = vpop.f32.mrb[0].mxu0
        %2321 = vmatprep.mubr.bf16.mxu0 %v1320
        %2322 = vmatmul.mubr.bf16.gmra.mrb[0].mxu0 %v1160
        %v2323 = vpop.f32.mrb[0].mxu0
        %v2324 = vadd.f32 %v2163, %v2323
        %v2325 = vpop.f32.mrb[0].mxu0
        %v2326 = vpop.f32.mrb[0].mxu0
        %v2327 = vadd.f32 %v2166, %v2326
        %v2328 = vpop.f32.mrb[0].mxu0
        %2329 = vmatprep.mubr.bf16.mxu0 %v1321
        %2330 = vmatmul.mubr.bf16.gmra.mrb[0].mxu0 %v1161
        %v2331 = vpop.f32.mrb[0].mxu0
        %v2332 = vadd.f32 %v2171, %v2331
        %v2333 = vpop.f32.mrb[0].mxu0
        %v2334 = vpop.f32.mrb[0].mxu0
        %v2335 = vadd.f32 %v2174, %v2334
        %v2336 = vpop.f32.mrb[0].mxu0
        %2337 = vmatprep.mubr.bf16.mxu0 %v1322
        %2338 = vmatmul.mubr.bf16.gmra.mrb[0].mxu0 %v1162
        %v2339 = vpop.f32.mrb[0].mxu0
        %v2340 = vadd.f32 %v2179, %v2339
        %v2341 = vpop.f32.mrb[0].mxu0
        %v2342 = vpop.f32.mrb[0].mxu0
        %v2343 = vadd.f32 %v2182, %v2342
        %v2344 = vpop.f32.mrb[0].mxu0
        %2345 = vmatprep.mubr.bf16.mxu0 %v1323
        %2346 = vmatmul.mubr.bf16.gmra.mrb[0].mxu0 %v1163
        %v2347 = vpop.f32.mrb[0].mxu0
        %v2348 = vadd.f32 %v2187, %v2347
        %v2349 = vpop.f32.mrb[0].mxu0
        %v2350 = vpop.f32.mrb[0].mxu0
        %v2351 = vadd.f32 %v2190, %v2350
        %v2352 = vpop.f32.mrb[0].mxu0
        %2353 = vmatprep.mubr.bf16.mxu0 %v1324
        %2354 = vmatmul.mubr.bf16.gmra.mrb[0].mxu0 %v1164
        %v2355 = vpop.f32.mrb[0].mxu0
        %v2356 = vadd.f32 %v2195, %v2355
        %v2357 = vpop.f32.mrb[0].mxu0
        %v2358 = vpop.f32.mrb[0].mxu0
        %v2359 = vadd.f32 %v2198, %v2358
        %v2360 = vpop.f32.mrb[0].mxu0
        %2361 = vmatprep.mubr.bf16.mxu0 %v1325
        %2362 = vmatmul.mubr.bf16.gmra.mrb[0].mxu0 %v1165
        %v2363 = vpop.f32.mrb[0].mxu0
        %v2364 = vadd.f32 %v2203, %v2363
        %v2365 = vpop.f32.mrb[0].mxu0
        %v2366 = vpop.f32.mrb[0].mxu0
        %v2367 = vadd.f32 %v2206, %v2366
        %v2368 = vpop.f32.mrb[0].mxu0
        %2369 = vmatprep.mubr.bf16.mxu0 %v1326
        %2370 = vmatmul.mubr.bf16.gmra.mrb[0].mxu0 %v1166
        %v2371 = vpop.f32.mrb[0].mxu0
        %v2372 = vadd.f32 %v2211, %v2371
        %v2373 = vpop.f32.mrb[0].mxu0
        %v2374 = vpop.f32.mrb[0].mxu0
        %v2375 = vadd.f32 %v2214, %v2374
        %v2376 = vpop.f32.mrb[0].mxu0
        %2377 = vdwg.mxu0
        %2378 = vmatprep.subr.bf16.mxu0 0
        %2379 = vmatpush1.bf16.msra.mxu0 %v1944
        %2380 = vmatprep.subr.bf16.mxu0 0
        %2381 = vmatpush1.bf16.msra.mxu0 %v1945
        %2382 = vmatprep.subr.bf16.mxu0 0
        %2383 = vmatpush1.bf16.msra.mxu0 %v1946
        %2384 = vmatprep.subr.bf16.mxu0 0
        %2385 = vmatpush1.bf16.msra.mxu0 %v1947
        %2386 = vmatprep.subr.bf16.mxu0 0
        %2387 = vmatpush1.bf16.msra.mxu0 %v1948
        %2388 = vmatprep.subr.bf16.mxu0 0
        %2389 = vmatpush1.bf16.msra.mxu0 %v1949
        %2390 = vmatprep.subr.bf16.mxu0 0
        %2391 = vmatpush1.bf16.msra.mxu0 %v1950
        %2392 = vmatprep.subr.bf16.mxu0 0
        %2393 = vmatpush1.bf16.msra.mxu0 %v1951
        %2394 = vmatprep.subr.bf16.mxu0 0
        %2395 = vmatpush1.bf16.msra.mxu0 %v1952
        %2396 = vmatprep.subr.bf16.mxu0 0
        %2397 = vmatpush1.bf16.msra.mxu0 %v1953
        %2398 = vmatprep.subr.bf16.mxu0 0
        %2399 = vmatpush1.bf16.msra.mxu0 %v1954
        %2400 = vmatprep.subr.bf16.mxu0 0
        %2401 = vmatpush1.bf16.msra.mxu0 %v1955
        %2402 = vmatprep.subr.bf16.mxu0 0
        %2403 = vmatpush1.bf16.msra.mxu0 %v1956
        %2404 = vmatprep.subr.bf16.mxu0 0
        %2405 = vmatpush1.bf16.msra.mxu0 %v1957
        %2406 = vmatprep.subr.bf16.mxu0 0
        %2407 = vmatpush1.bf16.msra.mxu0 %v1958
        %2408 = vmatprep.subr.bf16.mxu0 0
        %2409 = vmatpush1.bf16.msra.mxu0 %v1959
        %2410 = vmatprep.mubr.bf16.mxu0 %v1375
        %2411 = vmatmul.mubr.bf16.gmra.mrb[0].mxu0 %v1167
        %v2412 = vpop.f32.mrb[0].mxu0
        %v2413 = vadd.f32 %v2252, %v2412
        %v2414 = vpop.f32.mrb[0].mxu0
        %v2415 = vpop.f32.mrb[0].mxu0
        %v2416 = vadd.f32 %v2255, %v2415
        %v2417 = vpop.f32.mrb[0].mxu0
        %2418 = vmatprep.mubr.bf16.mxu0 %v1376
        %2419 = vmatmul.mubr.bf16.gmra.mrb[0].mxu0 %v1168
        %v2420 = vpop.f32.mrb[0].mxu0
        %v2421 = vadd.f32 %v2260, %v2420
        %v2422 = vpop.f32.mrb[0].mxu0
        %v2423 = vpop.f32.mrb[0].mxu0
        %v2424 = vadd.f32 %v2263, %v2423
        %v2425 = vpop.f32.mrb[0].mxu0
        %2426 = vmatprep.mubr.bf16.mxu0 %v1377
        %2427 = vmatmul.mubr.bf16.gmra.mrb[0].mxu0 %v1169
        %v2428 = vpop.f32.mrb[0].mxu0
        %v2429 = vadd.f32 %v2268, %v2428
        %v2430 = vpop.f32.mrb[0].mxu0
        %v2431 = vpop.f32.mrb[0].mxu0
        %v2432 = vadd.f32 %v2271, %v2431
        %v2433 = vpop.f32.mrb[0].mxu0
        %2434 = vmatprep.mubr.bf16.mxu0 %v1378
        %2435 = vmatmul.mubr.bf16.gmra.mrb[0].mxu0 %v1170
        %v2436 = vpop.f32.mrb[0].mxu0
        %v2437 = vadd.f32 %v2276, %v2436
        %v2438 = vpop.f32.mrb[0].mxu0
        %v2439 = vpop.f32.mrb[0].mxu0
        %v2440 = vadd.f32 %v2279, %v2439
        %v2441 = vpop.f32.mrb[0].mxu0
        %2442 = vmatprep.mubr.bf16.mxu0 %v1379
        %2443 = vmatmul.mubr.bf16.gmra.mrb[0].mxu0 %v1171
        %v2444 = vpop.f32.mrb[0].mxu0
        %v2445 = vadd.f32 %v2284, %v2444
        %v2446 = vpop.f32.mrb[0].mxu0
        %v2447 = vpop.f32.mrb[0].mxu0
        %v2448 = vadd.f32 %v2287, %v2447
        %v2449 = vpop.f32.mrb[0].mxu0
        %2450 = vmatprep.mubr.bf16.mxu0 %v1380
        %2451 = vmatmul.mubr.bf16.gmra.mrb[0].mxu0 %v1172
        %v2452 = vpop.f32.mrb[0].mxu0
        %v2453 = vadd.f32 %v2292, %v2452
        %v2454 = vpop.f32.mrb[0].mxu0
        %v2455 = vpop.f32.mrb[0].mxu0
        %v2456 = vadd.f32 %v2295, %v2455
        %v2457 = vpop.f32.mrb[0].mxu0
        %2458 = vmatprep.mubr.bf16.mxu0 %v1381
        %2459 = vmatmul.mubr.bf16.gmra.mrb[0].mxu0 %v1173
        %v2460 = vpop.f32.mrb[0].mxu0
        %v2461 = vadd.f32 %v2300, %v2460
        %v2462 = vpop.f32.mrb[0].mxu0
        %v2463 = vpop.f32.mrb[0].mxu0
        %v2464 = vadd.f32 %v2303, %v2463
        %v2465 = vpop.f32.mrb[0].mxu0
        %2466 = vmatprep.mubr.bf16.mxu0 %v1382
        %2467 = vmatmul.mubr.bf16.gmra.mrb[0].mxu0 %v1174
        %v2468 = vpop.f32.mrb[0].mxu0
        %v2469 = vadd.f32 %v2308, %v2468
        %v2470 = vpop.f32.mrb[0].mxu0
        %v2471 = vpop.f32.mrb[0].mxu0
        %v2472 = vadd.f32 %v2311, %v2471
        %v2473 = vpop.f32.mrb[0].mxu0
        %2474 = vmatprep.mubr.bf16.mxu0 %v1383
        %2475 = vmatmul.mubr.bf16.gmra.mrb[0].mxu0 %v1175
        %v2476 = vpop.f32.mrb[0].mxu0
        %v2477 = vadd.f32 %v2316, %v2476
        %v2478 = vpop.f32.mrb[0].mxu0
        %v2479 = vpop.f32.mrb[0].mxu0
        %v2480 = vadd.f32 %v2319, %v2479
        %v2481 = vpop.f32.mrb[0].mxu0
        %2482 = vmatprep.mubr.bf16.mxu0 %v1384
        %2483 = vmatmul.mubr.bf16.gmra.mrb[0].mxu0 %v1176
        %v2484 = vpop.f32.mrb[0].mxu0
        %v2485 = vadd.f32 %v2324, %v2484
        %v2486 = vpop.f32.mrb[0].mxu0
        %v2487 = vpop.f32.mrb[0].mxu0
        %v2488 = vadd.f32 %v2327, %v2487
        %v2489 = vpop.f32.mrb[0].mxu0
        %2490 = vmatprep.mubr.bf16.mxu0 %v1385
        %2491 = vmatmul.mubr.bf16.gmra.mrb[0].mxu0 %v1177
        %v2492 = vpop.f32.mrb[0].mxu0
        %v2493 = vadd.f32 %v2332, %v2492
        %v2494 = vpop.f32.mrb[0].mxu0
        %v2495 = vpop.f32.mrb[0].mxu0
        %v2496 = vadd.f32 %v2335, %v2495
        %v2497 = vpop.f32.mrb[0].mxu0
        %2498 = vmatprep.mubr.bf16.mxu0 %v1386
        %2499 = vmatmul.mubr.bf16.gmra.mrb[0].mxu0 %v1178
        %v2500 = vpop.f32.mrb[0].mxu0
        %v2501 = vadd.f32 %v2340, %v2500
        %v2502 = vpop.f32.mrb[0].mxu0
        %v2503 = vpop.f32.mrb[0].mxu0
        %v2504 = vadd.f32 %v2343, %v2503
        %v2505 = vpop.f32.mrb[0].mxu0
        %2506 = vmatprep.mubr.bf16.mxu0 %v1387
        %2507 = vmatmul.mubr.bf16.gmra.mrb[0].mxu0 %v1179
        %v2508 = vpop.f32.mrb[0].mxu0
        %v2509 = vadd.f32 %v2348, %v2508
        %v2510 = vpop.f32.mrb[0].mxu0
        %v2511 = vpop.f32.mrb[0].mxu0
        %v2512 = vadd.f32 %v2351, %v2511
        %v2513 = vpop.f32.mrb[0].mxu0
        %2514 = vmatprep.mubr.bf16.mxu0 %v1388
        %2515 = vmatmul.mubr.bf16.gmra.mrb[0].mxu0 %v1180
        %v2516 = vpop.f32.mrb[0].mxu0
        %v2517 = vadd.f32 %v2356, %v2516
        %v2518 = vpop.f32.mrb[0].mxu0
        %v2519 = vpop.f32.mrb[0].mxu0
        %v2520 = vadd.f32 %v2359, %v2519
        %v2521 = vpop.f32.mrb[0].mxu0
        %2522 = vmatprep.mubr.bf16.mxu0 %v1389
        %2523 = vmatmul.mubr.bf16.gmra.mrb[0].mxu0 %v1181
        %v2524 = vpop.f32.mrb[0].mxu0
        %v2525 = vadd.f32 %v2364, %v2524
        %v2526 = vpop.f32.mrb[0].mxu0
        %v2527 = vpop.f32.mrb[0].mxu0
        %v2528 = vadd.f32 %v2367, %v2527
        %v2529 = vpop.f32.mrb[0].mxu0
        %2530 = vmatprep.mubr.bf16.mxu0 %v1390
        %2531 = vmatmul.mubr.bf16.gmra.mrb[0].mxu0 %v1182
        %v2532 = vpop.f32.mrb[0].mxu0
        %v2533 = vadd.f32 %v2372, %v2532
        %v2534 = vpop.f32.mrb[0].mxu0
        %v2535 = vpop.f32.mrb[0].mxu0
        %v2536 = vadd.f32 %v2375, %v2535
        %v2537 = vpop.f32.mrb[0].mxu0
        %2538 = vdwg.mxu0
        %2539 = vmatprep.subr.bf16.mxu0 0
        %2540 = vmatpush1.bf16.msra.mxu0 %v1960
        %2541 = vmatprep.subr.bf16.mxu0 0
        %2542 = vmatpush1.bf16.msra.mxu0 %v1961
        %2543 = vmatprep.subr.bf16.mxu0 0
        %2544 = vmatpush1.bf16.msra.mxu0 %v1962
        %2545 = vmatprep.subr.bf16.mxu0 0
        %2546 = vmatpush1.bf16.msra.mxu0 %v1963
        %2547 = vmatprep.subr.bf16.mxu0 0
        %2548 = vmatpush1.bf16.msra.mxu0 %v1964
        %2549 = vmatprep.subr.bf16.mxu0 0
        %2550 = vmatpush1.bf16.msra.mxu0 %v1965
        %2551 = vmatprep.subr.bf16.mxu0 0
        %2552 = vmatpush1.bf16.msra.mxu0 %v1966
        %2553 = vmatprep.subr.bf16.mxu0 0
        %2554 = vmatpush1.bf16.msra.mxu0 %v1967
        %2555 = vmatprep.subr.bf16.mxu0 0
        %2556 = vmatpush1.bf16.msra.mxu0 %v1968
        %2557 = vmatprep.subr.bf16.mxu0 0
        %2558 = vmatpush1.bf16.msra.mxu0 %v1969
        %2559 = vmatprep.subr.bf16.mxu0 0
        %2560 = vmatpush1.bf16.msra.mxu0 %v1970
        %2561 = vmatprep.subr.bf16.mxu0 0
        %2562 = vmatpush1.bf16.msra.mxu0 %v1971
        %2563 = vmatprep.subr.bf16.mxu0 0
        %2564 = vmatpush1.bf16.msra.mxu0 %v1972
        %2565 = vmatprep.subr.bf16.mxu0 0
        %2566 = vmatpush1.bf16.msra.mxu0 %v1973
        %2567 = vmatprep.subr.bf16.mxu0 0
        %2568 = vmatpush1.bf16.msra.mxu0 %v1974
        %2569 = vmatprep.subr.bf16.mxu0 0
        %2570 = vmatpush1.bf16.msra.mxu0 %v1975
        %2571 = vmatprep.mubr.bf16.mxu0 %v1394
        %2572 = vmatmul.mubr.bf16.gmra.mrb[0].mxu0 %v1538
        %v2573 = vpop.f32.mrb[0].mxu0
        %v2574 = vadd.f32 %v2413, %v2573
        %v2575 = vpop.f32.mrb[0].mxu0
        %v2576 = vpop.f32.mrb[0].mxu0
        %v2577 = vadd.f32 %v2416, %v2576
        %v2578 = vpop.f32.mrb[0].mxu0
        %2579 = vmatprep.mubr.bf16.mxu0 %v1395
        %2580 = vmatmul.mubr.bf16.gmra.mrb[0].mxu0 %v1539
        %v2581 = vpop.f32.mrb[0].mxu0
        %v2582 = vadd.f32 %v2421, %v2581
        %v2583 = vpop.f32.mrb[0].mxu0
        %v2584 = vpop.f32.mrb[0].mxu0
        %v2585 = vadd.f32 %v2424, %v2584
        %v2586 = vpop.f32.mrb[0].mxu0
        %2587 = vmatprep.mubr.bf16.mxu0 %v1396
        %2588 = vmatmul.mubr.bf16.gmra.mrb[0].mxu0 %v1540
        %v2589 = vpop.f32.mrb[0].mxu0
        %v2590 = vadd.f32 %v2429, %v2589
        %v2591 = vpop.f32.mrb[0].mxu0
        %v2592 = vpop.f32.mrb[0].mxu0
        %v2593 = vadd.f32 %v2432, %v2592
        %v2594 = vpop.f32.mrb[0].mxu0
        %2595 = vmatprep.mubr.bf16.mxu0 %v1397
        %2596 = vmatmul.mubr.bf16.gmra.mrb[0].mxu0 %v1541
        %v2597 = vpop.f32.mrb[0].mxu0
        %v2598 = vadd.f32 %v2437, %v2597
        %v2599 = vpop.f32.mrb[0].mxu0
        %v2600 = vpop.f32.mrb[0].mxu0
        %v2601 = vadd.f32 %v2440, %v2600
        %v2602 = vpop.f32.mrb[0].mxu0
        %2603 = vmatprep.mubr.bf16.mxu0 %v1398
        %2604 = vmatmul.mubr.bf16.gmra.mrb[0].mxu0 %v1542
        %v2605 = vpop.f32.mrb[0].mxu0
        %v2606 = vadd.f32 %v2445, %v2605
        %v2607 = vpop.f32.mrb[0].mxu0
        %v2608 = vpop.f32.mrb[0].mxu0
        %v2609 = vadd.f32 %v2448, %v2608
        %v2610 = vpop.f32.mrb[0].mxu0
        %2611 = vmatprep.mubr.bf16.mxu0 %v1399
        %2612 = vmatmul.mubr.bf16.gmra.mrb[0].mxu0 %v1543
        %v2613 = vpop.f32.mrb[0].mxu0
        %v2614 = vadd.f32 %v2453, %v2613
        %v2615 = vpop.f32.mrb[0].mxu0
        %v2616 = vpop.f32.mrb[0].mxu0
        %v2617 = vadd.f32 %v2456, %v2616
        %v2618 = vpop.f32.mrb[0].mxu0
        %2619 = vmatprep.mubr.bf16.mxu0 %v1400
        %2620 = vmatmul.mubr.bf16.gmra.mrb[0].mxu0 %v1544
        %v2621 = vpop.f32.mrb[0].mxu0
        %v2622 = vadd.f32 %v2461, %v2621
        %v2623 = vpop.f32.mrb[0].mxu0
        %v2624 = vpop.f32.mrb[0].mxu0
        %v2625 = vadd.f32 %v2464, %v2624
        %v2626 = vpop.f32.mrb[0].mxu0
        %2627 = vmatprep.mubr.bf16.mxu0 %v1401
        %2628 = vmatmul.mubr.bf16.gmra.mrb[0].mxu0 %v1545
        %v2629 = vpop.f32.mrb[0].mxu0
        %v2630 = vadd.f32 %v2469, %v2629
        %v2631 = vpop.f32.mrb[0].mxu0
        %v2632 = vpop.f32.mrb[0].mxu0
        %v2633 = vadd.f32 %v2472, %v2632
        %v2634 = vpop.f32.mrb[0].mxu0
        %2635 = vmatprep.mubr.bf16.mxu0 %v1402
        %2636 = vmatmul.mubr.bf16.gmra.mrb[0].mxu0 %v1546
        %v2637 = vpop.f32.mrb[0].mxu0
        %v2638 = vadd.f32 %v2477, %v2637
        %v2639 = vpop.f32.mrb[0].mxu0
        %v2640 = vpop.f32.mrb[0].mxu0
        %v2641 = vadd.f32 %v2480, %v2640
        %v2642 = vpop.f32.mrb[0].mxu0
        %2643 = vmatprep.mubr.bf16.mxu0 %v1403
        %2644 = vmatmul.mubr.bf16.gmra.mrb[0].mxu0 %v1547
        %v2645 = vpop.f32.mrb[0].mxu0
        %v2646 = vadd.f32 %v2485, %v2645
        %v2647 = vpop.f32.mrb[0].mxu0
        %v2648 = vpop.f32.mrb[0].mxu0
        %v2649 = vadd.f32 %v2488, %v2648
        %v2650 = vpop.f32.mrb[0].mxu0
        %2651 = vmatprep.mubr.bf16.mxu0 %v1404
        %2652 = vmatmul.mubr.bf16.gmra.mrb[0].mxu0 %v1548
        %v2653 = vpop.f32.mrb[0].mxu0
        %v2654 = vadd.f32 %v2493, %v2653
        %v2655 = vpop.f32.mrb[0].mxu0
        %v2656 = vpop.f32.mrb[0].mxu0
        %v2657 = vadd.f32 %v2496, %v2656
        %v2658 = vpop.f32.mrb[0].mxu0
        %2659 = vmatprep.mubr.bf16.mxu0 %v1405
        %2660 = vmatmul.mubr.bf16.gmra.mrb[0].mxu0 %v1549
        %v2661 = vpop.f32.mrb[0].mxu0
        %v2662 = vadd.f32 %v2501, %v2661
        %v2663 = vpop.f32.mrb[0].mxu0
        %v2664 = vpop.f32.mrb[0].mxu0
        %v2665 = vadd.f32 %v2504, %v2664
        %v2666 = vpop.f32.mrb[0].mxu0
        %2667 = vmatprep.mubr.bf16.mxu0 %v1406
        %2668 = vmatmul.mubr.bf16.gmra.mrb[0].mxu0 %v1550
        %v2669 = vpop.f32.mrb[0].mxu0
        %v2670 = vadd.f32 %v2509, %v2669
        %v2671 = vpop.f32.mrb[0].mxu0
        %v2672 = vpop.f32.mrb[0].mxu0
        %v2673 = vadd.f32 %v2512, %v2672
        %v2674 = vpop.f32.mrb[0].mxu0
        %2675 = vmatprep.mubr.bf16.mxu0 %v1407
        %2676 = vmatmul.mubr.bf16.gmra.mrb[0].mxu0 %v1551
        %v2677 = vpop.f32.mrb[0].mxu0
        %v2678 = vadd.f32 %v2517, %v2677
        %v2679 = vpop.f32.mrb[0].mxu0
        %v2680 = vpop.f32.mrb[0].mxu0
        %v2681 = vadd.f32 %v2520, %v2680
        %v2682 = vpop.f32.mrb[0].mxu0
        %2683 = vmatprep.mubr.bf16.mxu0 %v1408
        %2684 = vmatmul.mubr.bf16.gmra.mrb[0].mxu0 %v1552
        %v2685 = vpop.f32.mrb[0].mxu0
        %v2686 = vadd.f32 %v2525, %v2685
        %v2687 = vpop.f32.mrb[0].mxu0
        %v2688 = vpop.f32.mrb[0].mxu0
        %v2689 = vadd.f32 %v2528, %v2688
        %v2690 = vpop.f32.mrb[0].mxu0
        %2691 = vmatprep.mubr.bf16.mxu0 %v1409
        %2692 = vmatmul.mubr.bf16.gmra.mrb[0].mxu0 %v1553
        %v2693 = vpop.f32.mrb[0].mxu0
        %v2694 = vadd.f32 %v2533, %v2693
        %v2695 = vpop.f32.mrb[0].mxu0
        %v2696 = vpop.f32.mrb[0].mxu0
        %v2697 = vadd.f32 %v2536, %v2696
        %v2698 = vpop.f32.mrb[0].mxu0
        %2699 = vdwg.mxu0
        %2700 = vmatprep.subr.bf16.mxu0 0
        %2701 = vmatpush1.bf16.msra.mxu0 %v1976
        %2702 = vmatprep.subr.bf16.mxu0 0
        %2703 = vmatpush1.bf16.msra.mxu0 %v1977
        %2704 = vmatprep.subr.bf16.mxu0 0
        %2705 = vmatpush1.bf16.msra.mxu0 %v1978
        %2706 = vmatprep.subr.bf16.mxu0 0
        %2707 = vmatpush1.bf16.msra.mxu0 %v1979
        %2708 = vmatprep.subr.bf16.mxu0 0
        %2709 = vmatpush1.bf16.msra.mxu0 %v1980
        %2710 = vmatprep.subr.bf16.mxu0 0
        %2711 = vmatpush1.bf16.msra.mxu0 %v1981
        %2712 = vmatprep.subr.bf16.mxu0 0
        %2713 = vmatpush1.bf16.msra.mxu0 %v1982
        %2714 = vmatprep.subr.bf16.mxu0 0
        %2715 = vmatpush1.bf16.msra.mxu0 %v1983
        %2716 = vmatprep.subr.bf16.mxu0 0
        %2717 = vmatpush1.bf16.msra.mxu0 0
        %2718 = vmatprep.subr.bf16.mxu0 0
        %2719 = vmatpush1.bf16.msra.mxu0 0
        %2720 = vmatprep.subr.bf16.mxu0 0
        %2721 = vmatpush1.bf16.msra.mxu0 0
        %2722 = vmatprep.subr.bf16.mxu0 0
        %2723 = vmatpush1.bf16.msra.mxu0 0
        %2724 = vmatprep.subr.bf16.mxu0 0
        %2725 = vmatpush1.bf16.msra.mxu0 0
        %2726 = vmatprep.subr.bf16.mxu0 0
        %2727 = vmatpush1.bf16.msra.mxu0 0
        %2728 = vmatprep.subr.bf16.mxu0 0
        %2729 = vmatpush1.bf16.msra.mxu0 0
        %2730 = vmatprep.subr.bf16.mxu0 0
        %2731 = vmatpush1.bf16.msra.mxu0 0
        %2732 = vmatprep.mubr.bf16.mxu0 0
        %2733 = vmatmul.mubr.bf16.gmra.mrb[0].mxu0 %v1602
        %v2734 = vpop.f32.mrb[0].mxu0
        %v2735 = vadd.f32 %v2574, %v2734
        %v2736 = vpop.f32.mrb[0].mxu0
        %v2737 = vpop.f32.mrb[0].mxu0
        %v2738 = vadd.f32 %v2577, %v2737
        %v2739 = vpop.f32.mrb[0].mxu0
        %2740 = vmatprep.mubr.bf16.mxu0 0
        %2741 = vmatmul.mubr.bf16.gmra.mrb[0].mxu0 %v1603
        %v2742 = vpop.f32.mrb[0].mxu0
        %v2743 = vadd.f32 %v2582, %v2742
        %v2744 = vpop.f32.mrb[0].mxu0
        %v2745 = vpop.f32.mrb[0].mxu0
        %v2746 = vadd.f32 %v2585, %v2745
        %v2747 = vpop.f32.mrb[0].mxu0
        %2748 = vmatprep.mubr.bf16.mxu0 0
        %2749 = vmatmul.mubr.bf16.gmra.mrb[0].mxu0 %v1604
        %v2750 = vpop.f32.mrb[0].mxu0
        %v2751 = vadd.f32 %v2590, %v2750
        %v2752 = vpop.f32.mrb[0].mxu0
        %v2753 = vpop.f32.mrb[0].mxu0
        %v2754 = vadd.f32 %v2593, %v2753
        %v2755 = vpop.f32.mrb[0].mxu0
        %2756 = vmatprep.mubr.bf16.mxu0 0
        %2757 = vmatmul.mubr.bf16.gmra.mrb[0].mxu0 %v1605
        %v2758 = vpop.f32.mrb[0].mxu0
        %v2759 = vadd.f32 %v2598, %v2758
        %v2760 = vpop.f32.mrb[0].mxu0
        %v2761 = vpop.f32.mrb[0].mxu0
        %v2762 = vadd.f32 %v2601, %v2761
        %v2763 = vpop.f32.mrb[0].mxu0
        %2764 = vmatprep.mubr.bf16.mxu0 0
        %2765 = vmatmul.mubr.bf16.gmra.mrb[0].mxu0 %v1606
        %v2766 = vpop.f32.mrb[0].mxu0
        %v2767 = vadd.f32 %v2606, %v2766
        %v2768 = vpop.f32.mrb[0].mxu0
        %v2769 = vpop.f32.mrb[0].mxu0
        %v2770 = vadd.f32 %v2609, %v2769
        %v2771 = vpop.f32.mrb[0].mxu0
        %2772 = vmatprep.mubr.bf16.mxu0 0
        %2773 = vmatmul.mubr.bf16.gmra.mrb[0].mxu0 %v1607
        %v2774 = vpop.f32.mrb[0].mxu0
        %v2775 = vadd.f32 %v2614, %v2774
        %v2776 = vpop.f32.mrb[0].mxu0
        %v2777 = vpop.f32.mrb[0].mxu0
        %v2778 = vadd.f32 %v2617, %v2777
        %v2779 = vpop.f32.mrb[0].mxu0
        %2780 = vmatprep.mubr.bf16.mxu0 0
        %2781 = vmatmul.mubr.bf16.gmra.mrb[0].mxu0 %v1608
        %v2782 = vpop.f32.mrb[0].mxu0
        %v2783 = vadd.f32 %v2622, %v2782
        %v2784 = vpop.f32.mrb[0].mxu0
        %v2785 = vpop.f32.mrb[0].mxu0
        %v2786 = vadd.f32 %v2625, %v2785
        %v2787 = vpop.f32.mrb[0].mxu0
        %2788 = vmatprep.mubr.bf16.mxu0 0
        %2789 = vmatmul.mubr.bf16.gmra.mrb[0].mxu0 %v1609
        %v2790 = vpop.f32.mrb[0].mxu0
        %v2791 = vadd.f32 %v2630, %v2790
        %v2792 = vpop.f32.mrb[0].mxu0
        %v2793 = vpop.f32.mrb[0].mxu0
        %v2794 = vadd.f32 %v2633, %v2793
        %v2795 = vpop.f32.mrb[0].mxu0
        %2796 = vmatprep.mubr.bf16.mxu0 0
        %2797 = vmatmul.mubr.bf16.gmra.mrb[0].mxu0 %v1610
        %v2798 = vpop.f32.mrb[0].mxu0
        %v2799 = vadd.f32 %v2638, %v2798
        %v2800 = vpop.f32.mrb[0].mxu0
        %v2801 = vpop.f32.mrb[0].mxu0
        %v2802 = vadd.f32 %v2641, %v2801
        %v2803 = vpop.f32.mrb[0].mxu0
        %2804 = vmatprep.mubr.bf16.mxu0 0
        %2805 = vmatmul.mubr.bf16.gmra.mrb[0].mxu0 %v1611
        %v2806 = vpop.f32.mrb[0].mxu0
        %v2807 = vadd.f32 %v2646, %v2806
        %v2808 = vpop.f32.mrb[0].mxu0
        %v2809 = vpop.f32.mrb[0].mxu0
        %v2810 = vadd.f32 %v2649, %v2809
        %v2811 = vpop.f32.mrb[0].mxu0
        %2812 = vmatprep.mubr.bf16.mxu0 0
        %2813 = vmatmul.mubr.bf16.gmra.mrb[0].mxu0 %v1612
        %v2814 = vpop.f32.mrb[0].mxu0
        %v2815 = vadd.f32 %v2654, %v2814
        %v2816 = vpop.f32.mrb[0].mxu0
        %v2817 = vpop.f32.mrb[0].mxu0
        %v2818 = vadd.f32 %v2657, %v2817
        %v2819 = vpop.f32.mrb[0].mxu0
        %2820 = vmatprep.mubr.bf16.mxu0 0
        %2821 = vmatmul.mubr.bf16.gmra.mrb[0].mxu0 %v1613
        %v2822 = vpop.f32.mrb[0].mxu0
        %v2823 = vadd.f32 %v2662, %v2822
        %v2824 = vpop.f32.mrb[0].mxu0
        %v2825 = vpop.f32.mrb[0].mxu0
        %v2826 = vadd.f32 %v2665, %v2825
        %v2827 = vpop.f32.mrb[0].mxu0
        %2828 = vmatprep.mubr.bf16.mxu0 0
        %2829 = vmatmul.mubr.bf16.gmra.mrb[0].mxu0 %v1614
        %v2830 = vpop.f32.mrb[0].mxu0
        %v2831 = vadd.f32 %v2670, %v2830
        %v2832 = vpop.f32.mrb[0].mxu0
        %v2833 = vpop.f32.mrb[0].mxu0
        %v2834 = vadd.f32 %v2673, %v2833
        %v2835 = vpop.f32.mrb[0].mxu0
        %2836 = vmatprep.mubr.bf16.mxu0 0
        %2837 = vmatmul.mubr.bf16.gmra.mrb[0].mxu0 %v1615
        %v2838 = vpop.f32.mrb[0].mxu0
        %v2839 = vadd.f32 %v2678, %v2838
        %v2840 = vpop.f32.mrb[0].mxu0
        %v2841 = vpop.f32.mrb[0].mxu0
        %v2842 = vadd.f32 %v2681, %v2841
        %v2843 = vpop.f32.mrb[0].mxu0
        %2844 = vmatprep.mubr.bf16.mxu0 0
        %2845 = vmatmul.mubr.bf16.gmra.mrb[0].mxu0 %v1616
        %v2846 = vpop.f32.mrb[0].mxu0
        %v2847 = vadd.f32 %v2686, %v2846
        %v2848 = vpop.f32.mrb[0].mxu0
        %v2849 = vpop.f32.mrb[0].mxu0
        %v2850 = vadd.f32 %v2689, %v2849
        %v2851 = vpop.f32.mrb[0].mxu0
        %2852 = vmatprep.mubr.bf16.mxu0 0
        %2853 = vmatmul.mubr.bf16.gmra.mrb[0].mxu0 %v1617
        %v2854 = vpop.f32.mrb[0].mxu0
        %v2855 = vadd.f32 %v2694, %v2854
        %v2856 = vpop.f32.mrb[0].mxu0
        %v2857 = vpop.f32.mrb[0].mxu0
        %v2858 = vadd.f32 %v2697, %v2857
        %v2859 = vpop.f32.mrb[0].mxu0
        %2860 = vdwg.mxu0
        %v2861 = vmax.f32 %v2735, 0.0
        %v2862 = vmax.f32 %v2738, 0.0
        %v2863 = vmax.f32 %v2743, 0.0
        %v2864 = vmax.f32 %v2746, 0.0
        %v2865 = vmax.f32 %v2751, 0.0
        %v2866 = vmax.f32 %v2754, 0.0
        %v2867 = vmax.f32 %v2759, 0.0
        %v2868 = vmax.f32 %v2762, 0.0
        %v2869 = vmax.f32 %v2767, 0.0
        %v2870 = vmax.f32 %v2770, 0.0
        %v2871 = vmax.f32 %v2775, 0.0
        %v2872 = vmax.f32 %v2778, 0.0
        %v2873 = vmax.f32 %v2783, 0.0
        %v2874 = vmax.f32 %v2786, 0.0
        %v2875 = vmax.f32 %v2791, 0.0
        %v2876 = vmax.f32 %v2794, 0.0
        %v2877 = vmax.f32 %v2799, 0.0
        %v2878 = vmax.f32 %v2802, 0.0
        %v2879 = vmax.f32 %v2807, 0.0
        %v2880 = vmax.f32 %v2810, 0.0
        %v2881 = vmax.f32 %v2815, 0.0
        %v2882 = vmax.f32 %v2818, 0.0
        %v2883 = vmax.f32 %v2823, 0.0
        %v2884 = vmax.f32 %v2826, 0.0
        %v2885 = vmax.f32 %v2831, 0.0
        %v2886 = vmax.f32 %v2834, 0.0
        %v2887 = vmax.f32 %v2839, 0.0
        %v2888 = vmax.f32 %v2842, 0.0
        %v2889 = vmax.f32 %v2847, 0.0
        %v2890 = vmax.f32 %v2850, 0.0
        %v2891 = vmax.f32 %v2855, 0.0
        %v2892 = vmax.f32 %v2858, 0.0
        %v2893 = vpack.c.bf16 %v2862, %v2861
        %v2894 = vpack.c.bf16 %v2864, %v2863
        %v2895 = vpack.c.bf16 %v2866, %v2865
        %v2896 = vpack.c.bf16 %v2868, %v2867
        %v2897 = vpack.c.bf16 %v2870, %v2869
        %v2898 = vpack.c.bf16 %v2872, %v2871
        %v2899 = vpack.c.bf16 %v2874, %v2873
        %v2900 = vpack.c.bf16 %v2876, %v2875
        %v2901 = vpack.c.bf16 %v2878, %v2877
        %v2902 = vpack.c.bf16 %v2880, %v2879
        %v2903 = vpack.c.bf16 %v2882, %v2881
        %v2904 = vpack.c.bf16 %v2884, %v2883
        %v2905 = vpack.c.bf16 %v2886, %v2885
        %v2906 = vpack.c.bf16 %v2888, %v2887
        %v2907 = vpack.c.bf16 %v2890, %v2889
        %v2908 = vpack.c.bf16 %v2892, %v2891
        %v2910 = vlaneseq
        %v2911 = vshrl.u32 %v2910, 7
        %v2912 = vsub.s32 0, %v2911
        %v2913 = vrot.slane %v520, %v2912
        %v2931 = vunpack.c.l.b16 %v502
        %v2932 = vunpack.c.l.b16 %v503
        %v2933 = vunpack.c.l.b16 %v504
        %v2934 = vunpack.c.l.b16 %v505
        %v2935 = vunpack.c.l.b16 %v506
        %v2936 = vunpack.c.l.b16 %v507
        %v2937 = vunpack.c.l.b16 %v508
        %v2938 = vunpack.c.l.b16 %v509
        %v2939 = vunpack.c.l.b16 %v510
        %v2940 = vunpack.c.l.b16 %v511
        %v2941 = vunpack.c.l.b16 %v512
        %v2942 = vunpack.c.l.b16 %v513
        %v2943 = vunpack.c.l.b16 %v514
        %v2944 = vunpack.c.l.b16 %v515
        %v2945 = vunpack.c.l.b16 %v516
        %v2946 = vunpack.c.l.b16 %v517
        %v2947 = vpack.c.b16 %v2932, %v2931
        %v2948 = vpack.c.b16 %v2934, %v2933
        %v2949 = vpack.c.b16 %v2936, %v2935
        %v2950 = vpack.c.b16 %v2938, %v2937
        %v2951 = vpack.c.b16 %v2940, %v2939
        %v2952 = vpack.c.b16 %v2942, %v2941
        %v2953 = vpack.c.b16 %v2944, %v2943
        %v2954 = vpack.c.b16 %v2946, %v2945
        %2963 = vmatprep.subr.bf16.mxu0 0
        %2964 = vmatpush1.bf16.msra.mxu0 %v2947
        %2965 = vmatprep.subr.bf16.mxu0 0
        %2966 = vmatpush1.bf16.msra.mxu0 %v2948
        %2967 = vmatprep.subr.bf16.mxu0 0
        %2968 = vmatpush1.bf16.msra.mxu0 %v2949
        %2969 = vmatprep.subr.bf16.mxu0 0
        %2970 = vmatpush1.bf16.msra.mxu0 %v2950
        %2971 = vmatprep.subr.bf16.mxu0 0
        %2972 = vmatpush1.bf16.msra.mxu0 %v2951
        %2973 = vmatprep.subr.bf16.mxu0 0
        %2974 = vmatpush1.bf16.msra.mxu0 %v2952
        %2975 = vmatprep.subr.bf16.mxu0 0
        %2976 = vmatpush1.bf16.msra.mxu0 %v2953
        %2977 = vmatprep.subr.bf16.mxu0 0
        %2978 = vmatpush1.bf16.msra.mxu0 %v2954
        %2979 = vmatprep.subr.bf16.mxu0 0
        %2980 = vmatpush1.bf16.msra.mxu0 0
        %2981 = vmatprep.subr.bf16.mxu0 0
        %2982 = vmatpush1.bf16.msra.mxu0 0
        %2983 = vmatprep.subr.bf16.mxu0 0
        %2984 = vmatpush1.bf16.msra.mxu0 0
        %2985 = vmatprep.subr.bf16.mxu0 0
        %2986 = vmatpush1.bf16.msra.mxu0 0
        %2987 = vmatprep.subr.bf16.mxu0 0
        %2988 = vmatpush1.bf16.msra.mxu0 0
        %2989 = vmatprep.subr.bf16.mxu0 0
        %2990 = vmatpush1.bf16.msra.mxu0 0
        %2991 = vmatprep.subr.bf16.mxu0 0
        %2992 = vmatpush1.bf16.msra.mxu0 0
        %2993 = vmatprep.subr.bf16.mxu0 0
        %2994 = vmatpush1.bf16.msra.mxu0 0
        %2995 = vmatprep.mubr.bf16.mxu0 0
        %2996 = vmatmul.mubr.bf16.gmra.mrb[0].mxu0 %v2893
        %v2997 = vpop.f32.mrb[0].mxu0
        %v2998 = vadd.f32 %v2913, %v2997
        %v2999 = vpop.f32.mrb[0].mxu0
        %v3000 = vpop.f32.mrb[0].mxu0
        %v3001 = vadd.f32 %v2913, %v3000
        %v3002 = vpop.f32.mrb[0].mxu0
        %3003 = vmatprep.mubr.bf16.mxu0 0
        %3004 = vmatmul.mubr.bf16.gmra.mrb[0].mxu0 %v2894
        %v3005 = vpop.f32.mrb[0].mxu0
        %v3006 = vadd.f32 %v2913, %v3005
        %v3007 = vpop.f32.mrb[0].mxu0
        %v3008 = vpop.f32.mrb[0].mxu0
        %v3009 = vadd.f32 %v2913, %v3008
        %v3010 = vpop.f32.mrb[0].mxu0
        %3011 = vmatprep.mubr.bf16.mxu0 0
        %3012 = vmatmul.mubr.bf16.gmra.mrb[0].mxu0 %v2895
        %v3013 = vpop.f32.mrb[0].mxu0
        %v3014 = vadd.f32 %v2913, %v3013
        %v3015 = vpop.f32.mrb[0].mxu0
        %v3016 = vpop.f32.mrb[0].mxu0
        %v3017 = vadd.f32 %v2913, %v3016
        %v3018 = vpop.f32.mrb[0].mxu0
        %3019 = vmatprep.mubr.bf16.mxu0 0
        %3020 = vmatmul.mubr.bf16.gmra.mrb[0].mxu0 %v2896
        %v3021 = vpop.f32.mrb[0].mxu0
        %v3022 = vadd.f32 %v2913, %v3021
        %v3023 = vpop.f32.mrb[0].mxu0
        %v3024 = vpop.f32.mrb[0].mxu0
        %v3025 = vadd.f32 %v2913, %v3024
        %v3026 = vpop.f32.mrb[0].mxu0
        %3027 = vmatprep.mubr.bf16.mxu0 0
        %3028 = vmatmul.mubr.bf16.gmra.mrb[0].mxu0 %v2897
        %v3029 = vpop.f32.mrb[0].mxu0
        %v3030 = vadd.f32 %v2913, %v3029
        %v3031 = vpop.f32.mrb[0].mxu0
        %v3032 = vpop.f32.mrb[0].mxu0
        %v3033 = vadd.f32 %v2913, %v3032
        %v3034 = vpop.f32.mrb[0].mxu0
        %3035 = vmatprep.mubr.bf16.mxu0 0
        %3036 = vmatmul.mubr.bf16.gmra.mrb[0].mxu0 %v2898
        %v3037 = vpop.f32.mrb[0].mxu0
        %v3038 = vadd.f32 %v2913, %v3037
        %v3039 = vpop.f32.mrb[0].mxu0
        %v3040 = vpop.f32.mrb[0].mxu0
        %v3041 = vadd.f32 %v2913, %v3040
        %v3042 = vpop.f32.mrb[0].mxu0
        %3043 = vmatprep.mubr.bf16.mxu0 0
        %3044 = vmatmul.mubr.bf16.gmra.mrb[0].mxu0 %v2899
        %v3045 = vpop.f32.mrb[0].mxu0
        %v3046 = vadd.f32 %v2913, %v3045
        %v3047 = vpop.f32.mrb[0].mxu0
        %v3048 = vpop.f32.mrb[0].mxu0
        %v3049 = vadd.f32 %v2913, %v3048
        %v3050 = vpop.f32.mrb[0].mxu0
        %3051 = vmatprep.mubr.bf16.mxu0 0
        %3052 = vmatmul.mubr.bf16.gmra.mrb[0].mxu0 %v2900
        %v3053 = vpop.f32.mrb[0].mxu0
        %v3054 = vadd.f32 %v2913, %v3053
        %v3055 = vpop.f32.mrb[0].mxu0
        %v3056 = vpop.f32.mrb[0].mxu0
        %v3057 = vadd.f32 %v2913, %v3056
        %v3058 = vpop.f32.mrb[0].mxu0
        %3059 = vmatprep.mubr.bf16.mxu0 0
        %3060 = vmatmul.mubr.bf16.gmra.mrb[0].mxu0 %v2901
        %v3061 = vpop.f32.mrb[0].mxu0
        %v3062 = vadd.f32 %v2913, %v3061
        %v3063 = vpop.f32.mrb[0].mxu0
        %v3064 = vpop.f32.mrb[0].mxu0
        %v3065 = vadd.f32 %v2913, %v3064
        %v3066 = vpop.f32.mrb[0].mxu0
        %3067 = vmatprep.mubr.bf16.mxu0 0
        %3068 = vmatmul.mubr.bf16.gmra.mrb[0].mxu0 %v2902
        %v3069 = vpop.f32.mrb[0].mxu0
        %v3070 = vadd.f32 %v2913, %v3069
        %v3071 = vpop.f32.mrb[0].mxu0
        %v3072 = vpop.f32.mrb[0].mxu0
        %v3073 = vadd.f32 %v2913, %v3072
        %v3074 = vpop.f32.mrb[0].mxu0
        %3075 = vmatprep.mubr.bf16.mxu0 0
        %3076 = vmatmul.mubr.bf16.gmra.mrb[0].mxu0 %v2903
        %v3077 = vpop.f32.mrb[0].mxu0
        %v3078 = vadd.f32 %v2913, %v3077
        %v3079 = vpop.f32.mrb[0].mxu0
        %v3080 = vpop.f32.mrb[0].mxu0
        %v3081 = vadd.f32 %v2913, %v3080
        %v3082 = vpop.f32.mrb[0].mxu0
        %3083 = vmatprep.mubr.bf16.mxu0 0
        %3084 = vmatmul.mubr.bf16.gmra.mrb[0].mxu0 %v2904
        %v3085 = vpop.f32.mrb[0].mxu0
        %v3086 = vadd.f32 %v2913, %v3085
        %v3087 = vpop.f32.mrb[0].mxu0
        %v3088 = vpop.f32.mrb[0].mxu0
        %v3089 = vadd.f32 %v2913, %v3088
        %v3090 = vpop.f32.mrb[0].mxu0
        %3091 = vmatprep.mubr.bf16.mxu0 0
        %3092 = vmatmul.mubr.bf16.gmra.mrb[0].mxu0 %v2905
        %v3093 = vpop.f32.mrb[0].mxu0
        %v3094 = vadd.f32 %v2913, %v3093
        %v3095 = vpop.f32.mrb[0].mxu0
        %v3096 = vpop.f32.mrb[0].mxu0
        %v3097 = vadd.f32 %v2913, %v3096
        %v3098 = vpop.f32.mrb[0].mxu0
        %3099 = vmatprep.mubr.bf16.mxu0 0
        %3100 = vmatmul.mubr.bf16.gmra.mrb[0].mxu0 %v2906
        %v3101 = vpop.f32.mrb[0].mxu0
        %v3102 = vadd.f32 %v2913, %v3101
        %v3103 = vpop.f32.mrb[0].mxu0
        %v3104 = vpop.f32.mrb[0].mxu0
        %v3105 = vadd.f32 %v2913, %v3104
        %v3106 = vpop.f32.mrb[0].mxu0
        %3107 = vmatprep.mubr.bf16.mxu0 0
        %3108 = vmatmul.mubr.bf16.gmra.mrb[0].mxu0 %v2907
        %v3109 = vpop.f32.mrb[0].mxu0
        %v3110 = vadd.f32 %v2913, %v3109
        %v3111 = vpop.f32.mrb[0].mxu0
        %v3112 = vpop.f32.mrb[0].mxu0
        %v3113 = vadd.f32 %v2913, %v3112
        %v3114 = vpop.f32.mrb[0].mxu0
        %3115 = vmatprep.mubr.bf16.mxu0 0
        %3116 = vmatmul.mubr.bf16.gmra.mrb[0].mxu0 %v2908
        %v3117 = vpop.f32.mrb[0].mxu0
        %v3118 = vadd.f32 %v2913, %v3117
        %v3119 = vpop.f32.mrb[0].mxu0
        %v3120 = vpop.f32.mrb[0].mxu0
        %v3121 = vadd.f32 %v2913, %v3120
        %v3122 = vpop.f32.mrb[0].mxu0
        %3123 = vdwg.mxu0
        %v3124 = vld [vmem:[%s526] sm:$0xf]
        %v3125 = vld [vmem:[%s526 + $0x4] sm:$0xf]
        %v3126 = vld [vmem:[%s526 + $0x8] sm:$0xf]
        %v3127 = vld [vmem:[%s526 + $0xc] sm:$0xf]
        %v3128 = vld [vmem:[%s526 + $0x10] sm:$0xf]
        %v3129 = vld [vmem:[%s526 + $0x14] sm:$0xf]
        %v3130 = vld [vmem:[%s526 + $0x18] sm:$0xf]
        %v3131 = vld [vmem:[%s526 + $0x1c] sm:$0xf]
        %v3132 = vld [vmem:[%s526 + $0x20] sm:$0xf]
        %v3133 = vld [vmem:[%s526 + $0x24] sm:$0xf]
        %v3134 = vld [vmem:[%s526 + $0x28] sm:$0xf]
        %v3135 = vld [vmem:[%s526 + $0x2c] sm:$0xf]
        %v3136 = vld [vmem:[%s526 + $0x30] sm:$0xf]
        %v3137 = vld [vmem:[%s526 + $0x34] sm:$0xf]
        %v3138 = vld [vmem:[%s526 + $0x38] sm:$0xf]
        %v3139 = vld [vmem:[%s526 + $0x3c] sm:$0xf]
        %v3140 = vld [vmem:[%s526 + $0x40] sm:$0xf]
        %v3141 = vld [vmem:[%s526 + $0x44] sm:$0xf]
        %v3142 = vld [vmem:[%s526 + $0x48] sm:$0xf]
        %v3143 = vld [vmem:[%s526 + $0x4c] sm:$0xf]
        %v3144 = vld [vmem:[%s526 + $0x50] sm:$0xf]
        %v3145 = vld [vmem:[%s526 + $0x54] sm:$0xf]
        %v3146 = vld [vmem:[%s526 + $0x58] sm:$0xf]
        %v3147 = vld [vmem:[%s526 + $0x5c] sm:$0xf]
        %v3148 = vld [vmem:[%s526 + $0x60] sm:$0xf]
        %v3149 = vld [vmem:[%s526 + $0x64] sm:$0xf]
        %v3150 = vld [vmem:[%s526 + $0x68] sm:$0xf]
        %v3151 = vld [vmem:[%s526 + $0x6c] sm:$0xf]
        %v3152 = vld [vmem:[%s526 + $0x70] sm:$0xf]
        %v3153 = vld [vmem:[%s526 + $0x74] sm:$0xf]
        %v3154 = vld [vmem:[%s526 + $0x78] sm:$0xf]
        %v3155 = vld [vmem:[%s526 + $0x7c] sm:$0xf]
        %v3156 = vunpack.c.l.bf16 %v3124
        %v3157 = vunpack.c.l.bf16 %v3125
        %v3158 = vunpack.c.l.bf16 %v3126
        %v3159 = vunpack.c.l.bf16 %v3127
        %v3160 = vunpack.c.l.bf16 %v3128
        %v3161 = vunpack.c.l.bf16 %v3129
        %v3162 = vunpack.c.l.bf16 %v3130
        %v3163 = vunpack.c.l.bf16 %v3131
        %v3164 = vunpack.c.l.bf16 %v3132
        %v3165 = vunpack.c.l.bf16 %v3133
        %v3166 = vunpack.c.l.bf16 %v3134
        %v3167 = vunpack.c.l.bf16 %v3135
        %v3168 = vunpack.c.l.bf16 %v3136
        %v3169 = vunpack.c.l.bf16 %v3137
        %v3170 = vunpack.c.l.bf16 %v3138
        %v3171 = vunpack.c.l.bf16 %v3139
        %v3172 = vunpack.c.l.bf16 %v3140
        %v3173 = vunpack.c.l.bf16 %v3141
        %v3174 = vunpack.c.l.bf16 %v3142
        %v3175 = vunpack.c.l.bf16 %v3143
        %v3176 = vunpack.c.l.bf16 %v3144
        %v3177 = vunpack.c.l.bf16 %v3145
        %v3178 = vunpack.c.l.bf16 %v3146
        %v3179 = vunpack.c.l.bf16 %v3147
        %v3180 = vunpack.c.l.bf16 %v3148
        %v3181 = vunpack.c.l.bf16 %v3149
        %v3182 = vunpack.c.l.bf16 %v3150
        %v3183 = vunpack.c.l.bf16 %v3151
        %v3184 = vunpack.c.l.bf16 %v3152
        %v3185 = vunpack.c.l.bf16 %v3153
        %v3186 = vunpack.c.l.bf16 %v3154
        %v3187 = vunpack.c.l.bf16 %v3155
        %v3188 = vadd.f32 %v2998, %v3156
        %v3189 = vadd.f32 %v3001, %v3157
        %v3190 = vadd.f32 %v3006, %v3158
        %v3191 = vadd.f32 %v3009, %v3159
        %v3192 = vadd.f32 %v3014, %v3160
        %v3193 = vadd.f32 %v3017, %v3161
        %v3194 = vadd.f32 %v3022, %v3162
        %v3195 = vadd.f32 %v3025, %v3163
        %v3196 = vadd.f32 %v3030, %v3164
        %v3197 = vadd.f32 %v3033, %v3165
        %v3198 = vadd.f32 %v3038, %v3166
        %v3199 = vadd.f32 %v3041, %v3167
        %v3200 = vadd.f32 %v3046, %v3168
        %v3201 = vadd.f32 %v3049, %v3169
        %v3202 = vadd.f32 %v3054, %v3170
        %v3203 = vadd.f32 %v3057, %v3171
        %v3204 = vadd.f32 %v3062, %v3172
        %v3205 = vadd.f32 %v3065, %v3173
        %v3206 = vadd.f32 %v3070, %v3174
        %v3207 = vadd.f32 %v3073, %v3175
        %v3208 = vadd.f32 %v3078, %v3176
        %v3209 = vadd.f32 %v3081, %v3177
        %v3210 = vadd.f32 %v3086, %v3178
        %v3211 = vadd.f32 %v3089, %v3179
        %v3212 = vadd.f32 %v3094, %v3180
        %v3213 = vadd.f32 %v3097, %v3181
        %v3214 = vadd.f32 %v3102, %v3182
        %v3215 = vadd.f32 %v3105, %v3183
        %v3216 = vadd.f32 %v3110, %v3184
        %v3217 = vadd.f32 %v3113, %v3185
        %v3218 = vadd.f32 %v3118, %v3186
        %v3219 = vadd.f32 %v3121, %v3187
        %v3220 = vmax.f32 %v3188, 0.0
        %v3221 = vmax.f32 %v3189, 0.0
        %v3222 = vmax.f32 %v3190, 0.0
        %v3223 = vmax.f32 %v3191, 0.0
        %v3224 = vmax.f32 %v3192, 0.0
        %v3225 = vmax.f32 %v3193, 0.0
        %v3226 = vmax.f32 %v3194, 0.0
        %v3227 = vmax.f32 %v3195, 0.0
        %v3228 = vmax.f32 %v3196, 0.0
        %v3229 = vmax.f32 %v3197, 0.0
        %v3230 = vmax.f32 %v3198, 0.0
        %v3231 = vmax.f32 %v3199, 0.0
        %v3232 = vmax.f32 %v3200, 0.0
        %v3233 = vmax.f32 %v3201, 0.0
        %v3234 = vmax.f32 %v3202, 0.0
        %v3235 = vmax.f32 %v3203, 0.0
        %v3236 = vmax.f32 %v3204, 0.0
        %v3237 = vmax.f32 %v3205, 0.0
        %v3238 = vmax.f32 %v3206, 0.0
        %v3239 = vmax.f32 %v3207, 0.0
        %v3240 = vmax.f32 %v3208, 0.0
        %v3241 = vmax.f32 %v3209, 0.0
        %v3242 = vmax.f32 %v3210, 0.0
        %v3243 = vmax.f32 %v3211, 0.0
        %v3244 = vmax.f32 %v3212, 0.0
        %v3245 = vmax.f32 %v3213, 0.0
        %v3246 = vmax.f32 %v3214, 0.0
        %v3247 = vmax.f32 %v3215, 0.0
        %v3248 = vmax.f32 %v3216, 0.0
        %v3249 = vmax.f32 %v3217, 0.0
        %v3250 = vmax.f32 %v3218, 0.0
        %v3251 = vmax.f32 %v3219, 0.0
        %v3252 = vpack.c.bf16 %v3221, %v3220
        %v3253 = vpack.c.bf16 %v3223, %v3222
        %v3254 = vpack.c.bf16 %v3225, %v3224
        %v3255 = vpack.c.bf16 %v3227, %v3226
        %v3256 = vpack.c.bf16 %v3229, %v3228
        %v3257 = vpack.c.bf16 %v3231, %v3230
        %v3258 = vpack.c.bf16 %v3233, %v3232
        %v3259 = vpack.c.bf16 %v3235, %v3234
        %v3260 = vpack.c.bf16 %v3237, %v3236
        %v3261 = vpack.c.bf16 %v3239, %v3238
        %v3262 = vpack.c.bf16 %v3241, %v3240
        %v3263 = vpack.c.bf16 %v3243, %v3242
        %v3264 = vpack.c.bf16 %v3245, %v3244
        %v3265 = vpack.c.bf16 %v3247, %v3246
        %v3266 = vpack.c.bf16 %v3249, %v3248
        %v3267 = vpack.c.bf16 %v3251, %v3250
        %v3284 = vunpack.c.l.b16 %v3252
        %v3285 = vunpack.c.h.b16 %v3252
        %v3286 = vunpack.c.l.b16 %v3253
        %v3287 = vunpack.c.h.b16 %v3253
        %v3288 = vunpack.c.l.b16 %v3254
        %v3289 = vunpack.c.h.b16 %v3254
        %v3290 = vunpack.c.l.b16 %v3255
        %v3291 = vunpack.c.h.b16 %v3255
        %v3292 = vunpack.c.l.b16 %v3256
        %v3293 = vunpack.c.h.b16 %v3256
        %v3294 = vunpack.c.l.b16 %v3257
        %v3295 = vunpack.c.h.b16 %v3257
        %v3296 = vunpack.c.l.b16 %v3258
        %v3297 = vunpack.c.h.b16 %v3258
        %v3298 = vunpack.c.l.b16 %v3259
        %v3299 = vunpack.c.h.b16 %v3259
        %v3300 = vunpack.c.l.b16 %v3260
        %v3301 = vunpack.c.h.b16 %v3260
        %v3302 = vunpack.c.l.b16 %v3261
        %v3303 = vunpack.c.h.b16 %v3261
        %v3304 = vunpack.c.l.b16 %v3262
        %v3305 = vunpack.c.h.b16 %v3262
        %v3306 = vunpack.c.l.b16 %v3263
        %v3307 = vunpack.c.h.b16 %v3263
        %v3308 = vunpack.c.l.b16 %v3264
        %v3309 = vunpack.c.h.b16 %v3264
        %v3310 = vunpack.c.l.b16 %v3265
        %v3311 = vunpack.c.h.b16 %v3265
        %v3312 = vunpack.c.l.b16 %v3266
        %v3313 = vunpack.c.h.b16 %v3266
        %v3314 = vunpack.c.l.b16 %v3267
        %v3315 = vunpack.c.h.b16 %v3267
        %v3316 = vpack.c.b16 %v3284, %v3284
        %v3317 = vpack.c.b16 %v3285, %v3285
        %v3318 = vpack.c.b16 %v3286, %v3286
        %v3319 = vpack.c.b16 %v3287, %v3287
        %v3320 = vpack.c.b16 %v3288, %v3288
        %v3321 = vpack.c.b16 %v3289, %v3289
        %v3322 = vpack.c.b16 %v3290, %v3290
        %v3323 = vpack.c.b16 %v3291, %v3291
        %v3324 = vpack.c.b16 %v3292, %v3292
        %v3325 = vpack.c.b16 %v3293, %v3293
        %v3326 = vpack.c.b16 %v3294, %v3294
        %v3327 = vpack.c.b16 %v3295, %v3295
        %v3328 = vpack.c.b16 %v3296, %v3296
        %v3329 = vpack.c.b16 %v3297, %v3297
        %v3330 = vpack.c.b16 %v3298, %v3298
        %v3331 = vpack.c.b16 %v3299, %v3299
        %v3332 = vpack.c.b16 %v3300, %v3300
        %v3333 = vpack.c.b16 %v3301, %v3301
        %v3334 = vpack.c.b16 %v3302, %v3302
        %v3335 = vpack.c.b16 %v3303, %v3303
        %v3336 = vpack.c.b16 %v3304, %v3304
        %v3337 = vpack.c.b16 %v3305, %v3305
        %v3338 = vpack.c.b16 %v3306, %v3306
        %v3339 = vpack.c.b16 %v3307, %v3307
        %v3340 = vpack.c.b16 %v3308, %v3308
        %v3341 = vpack.c.b16 %v3309, %v3309
        %v3342 = vpack.c.b16 %v3310, %v3310
        %v3343 = vpack.c.b16 %v3311, %v3311
        %v3344 = vpack.c.b16 %v3312, %v3312
        %v3345 = vpack.c.b16 %v3313, %v3313
        %v3346 = vpack.c.b16 %v3314, %v3314
        %v3347 = vpack.c.b16 %v3315, %v3315
        %s3380 = smul.addr %s524, 4
        %s3381 = scalar_lea.vmem %s340, %s3380 [#allocation11]
        %3382 = vst [vmem:[%s3381] sm:$0xf] %v3316
        %3383 = vst [vmem:[%s3381 + $0x4] sm:$0xf] %v3317
        %3384 = vst [vmem:[%s3381 + $0x8] sm:$0xf] %v3318
        %3385 = vst [vmem:[%s3381 + $0xc] sm:$0xf] %v3319
        %3386 = vst [vmem:[%s3381 + $0x10] sm:$0xf] %v3320
        %3387 = vst [vmem:[%s3381 + $0x14] sm:$0xf] %v3321
        %3388 = vst [vmem:[%s3381 + $0x18] sm:$0xf] %v3322
        %3389 = vst [vmem:[%s3381 + $0x1c] sm:$0xf] %v3323
        %3390 = vst [vmem:[%s3381 + $0x20] sm:$0xf] %v3324
        %3391 = vst [vmem:[%s3381 + $0x24] sm:$0xf] %v3325
        %3392 = vst [vmem:[%s3381 + $0x28] sm:$0xf] %v3326
        %3393 = vst [vmem:[%s3381 + $0x2c] sm:$0xf] %v3327
        %3394 = vst [vmem:[%s3381 + $0x30] sm:$0xf] %v3328
        %3395 = vst [vmem:[%s3381 + $0x34] sm:$0xf] %v3329
        %3396 = vst [vmem:[%s3381 + $0x38] sm:$0xf] %v3330
        %3397 = vst [vmem:[%s3381 + $0x3c] sm:$0xf] %v3331
        %3398 = vst [vmem:[%s3381 + $0x40] sm:$0xf] %v3332
        %3399 = vst [vmem:[%s3381 + $0x44] sm:$0xf] %v3333
        %3400 = vst [vmem:[%s3381 + $0x48] sm:$0xf] %v3334
        %3401 = vst [vmem:[%s3381 + $0x4c] sm:$0xf] %v3335
        %3402 = vst [vmem:[%s3381 + $0x50] sm:$0xf] %v3336
        %3403 = vst [vmem:[%s3381 + $0x54] sm:$0xf] %v3337
        %3404 = vst [vmem:[%s3381 + $0x58] sm:$0xf] %v3338
        %3405 = vst [vmem:[%s3381 + $0x5c] sm:$0xf] %v3339
        %3406 = vst [vmem:[%s3381 + $0x60] sm:$0xf] %v3340
        %3407 = vst [vmem:[%s3381 + $0x64] sm:$0xf] %v3341
        %3408 = vst [vmem:[%s3381 + $0x68] sm:$0xf] %v3342
        %3409 = vst [vmem:[%s3381 + $0x6c] sm:$0xf] %v3343
        %3410 = vst [vmem:[%s3381 + $0x70] sm:$0xf] %v3344
        %3411 = vst [vmem:[%s3381 + $0x74] sm:$0xf] %v3345
        %3412 = vst [vmem:[%s3381 + $0x78] sm:$0xf] %v3346
        %3413 = vst [vmem:[%s3381 + $0x7c] sm:$0xf] %v3347
        %s3414 = sand.u32 %s186, 1
        %s3415 = scalar_lea.sflag [#allocation5], %s3414
        %s3416 = sand.u32 %s186, 1
        %s3417 = smul.addr %s3416, 128
        %s3418 = scalar_lea.vmem [#allocation11], %s3417
        // Predicated region
        $region65: #{tpu_custom_call.1} parent=47 // pred_check
          %p3419 = pneg %p196
        $region66: #{tpu_custom_call.1} parent=47 // pred_check_branch
          %3421 = sbr.rel (%p3419) target = $region68
        $region67: #{tpu_custom_call.1} parent=47 // pred_region
          %s3423 = ssub.s32 2048, 2048
          %3424 = vsyncadd %s3415, %s3423
          %s3425 = smul.addr %s26, 32
          %s3426 = smul.addr %s3425, 64
          %s3427 = scalar_lea.hbm %s7, %s3426
          %s3428 = sshll.u32 %s3418, 4
          %s3429 = int_to_ptr.vmem [resolvable:$true] %s3428
          %3434 = dma.vmem_to_hbm [thread:$0]  %s3429, 2048, %s3427, %s3415, 64, 64, 4
        $region68: #{tpu_custom_call.1} parent=47 // pred_fallthru
          _
      $region48: #{tpu_custom_call.1} parent=5 // pred_fallthru
        _
      %p3435 = scmp.le.s32.totalorder 2, %s21
      // Predicated region
      $region69: #{tpu_custom_call.1} parent=5 // pred_check
        %p3436 = pneg %p3435
      $region70: #{tpu_custom_call.1} parent=5 // pred_check_branch
        %3438 = sbr.rel (%p3436) target = $region72
      $region71: #{tpu_custom_call.1} parent=5 // pred_region
        %s3439 = ssub.s32 %s21, 2
        // Predicated region
        $region73: #{tpu_custom_call.1} parent=71 // pred_check
          %p3440 = pneg %p202
        $region74: #{tpu_custom_call.1} parent=71 // pred_check_branch
          %3442 = sbr.rel (%p3440) target = $region76
        $region75: #{tpu_custom_call.1} parent=71 // pred_region
          %s3443 = sand.u32 %s187, 1
          %s3444 = scalar_lea.sflag [#allocation5], %s3443
          %s3445 = sand.u32 %s187, 1
          %s3446 = smul.addr %s3445, 128
          %s3447 = scalar_lea.vmem [#allocation11], %s3446
          %3448 = dma.done %s3444, 2048
        $region76: #{tpu_custom_call.1} parent=71 // pred_fallthru
          _
      $region72: #{tpu_custom_call.1} parent=5 // pred_fallthru
        _
    $region6: #{tpu_custom_call.1} parent=1 // loop_footer
      %s25 = sadd.s32 1, %s21
    $region7: #{tpu_custom_call.1} parent=1 // loop_footer_branch
      %20 = sbr.rel target = $region3
    $region8: #{tpu_custom_call.1} parent=1 // loop_exit
      _
    %3449 = vsyncpa [#allocation4], 1
    %s3450 = scalar_lea.sflag [#allocation4], 1
    %3451 = vsyncpa %s3450, 1
    %3452 = vsyncpa [#allocation7], 1
    %3453 = vsyncpa [#allocation10], 1
    %3454 = vsyncpa [#allocation5], 1
    %s3455 = scalar_lea.sflag [#allocation5], 1
    %3456 = vsyncpa %s3455, 1

</llo_original>
